<compile_context>
chip_gen: v7x
topology: tpu7x:2x2x1
jax: 0.10.0
libtpu: 0.0.40
codegen_flags: <defaults>
</compile_context>

<pallas_src>
import numpy as np
import jax
import jax.numpy as jnp
from jax.experimental import pallas as pl
from jax.experimental.pallas import tpu as pltpu

LRELU_SLOPE = 0.1
MXU_DTYPE = jnp.bfloat16     # matmul operands / in-kernel padded activations
ACT_DTYPE = jnp.float32      # inter-kernel activations + residual/accum path


def get_padding(kernel_size, dilation=1):
    return int((kernel_size * dilation - dilation) / 2)


def _full_spec(shape):
    """BlockSpec covering the whole array (grid=(1,))."""
    nd = len(shape)

    def imap(i):
        return (0,) * nd

    return pl.BlockSpec(shape, imap)


# ---------------------------------------------------------------------------
# Weight packing (runs once at init, outside jit).
# ---------------------------------------------------------------------------
def pack_conv1d_weight(w_pt):
    """(Cout, Cin, K) PyTorch Conv1d weight -> (Cout, K*Cin) im2col weight."""
    Cout, Cin, K = w_pt.shape
    return jnp.transpose(w_pt, (0, 2, 1)).reshape(Cout, K * Cin).astype(MXU_DTYPE)


def convT_geometry(K, stride, padding):
    """Polyphase shift range / input pads / xp lane offsets for ConvTranspose1d."""
    s, p = stride, padding
    j_min = min(-((t + p) // s) for t in range(s))        # ceil(-(t+p)/s)
    j_max = max((K - 1 - t - p) // s for t in range(s))   # floor((K-1-t-p)/s)
    shifts = tuple(range(j_min, j_max + 1))
    pad_l = max(0, j_max)
    pad_r = max(0, -j_min)
    offsets = tuple(pad_l - j for j in shifts)
    return shifts, offsets, pad_l, pad_r


def pack_convT_weight(w_pt, stride, padding):
    """(Cin, Cout, K) ConvTranspose1d weight -> (s*Cout, n_shift*Cin) block weight.

    wb[t*Cout + c, si*Cin + cin] = w_pt[cin, c, s*shift[si] + t + padding] (0 if invalid)
    so that  y[t*Cout+c, pos] = sum_si,cin wb[...] * xpad[cin, pos - shift[si] + pad_l].
    """
    Cin, Cout, K = w_pt.shape
    s, p = stride, padding
    shifts, _, _, _ = convT_geometry(K, s, p)
    w_np = np.asarray(w_pt, dtype=np.float32)
    wb = np.zeros((s * Cout, len(shifts) * Cin), np.float32)
    for si, j in enumerate(shifts):
        for t in range(s):
            k = s * j + t + p
            if 0 <= k < K:
                wb[t * Cout:(t + 1) * Cout, si * Cin:(si + 1) * Cin] = w_np[:, :, k].T
    return jnp.asarray(wb, dtype=MXU_DTYPE)


# ---------------------------------------------------------------------------
# Kernel 1: Embedding(code) fused with conv_pre.  Output (B, C0, T) f32.
# ---------------------------------------------------------------------------
def embed_conv_pre(params, code2, *, B, T, V, D, C0, K=7, pad=3):
    Lp = T + 2 * pad
    BT = B * T

    def kernel(code_ref, embT_ref, w_ref, b_ref, o_ref, xp_scr, cols_scr):
        # one-hot embedding gather on the MXU (no HBM gather round trip)
        codes = code_ref[...]                                      # (1, B*T) int32
        iota_v = jax.lax.broadcasted_iota(jnp.int32, (V, BT), 0)
        onehot = jnp.where(iota_v == codes, 1.0, 0.0).astype(MXU_DTYPE)
        x_emb = jnp.dot(embT_ref[...], onehot,
                        preferred_element_type=jnp.float32)        # (D, B*T)

        # per-batch symmetric zero pad (channels-first, bf16 matmul operand)
        for b in range(B):
            xp_scr[b, :, 0:pad] = jnp.zeros((D, pad), xp_scr.dtype)
            xp_scr[b, :, pad + T:Lp] = jnp.zeros((D, pad), xp_scr.dtype)
            xp_scr[b, :, pad:pad + T] = x_emb[:, b * T:(b + 1) * T].astype(xp_scr.dtype)

        # im2col (taps stacked on sublanes -> aligned stores) + one MXU matmul
        for b in range(B):
            for kk in range(K):
                cols_scr[kk * D:(kk + 1) * D, b * T:(b + 1) * T] = xp_scr[b, :, kk:kk + T]
        y = jnp.dot(w_ref[...], cols_scr[...],
                    preferred_element_type=jnp.float32) + b_ref[...]
        for b in range(B):
            o_ref[b] = y[:, b * T:(b + 1) * T].astype(o_ref.dtype)

    return pl.pallas_call(
        kernel,
        out_shape=jax.ShapeDtypeStruct((B, C0, T), ACT_DTYPE),
        grid=(1,),
        in_specs=[_full_spec((1, BT)),
                  _full_spec((D, V)),
                  _full_spec((C0, K * D)),
                  _full_spec((C0, 1))],
        out_specs=_full_spec((B, C0, T)),
        scratch_shapes=[pltpu.VMEM((B, D, Lp), MXU_DTYPE),
                        pltpu.VMEM((K * D, BT), MXU_DTYPE)],
        compiler_params=pltpu.CompilerParams(dimension_semantics=("arbitrary",)),
    )(code2, params['embT'], params['pre_w'], params['pre_b'])


# ---------------------------------------------------------------------------
# Kernel 2/3: one fused upsample stage:
#   leaky_relu -> polyphase ConvTranspose1d -> ResBlock2 bank -> /num_kernels
# Everything (ConvT output, residual z, bank accumulator xs) stays in VMEM.
# ---------------------------------------------------------------------------
def upsample_stage(x, pk_stage, *, B, L, Cin, Cout, stride, kernel_size, res_cfg):
    s = stride
    p = (kernel_size - stride) // 2
    shifts, ct_offsets, ct_pad_l, ct_pad_r = convT_geometry(kernel_size, s, p)
    l_out_true = (L - 1) * s - 2 * p + kernel_size
    if l_out_true != s * L:
        # TODO(synk): ConvTranspose geometries with K - s - 2p != 0 need extra
        # tail samples; not needed for this config.
        raise NotImplementedError("unsupported ConvTranspose1d geometry")

    Lout = s * L
    LpadT = L + ct_pad_l + ct_pad_r
    n_shift = len(shifts)
    nk = len(res_cfg)
    res_flat = [cfg for blk in res_cfg for cfg in blk]
    n_res = len(res_flat)
    max_k = max(k for (k, d) in res_flat)
    max_pad = max(get_padding(k, d) for (k, d) in res_flat)
    LpadR = Lout + 2 * max_pad

    # Phase-interleave scatter matrices (constants, baked at trace time):
    # xz[c, s*j + t] = y_t[c, j].  TODO(synk): at real lengths replace with a
    # length-tiled grid + strided phase stores (this matmul is O(L^2)).
    S_np = np.zeros((s, B * L, B * Lout), np.float32)
    for j in range(B * L):
        for t in range(s):
            S_np[t, j, s * j + t] = 1.0
    s_mats = [jnp.asarray(S_np[t]) for t in range(s)]

    def kernel(*refs):
        x_ref, wct_ref, bct_ref = refs[0], refs[1], refs[2]
        s_refs = refs[3:3 + s]
        conv_refs = refs[3 + s:3 + s + 2 * n_res]
        o_ref = refs[3 + s + 2 * n_res]
        xp_ct, cols_ct, zp_scr, cols_r = refs[3 + s + 2 * n_res + 1:]

        # --- leaky_relu (f32) + per-batch zero pad, stored bf16 -------------
        for b in range(B):
            xv = x_ref[b]
            xv = jnp.where(xv >= 0, xv, LRELU_SLOPE * xv)
            if ct_pad_l:
                xp_ct[b, :, 0:ct_pad_l] = jnp.zeros((Cin, ct_pad_l), xp_ct.dtype)
            if ct_pad_r:
                xp_ct[b, :, ct_pad_l + L:LpadT] = jnp.zeros((Cin, ct_pad_r), xp_ct.dtype)
            xp_ct[b, :, ct_pad_l:ct_pad_l + L] = xv.astype(xp_ct.dtype)

        # --- polyphase ConvTranspose1d: one matmul over all phases/batches --
        for b in range(B):
            for si, off in enumerate(ct_offsets):
                cols_ct[si * Cin:(si + 1) * Cin, b * L:(b + 1) * L] = \
                    xp_ct[b, :, off:off + L]
        y = jnp.dot(wct_ref[...], cols_ct[...],
                    preferred_element_type=jnp.float32)            # (s*Cout, B*L)
        xz = jnp.zeros((Cout, B * Lout), jnp.float32)
        for t in range(s):                                         # phase interleave
            xz = xz + jnp.dot(y[t * Cout:(t + 1) * Cout, :], s_refs[t][...],
                              preferred_element_type=jnp.float32)
        xz = xz + bct_ref[...]                                     # f32 residual root

        # --- ResBlock2 bank, fully resident in VMEM --------------------------
        xs = jnp.zeros_like(xz)
        ridx = 0
        for blk in res_cfg:
            z = xz
            for (ksz, dil) in blk:
                w_ref = conv_refs[2 * ridx]
                b_ref = conv_refs[2 * ridx + 1]
                ridx += 1
                pad = get_padding(ksz, dil)
                lp = Lout + 2 * pad
                zt = jnp.where(z >= 0, z, LRELU_SLOPE * z)          # f32
                for b in range(B):
                    if pad:
                        zp_scr[b, :, 0:pad] = jnp.zeros((Cout, pad), zp_scr.dtype)
                        zp_scr[b, :, pad + Lout:lp] = jnp.zeros((Cout, pad), zp_scr.dtype)
                    zp_scr[b, :, pad:pad + Lout] = \
                        zt[:, b * Lout:(b + 1) * Lout].astype(zp_scr.dtype)
                for b in range(B):
                    for kk in range(ksz):
                        cols_r[kk * Cout:(kk + 1) * Cout, b * Lout:(b + 1) * Lout] = \
                            zp_scr[b, :, kk * dil:kk * dil + Lout]
                conv = jnp.dot(w_ref[...], cols_r[0:ksz * Cout, :],
                               preferred_element_type=jnp.float32) + b_ref[...]
                z = conv + z                                        # residual in f32
            xs = xs + z
        xs = xs * (1.0 / nk)                                        # bank average

        for b in range(B):
            o_ref[b] = xs[:, b * Lout:(b + 1) * Lout].astype(o_ref.dtype)

    in_arrays = [x, pk_stage['ct_w'], pk_stage['ct_b']] + s_mats
    in_specs = [_full_spec((B, Cin, L)),
                _full_spec((s * Cout, n_shift * Cin)),
                _full_spec((Cout, 1))] + \
               [_full_spec((B * L, B * Lout)) for _ in range(s)]
    for (ksz, dil), wp, bp in zip(res_flat, pk_stage['res_w'], pk_stage['res_b']):
        in_arrays += [wp, bp]
        in_specs += [_full_spec((Cout, ksz * Cout)), _full_spec((Cout, 1))]

    return pl.pallas_call(
        kernel,
        out_shape=jax.ShapeDtypeStruct((B, Cout, Lout), ACT_DTYPE),
        grid=(1,),
        in_specs=in_specs,
        out_specs=_full_spec((B, Cout, Lout)),
        scratch_shapes=[pltpu.VMEM((B, Cin, LpadT), MXU_DTYPE),
                        pltpu.VMEM((n_shift * Cin, B * L), MXU_DTYPE),
                        pltpu.VMEM((B, Cout, LpadR), MXU_DTYPE),
                        pltpu.VMEM((max_k * Cout, B * Lout), MXU_DTYPE)],
        compiler_params=pltpu.CompilerParams(dimension_semantics=("arbitrary",)),
    )(*in_arrays)


# ---------------------------------------------------------------------------
# Kernel 4: leaky_relu(0.01) -> conv_post (Cout=1) -> tanh.
# Input is already channels-first (length on lanes); VPU MAC, no transpose.
# ---------------------------------------------------------------------------
def conv_post(x, params, *, B, C, L, K=7, pad=3):
    Lp = L + 2 * pad

    def kernel(x_ref, w_ref, b_ref, o_ref, xp_scr):
        for b in range(B):
            xv = x_ref[b]
            xv = jnp.where(xv >= 0, xv, 0.01 * xv)   # F.leaky_relu default slope
            xp_scr[b, :, 0:pad] = jnp.zeros((C, pad), xp_scr.dtype)
            xp_scr[b, :, pad + L:Lp] = jnp.zeros((C, pad), xp_scr.dtype)
            xp_scr[b, :, pad:pad + L] = xv
            acc2 = jnp.zeros((C, L), jnp.float32)
            for kk in range(K):                      # VPU MAC, length on lanes
                acc2 = acc2 + xp_scr[b, :, kk:kk + L] * w_ref[:, kk:kk + 1]
            acc = jnp.sum(acc2, axis=0, keepdims=True) + b_ref[...]   # (1, L)
            o_ref[b] = jnp.tanh(acc)

    return pl.pallas_call(
        kernel,
        out_shape=jax.ShapeDtypeStruct((B, 1, L), jnp.float32),
        grid=(1,),
        in_specs=[_full_spec((B, C, L)),
                  _full_spec((C, K)),
                  _full_spec((1, 1))],
        out_specs=_full_spec((B, 1, L)),
        scratch_shapes=[pltpu.VMEM((B, C, Lp), jnp.float32)],
        compiler_params=pltpu.CompilerParams(dimension_semantics=("arbitrary",)),
    )(x, params['post_w'], params['post_b'])


# ---------------------------------------------------------------------------
# Model config + deterministic parameter init (packed weights built here,
# outside jit, per review).
# ---------------------------------------------------------------------------
class AttrDict(dict):
    def __getattr__(self, k):
        return self[k]


H = AttrDict(
    num_embeddings=16,
    embedding_dim=32,
    model_in_dim=32,
    upsample_initial_channel=32,
    upsample_rates=[2, 2],
    upsample_kernel_sizes=[4, 4],
    resblock='2',
    resblock_kernel_sizes=[3, 5],
    resblock_dilation_sizes=[[1, 3], [1, 3]],
)
# TODO(synk): optional branches (f0 / energy / multispkr / VQ bottlenecks /
# f0_quantizer_path checkpoint load) are disabled in this synthetic config.


def _nrm(key, shape, scale=0.1):
    return (jax.random.normal(key, shape) * scale).astype(jnp.float32)


def init_params(h, key):
    ks = iter(jax.random.split(key, 128))
    raw = {}
    raw['embed'] = _nrm(next(ks), (h.num_embeddings, h.embedding_dim), 1.0)
    c0 = h.upsample_initial_channel
    raw['conv_pre_w'] = _nrm(next(ks), (c0, h.model_in_dim, 7))
    raw['conv_pre_b'] = _nrm(next(ks), (c0,))
    raw['ups'] = []
    for i, (u, k) in enumerate(zip(h.upsample_rates, h.upsample_kernel_sizes)):
        cin = c0 // (2 ** i)
        cout = c0 // (2 ** (i + 1))
        raw['ups'].append({'w': _nrm(next(ks), (cin, cout, k)),
                           'b': _nrm(next(ks), (cout,))})
    raw['resblocks'] = []
    for i in range(len(h.upsample_rates)):
        ch = c0 // (2 ** (i + 1))
        for k, d in zip(h.resblock_kernel_sizes, h.resblock_dilation_sizes):
            convs = [{'w': _nrm(next(ks), (ch, ch, k)), 'b': _nrm(next(ks), (ch,))}
                     for _ in d]                      # ResBlock2: one conv per dilation
            raw['resblocks'].append(convs)
    ch_last = c0 // (2 ** len(h.upsample_rates))
    raw['conv_post_w'] = _nrm(next(ks), (1, ch_last, 7))
    raw['conv_post_b'] = _nrm(next(ks), (1,))

    # ---- packed forms (hoisted out of the jitted forward) ----
    nk = len(h.resblock_kernel_sizes)
    pk = {}
    pk['embT'] = jnp.asarray(raw['embed'].T, dtype=MXU_DTYPE)              # (D, V)
    pk['pre_w'] = pack_conv1d_weight(raw['conv_pre_w'])                    # (C0, 7*D)
    pk['pre_b'] = raw['conv_pre_b'].reshape(-1, 1).astype(jnp.float32)
    pk['stages'] = []
    for i, (u, k) in enumerate(zip(h.upsample_rates, h.upsample_kernel_sizes)):
        st = {'ct_w': pack_convT_weight(raw['ups'][i]['w'], u, (k - u) // 2),
              'ct_b': raw['ups'][i]['b'].reshape(-1, 1).astype(jnp.float32),
              'res_w': [], 'res_b': []}
        for j in range(nk):
            for conv in raw['resblocks'][i * nk + j]:
                st['res_w'].append(pack_conv1d_weight(conv['w']))
                st['res_b'].append(conv['b'].reshape(-1, 1).astype(jnp.float32))
        pk['stages'].append(st)
    pk['post_w'] = raw['conv_post_w'][0].astype(jnp.float32)               # (C_last, 7)
    pk['post_b'] = raw['conv_post_b'].reshape(1, 1).astype(jnp.float32)
    return pk


# ---------------------------------------------------------------------------
# Forward pass: 4 pallas_calls total.
# ---------------------------------------------------------------------------
def code_generator_forward(params, code, h):
    B, T = code.shape
    V = h.num_embeddings
    D = h.embedding_dim
    c0 = h.upsample_initial_channel
    nk = len(h.resblock_kernel_sizes)

    code2 = code.reshape(1, B * T).astype(jnp.int32)
    x = embed_conv_pre(params, code2, B=B, T=T, V=V, D=D, C0=c0)   # (B, C0, T)

    L = T
    cin = c0
    for i, (u, k) in enumerate(zip(h.upsample_rates, h.upsample_kernel_sizes)):
        cout = c0 // (2 ** (i + 1))
        res_cfg = [[(h.resblock_kernel_sizes[j], d)
                    for d in h.resblock_dilation_sizes[j]] for j in range(nk)]
        x = upsample_stage(x, params['stages'][i], B=B, L=L, Cin=cin, Cout=cout,
                           stride=u, kernel_size=k, res_cfg=res_cfg)
        L *= u
        cin = cout

    return conv_post(x, params, B=B, C=cin, L=L)                   # (B, 1, L)


# ---------------------------------------------------------------------------
if __name__ == "__main__":
    key = jax.random.PRNGKey(0)
    k_param, k_code = jax.random.split(key)
    params = init_params(H, k_param)

    B, T = 2, 8
    code = jax.random.randint(k_code, (B, T), 0, H.num_embeddings, dtype=jnp.int32)

    fwd = jax.jit(lambda p, c: code_generator_forward(p, c, H))
    out = jax.block_until_ready(fwd(params, code))

    expected_len = T
    for u in H.upsample_rates:
        expected_len *= u
    assert out.shape == (B, 1, expected_len), out.shape
    assert bool(jnp.all(jnp.isfinite(out)))
    print("KERNEL_OK")
</pallas_src>

<mosaic_0001>
module attributes {stable_mosaic.version = 11 : i64} {
  func.func @kernel(%arg0: i32, %arg1: memref<1x16xi32, #tpu.memory_space<vmem>>, %arg2: memref<32x16xbf16, #tpu.memory_space<vmem>>, %arg3: memref<32x224xbf16, #tpu.memory_space<vmem>>, %arg4: memref<32x1xf32, #tpu.memory_space<vmem>>, %arg5: memref<2x32x8xf32, #tpu.memory_space<vmem>>, %arg6: memref<2x32x14xbf16, #tpu.memory_space<vmem>>, %arg7: memref<224x16xbf16, #tpu.memory_space<vmem>>) attributes {dimension_semantics = [#tpu.dimension_semantics<arbitrary>], iteration_bounds = array<i64: 1>, scalar_prefetch = 0 : i64, scratch_operands = 2 : i64, tpu.core_type = #tpu.core_type<tc>, window_params = [{pipeline_mode = #tpu.pipeline_mode<synchronous>, transform_indices = @transform_0, window_bounds = array<i64: 1, 16>}, {pipeline_mode = #tpu.pipeline_mode<synchronous>, transform_indices = @transform_1, window_bounds = array<i64: 32, 16>}, {pipeline_mode = #tpu.pipeline_mode<synchronous>, transform_indices = @transform_2, window_bounds = array<i64: 32, 224>}, {pipeline_mode = #tpu.pipeline_mode<synchronous>, transform_indices = @transform_3, window_bounds = array<i64: 32, 1>}, {pipeline_mode = #tpu.pipeline_mode<synchronous>, transform_indices = @transform_4, window_bounds = array<i64: 2, 32, 8>}]} {
    %c0 = arith.constant 0 : index
    %c0_0 = arith.constant 0 : index
    %0 = vector.load %arg1[%c0, %c0_0] : memref<1x16xi32, #tpu.memory_space<vmem>>, vector<1x16xi32>
    %1 = tpu.iota {dimensions = array<i32: 0>} : vector<16x16xi32>
    %2 = vector.broadcast %0 : vector<1x16xi32> to vector<16x16xi32>
    %3 = arith.cmpi eq, %1, %2 : vector<16x16xi32>
    %cst = arith.constant 1.000000e+00 : f32
    %cst_1 = arith.constant 0.000000e+00 : f32
    %4 = vector.broadcast %cst : f32 to vector<16x16xf32>
    %5 = vector.broadcast %cst_1 : f32 to vector<16x16xf32>
    %6 = arith.select %3, %4, %5 : vector<16x16xi1>, vector<16x16xf32>
    %7 = arith.truncf %6 : vector<16x16xf32> to vector<16x16xbf16>
    %c0_2 = arith.constant 0 : index
    %c0_3 = arith.constant 0 : index
    %8 = vector.load %arg2[%c0_2, %c0_3] : memref<32x16xbf16, #tpu.memory_space<vmem>>, vector<32x16xbf16>
    %cst_4 = arith.constant dense<0.000000e+00> : vector<32x16xf32>
    %9 = tpu.matmul %8, %7, %cst_4 {dimension_numbers = #tpu.dot_dimension_numbers<[1], [0], [0], [1], [0, 0, 1, 1], [], []>} : vector<32x16xbf16>, vector<16x16xbf16>, vector<32x16xf32> -> vector<32x16xf32>
    %cst_5 = arith.constant 0.000000e+00 : bf16
    %10 = vector.broadcast %cst_5 : bf16 to vector<32x3xbf16>
    %c0_6 = arith.constant 0 : index
    %c0_7 = arith.constant 0 : index
    %c0_8 = arith.constant 0 : index
    %11 = vector.load %arg6[%c0_6, %c0_7, %c0_8] : memref<2x32x14xbf16, #tpu.memory_space<vmem>>, vector<1x32x3xbf16>
    %12 = vector.shape_cast %11 : vector<1x32x3xbf16> to vector<32x3xbf16>
    %13 = vector.shape_cast %10 : vector<32x3xbf16> to vector<1x32x3xbf16>
    tpu.vector_store %arg6[%c0_6, %c0_7, %c0_8], %13 {strides = array<i32>} : memref<2x32x14xbf16, #tpu.memory_space<vmem>>, vector<1x32x3xbf16>,
    %cst_9 = arith.constant 0.000000e+00 : bf16
    %14 = vector.broadcast %cst_9 : bf16 to vector<32x3xbf16>
    %c0_10 = arith.constant 0 : index
    %c0_11 = arith.constant 0 : index
    %c11 = arith.constant 11 : index
    %15 = vector.load %arg6[%c0_10, %c0_11, %c11] : memref<2x32x14xbf16, #tpu.memory_space<vmem>>, vector<1x32x3xbf16>
    %16 = vector.shape_cast %15 : vector<1x32x3xbf16> to vector<32x3xbf16>
    %17 = vector.shape_cast %14 : vector<32x3xbf16> to vector<1x32x3xbf16>
    tpu.vector_store %arg6[%c0_10, %c0_11, %c11], %17 {strides = array<i32>} : memref<2x32x14xbf16, #tpu.memory_space<vmem>>, vector<1x32x3xbf16>,
    %18 = vector.extract_strided_slice %9 {offsets = [0, 0], sizes = [32, 8], strides = [1, 1]} : vector<32x16xf32> to vector<32x8xf32>
    %19 = arith.truncf %18 : vector<32x8xf32> to vector<32x8xbf16>
    %c0_12 = arith.constant 0 : index
    %c0_13 = arith.constant 0 : index
    %c3 = arith.constant 3 : index
    %20 = vector.load %arg6[%c0_12, %c0_13, %c3] : memref<2x32x14xbf16, #tpu.memory_space<vmem>>, vector<1x32x8xbf16>
    %21 = vector.shape_cast %20 : vector<1x32x8xbf16> to vector<32x8xbf16>
    %22 = vector.shape_cast %19 : vector<32x8xbf16> to vector<1x32x8xbf16>
    tpu.vector_store %arg6[%c0_12, %c0_13, %c3], %22 {strides = array<i32>} : memref<2x32x14xbf16, #tpu.memory_space<vmem>>, vector<1x32x8xbf16>,
    %cst_14 = arith.constant 0.000000e+00 : bf16
    %23 = vector.broadcast %cst_14 : bf16 to vector<32x3xbf16>
    %c1 = arith.constant 1 : index
    %c0_15 = arith.constant 0 : index
    %c0_16 = arith.constant 0 : index
    %24 = vector.load %arg6[%c1, %c0_15, %c0_16] : memref<2x32x14xbf16, #tpu.memory_space<vmem>>, vector<1x32x3xbf16>
    %25 = vector.shape_cast %24 : vector<1x32x3xbf16> to vector<32x3xbf16>
    %26 = vector.shape_cast %23 : vector<32x3xbf16> to vector<1x32x3xbf16>
    tpu.vector_store %arg6[%c1, %c0_15, %c0_16], %26 {strides = array<i32>} : memref<2x32x14xbf16, #tpu.memory_space<vmem>>, vector<1x32x3xbf16>,
    %cst_17 = arith.constant 0.000000e+00 : bf16
    %27 = vector.broadcast %cst_17 : bf16 to vector<32x3xbf16>
    %c1_18 = arith.constant 1 : index
    %c0_19 = arith.constant 0 : index
    %c11_20 = arith.constant 11 : index
    %28 = vector.load %arg6[%c1_18, %c0_19, %c11_20] : memref<2x32x14xbf16, #tpu.memory_space<vmem>>, vector<1x32x3xbf16>
    %29 = vector.shape_cast %28 : vector<1x32x3xbf16> to vector<32x3xbf16>
    %30 = vector.shape_cast %27 : vector<32x3xbf16> to vector<1x32x3xbf16>
    tpu.vector_store %arg6[%c1_18, %c0_19, %c11_20], %30 {strides = array<i32>} : memref<2x32x14xbf16, #tpu.memory_space<vmem>>, vector<1x32x3xbf16>,
    %31 = vector.extract_strided_slice %9 {offsets = [0, 8], sizes = [32, 8], strides = [1, 1]} : vector<32x16xf32> to vector<32x8xf32>
    %32 = arith.truncf %31 : vector<32x8xf32> to vector<32x8xbf16>
    %c1_21 = arith.constant 1 : index
    %c0_22 = arith.constant 0 : index
    %c3_23 = arith.constant 3 : index
    %33 = vector.load %arg6[%c1_21, %c0_22, %c3_23] : memref<2x32x14xbf16, #tpu.memory_space<vmem>>, vector<1x32x8xbf16>
    %34 = vector.shape_cast %33 : vector<1x32x8xbf16> to vector<32x8xbf16>
    %35 = vector.shape_cast %32 : vector<32x8xbf16> to vector<1x32x8xbf16>
    tpu.vector_store %arg6[%c1_21, %c0_22, %c3_23], %35 {strides = array<i32>} : memref<2x32x14xbf16, #tpu.memory_space<vmem>>, vector<1x32x8xbf16>,
    %c0_24 = arith.constant 0 : index
    %c0_25 = arith.constant 0 : index
    %c0_26 = arith.constant 0 : index
    %36 = vector.load %arg6[%c0_24, %c0_25, %c0_26] : memref<2x32x14xbf16, #tpu.memory_space<vmem>>, vector<1x32x8xbf16>
    %37 = vector.shape_cast %36 : vector<1x32x8xbf16> to vector<32x8xbf16>
    %c0_27 = arith.constant 0 : index
    %c0_28 = arith.constant 0 : index
    %38 = vector.load %arg7[%c0_27, %c0_28] : memref<224x16xbf16, #tpu.memory_space<vmem>>, vector<32x8xbf16>
    tpu.vector_store %arg7[%c0_27, %c0_28], %37 {strides = array<i32>} : memref<224x16xbf16, #tpu.memory_space<vmem>>, vector<32x8xbf16>,
    %c0_29 = arith.constant 0 : index
    %c0_30 = arith.constant 0 : index
    %c1_31 = arith.constant 1 : index
    %39 = vector.load %arg6[%c0_29, %c0_30, %c1_31] : memref<2x32x14xbf16, #tpu.memory_space<vmem>>, vector<1x32x8xbf16>
    %40 = vector.shape_cast %39 : vector<1x32x8xbf16> to vector<32x8xbf16>
    %c32 = arith.constant 32 : index
    %c0_32 = arith.constant 0 : index
    %41 = vector.load %arg7[%c32, %c0_32] : memref<224x16xbf16, #tpu.memory_space<vmem>>, vector<32x8xbf16>
    tpu.vector_store %arg7[%c32, %c0_32], %40 {strides = array<i32>} : memref<224x16xbf16, #tpu.memory_space<vmem>>, vector<32x8xbf16>,
    %c0_33 = arith.constant 0 : index
    %c0_34 = arith.constant 0 : index
    %c2 = arith.constant 2 : index
    %42 = vector.load %arg6[%c0_33, %c0_34, %c2] : memref<2x32x14xbf16, #tpu.memory_space<vmem>>, vector<1x32x8xbf16>
    %43 = vector.shape_cast %42 : vector<1x32x8xbf16> to vector<32x8xbf16>
    %c64 = arith.constant 64 : index
    %c0_35 = arith.constant 0 : index
    %44 = vector.load %arg7[%c64, %c0_35] : memref<224x16xbf16, #tpu.memory_space<vmem>>, vector<32x8xbf16>
    tpu.vector_store %arg7[%c64, %c0_35], %43 {strides = array<i32>} : memref<224x16xbf16, #tpu.memory_space<vmem>>, vector<32x8xbf16>,
    %c0_36 = arith.constant 0 : index
    %c0_37 = arith.constant 0 : index
    %c3_38 = arith.constant 3 : index
    %45 = vector.load %arg6[%c0_36, %c0_37, %c3_38] : memref<2x32x14xbf16, #tpu.memory_space<vmem>>, vector<1x32x8xbf16>
    %46 = vector.shape_cast %45 : vector<1x32x8xbf16> to vector<32x8xbf16>
    %c96 = arith.constant 96 : index
    %c0_39 = arith.constant 0 : index
    %47 = vector.load %arg7[%c96, %c0_39] : memref<224x16xbf16, #tpu.memory_space<vmem>>, vector<32x8xbf16>
    tpu.vector_store %arg7[%c96, %c0_39], %46 {strides = array<i32>} : memref<224x16xbf16, #tpu.memory_space<vmem>>, vector<32x8xbf16>,
    %c0_40 = arith.constant 0 : index
    %c0_41 = arith.constant 0 : index
    %c4 = arith.constant 4 : index
    %48 = vector.load %arg6[%c0_40, %c0_41, %c4] : memref<2x32x14xbf16, #tpu.memory_space<vmem>>, vector<1x32x8xbf16>
    %49 = vector.shape_cast %48 : vector<1x32x8xbf16> to vector<32x8xbf16>
    %c128 = arith.constant 128 : index
    %c0_42 = arith.constant 0 : index
    %50 = vector.load %arg7[%c128, %c0_42] : memref<224x16xbf16, #tpu.memory_space<vmem>>, vector<32x8xbf16>
    tpu.vector_store %arg7[%c128, %c0_42], %49 {strides = array<i32>} : memref<224x16xbf16, #tpu.memory_space<vmem>>, vector<32x8xbf16>,
    %c0_43 = arith.constant 0 : index
    %c0_44 = arith.constant 0 : index
    %c5 = arith.constant 5 : index
    %51 = vector.load %arg6[%c0_43, %c0_44, %c5] : memref<2x32x14xbf16, #tpu.memory_space<vmem>>, vector<1x32x8xbf16>
    %52 = vector.shape_cast %51 : vector<1x32x8xbf16> to vector<32x8xbf16>
    %c160 = arith.constant 160 : index
    %c0_45 = arith.constant 0 : index
    %53 = vector.load %arg7[%c160, %c0_45] : memref<224x16xbf16, #tpu.memory_space<vmem>>, vector<32x8xbf16>
    tpu.vector_store %arg7[%c160, %c0_45], %52 {strides = array<i32>} : memref<224x16xbf16, #tpu.memory_space<vmem>>, vector<32x8xbf16>,
    %c0_46 = arith.constant 0 : index
    %c0_47 = arith.constant 0 : index
    %c6 = arith.constant 6 : index
    %54 = vector.load %arg6[%c0_46, %c0_47, %c6] : memref<2x32x14xbf16, #tpu.memory_space<vmem>>, vector<1x32x8xbf16>
    %55 = vector.shape_cast %54 : vector<1x32x8xbf16> to vector<32x8xbf16>
    %c192 = arith.constant 192 : index
    %c0_48 = arith.constant 0 : index
    %56 = vector.load %arg7[%c192, %c0_48] : memref<224x16xbf16, #tpu.memory_space<vmem>>, vector<32x8xbf16>
    tpu.vector_store %arg7[%c192, %c0_48], %55 {strides = array<i32>} : memref<224x16xbf16, #tpu.memory_space<vmem>>, vector<32x8xbf16>,
    %c1_49 = arith.constant 1 : index
    %c0_50 = arith.constant 0 : index
    %c0_51 = arith.constant 0 : index
    %57 = vector.load %arg6[%c1_49, %c0_50, %c0_51] : memref<2x32x14xbf16, #tpu.memory_space<vmem>>, vector<1x32x8xbf16>
    %58 = vector.shape_cast %57 : vector<1x32x8xbf16> to vector<32x8xbf16>
    %c0_52 = arith.constant 0 : index
    %c8 = arith.constant 8 : index
    %59 = vector.load %arg7[%c0_52, %c8] : memref<224x16xbf16, #tpu.memory_space<vmem>>, vector<32x8xbf16>
    tpu.vector_store %arg7[%c0_52, %c8], %58 {strides = array<i32>} : memref<224x16xbf16, #tpu.memory_space<vmem>>, vector<32x8xbf16>,
    %c1_53 = arith.constant 1 : index
    %c0_54 = arith.constant 0 : index
    %c1_55 = arith.constant 1 : index
    %60 = vector.load %arg6[%c1_53, %c0_54, %c1_55] : memref<2x32x14xbf16, #tpu.memory_space<vmem>>, vector<1x32x8xbf16>
    %61 = vector.shape_cast %60 : vector<1x32x8xbf16> to vector<32x8xbf16>
    %c32_56 = arith.constant 32 : index
    %c8_57 = arith.constant 8 : index
    %62 = vector.load %arg7[%c32_56, %c8_57] : memref<224x16xbf16, #tpu.memory_space<vmem>>, vector<32x8xbf16>
    tpu.vector_store %arg7[%c32_56, %c8_57], %61 {strides = array<i32>} : memref<224x16xbf16, #tpu.memory_space<vmem>>, vector<32x8xbf16>,
    %c1_58 = arith.constant 1 : index
    %c0_59 = arith.constant 0 : index
    %c2_60 = arith.constant 2 : index
    %63 = vector.load %arg6[%c1_58, %c0_59, %c2_60] : memref<2x32x14xbf16, #tpu.memory_space<vmem>>, vector<1x32x8xbf16>
    %64 = vector.shape_cast %63 : vector<1x32x8xbf16> to vector<32x8xbf16>
    %c64_61 = arith.constant 64 : index
    %c8_62 = arith.constant 8 : index
    %65 = vector.load %arg7[%c64_61, %c8_62] : memref<224x16xbf16, #tpu.memory_space<vmem>>, vector<32x8xbf16>
    tpu.vector_store %arg7[%c64_61, %c8_62], %64 {strides = array<i32>} : memref<224x16xbf16, #tpu.memory_space<vmem>>, vector<32x8xbf16>,
    %c1_63 = arith.constant 1 : index
    %c0_64 = arith.constant 0 : index
    %c3_65 = arith.constant 3 : index
    %66 = vector.load %arg6[%c1_63, %c0_64, %c3_65] : memref<2x32x14xbf16, #tpu.memory_space<vmem>>, vector<1x32x8xbf16>
    %67 = vector.shape_cast %66 : vector<1x32x8xbf16> to vector<32x8xbf16>
    %c96_66 = arith.constant 96 : index
    %c8_67 = arith.constant 8 : index
    %68 = vector.load %arg7[%c96_66, %c8_67] : memref<224x16xbf16, #tpu.memory_space<vmem>>, vector<32x8xbf16>
    tpu.vector_store %arg7[%c96_66, %c8_67], %67 {strides = array<i32>} : memref<224x16xbf16, #tpu.memory_space<vmem>>, vector<32x8xbf16>,
    %c1_68 = arith.constant 1 : index
    %c0_69 = arith.constant 0 : index
    %c4_70 = arith.constant 4 : index
    %69 = vector.load %arg6[%c1_68, %c0_69, %c4_70] : memref<2x32x14xbf16, #tpu.memory_space<vmem>>, vector<1x32x8xbf16>
    %70 = vector.shape_cast %69 : vector<1x32x8xbf16> to vector<32x8xbf16>
    %c128_71 = arith.constant 128 : index
    %c8_72 = arith.constant 8 : index
    %71 = vector.load %arg7[%c128_71, %c8_72] : memref<224x16xbf16, #tpu.memory_space<vmem>>, vector<32x8xbf16>
    tpu.vector_store %arg7[%c128_71, %c8_72], %70 {strides = array<i32>} : memref<224x16xbf16, #tpu.memory_space<vmem>>, vector<32x8xbf16>,
    %c1_73 = arith.constant 1 : index
    %c0_74 = arith.constant 0 : index
    %c5_75 = arith.constant 5 : index
    %72 = vector.load %arg6[%c1_73, %c0_74, %c5_75] : memref<2x32x14xbf16, #tpu.memory_space<vmem>>, vector<1x32x8xbf16>
    %73 = vector.shape_cast %72 : vector<1x32x8xbf16> to vector<32x8xbf16>
    %c160_76 = arith.constant 160 : index
    %c8_77 = arith.constant 8 : index
    %74 = vector.load %arg7[%c160_76, %c8_77] : memref<224x16xbf16, #tpu.memory_space<vmem>>, vector<32x8xbf16>
    tpu.vector_store %arg7[%c160_76, %c8_77], %73 {strides = array<i32>} : memref<224x16xbf16, #tpu.memory_space<vmem>>, vector<32x8xbf16>,
    %c1_78 = arith.constant 1 : index
    %c0_79 = arith.constant 0 : index
    %c6_80 = arith.constant 6 : index
    %75 = vector.load %arg6[%c1_78, %c0_79, %c6_80] : memref<2x32x14xbf16, #tpu.memory_space<vmem>>, vector<1x32x8xbf16>
    %76 = vector.shape_cast %75 : vector<1x32x8xbf16> to vector<32x8xbf16>
    %c192_81 = arith.constant 192 : index
    %c8_82 = arith.constant 8 : index
    %77 = vector.load %arg7[%c192_81, %c8_82] : memref<224x16xbf16, #tpu.memory_space<vmem>>, vector<32x8xbf16>
    tpu.vector_store %arg7[%c192_81, %c8_82], %76 {strides = array<i32>} : memref<224x16xbf16, #tpu.memory_space<vmem>>, vector<32x8xbf16>,
    %c0_83 = arith.constant 0 : index
    %c0_84 = arith.constant 0 : index
    %78 = vector.load %arg3[%c0_83, %c0_84] : memref<32x224xbf16, #tpu.memory_space<vmem>>, vector<32x224xbf16>
    %c0_85 = arith.constant 0 : index
    %c0_86 = arith.constant 0 : index
    %79 = vector.load %arg7[%c0_85, %c0_86] : memref<224x16xbf16, #tpu.memory_space<vmem>>, vector<224x16xbf16>
    %cst_87 = arith.constant dense<0.000000e+00> : vector<32x16xf32>
    %80 = tpu.matmul %78, %79, %cst_87 {dimension_numbers = #tpu.dot_dimension_numbers<[1], [0], [0], [1], [0, 0, 1, 1], [], []>} : vector<32x224xbf16>, vector<224x16xbf16>, vector<32x16xf32> -> vector<32x16xf32>
    %c0_88 = arith.constant 0 : index
    %c0_89 = arith.constant 0 : index
    %81 = vector.load %arg4[%c0_88, %c0_89] : memref<32x1xf32, #tpu.memory_space<vmem>>, vector<32x1xf32>
    %82 = vector.broadcast %81 : vector<32x1xf32> to vector<32x16xf32>
    %83 = arith.addf %80, %82 : vector<32x16xf32>
    %84 = vector.extract_strided_slice %83 {offsets = [0, 0], sizes = [32, 8], strides = [1, 1]} : vector<32x16xf32> to vector<32x8xf32>
    %c0_90 = arith.constant 0 : index
    %c0_91 = arith.constant 0 : index
    %c0_92 = arith.constant 0 : index
    %85 = vector.load %arg5[%c0_90, %c0_91, %c0_92] : memref<2x32x8xf32, #tpu.memory_space<vmem>>, vector<1x32x8xf32>
    %86 = vector.shape_cast %85 : vector<1x32x8xf32> to vector<32x8xf32>
    %87 = vector.shape_cast %84 : vector<32x8xf32> to vector<1x32x8xf32>
    tpu.vector_store %arg5[%c0_90, %c0_91, %c0_92], %87 {strides = array<i32>} : memref<2x32x8xf32, #tpu.memory_space<vmem>>, vector<1x32x8xf32>,
    %88 = vector.extract_strided_slice %83 {offsets = [0, 8], sizes = [32, 8], strides = [1, 1]} : vector<32x16xf32> to vector<32x8xf32>
    %c1_93 = arith.constant 1 : index
    %c0_94 = arith.constant 0 : index
    %c0_95 = arith.constant 0 : index
    %89 = vector.load %arg5[%c1_93, %c0_94, %c0_95] : memref<2x32x8xf32, #tpu.memory_space<vmem>>, vector<1x32x8xf32>
    %90 = vector.shape_cast %89 : vector<1x32x8xf32> to vector<32x8xf32>
    %91 = vector.shape_cast %88 : vector<32x8xf32> to vector<1x32x8xf32>
    tpu.vector_store %arg5[%c1_93, %c0_94, %c0_95], %91 {strides = array<i32>} : memref<2x32x8xf32, #tpu.memory_space<vmem>>, vector<1x32x8xf32>,
    return
  }
  func.func @transform_0(%arg0: i32) -> (i32, i32) {
    %c0_i32 = arith.constant 0 : i32
    %c0_i32_0 = arith.constant 0 : i32
    %c0_i32_1 = arith.constant 0 : i32
    return %c0_i32, %c0_i32_0 : i32, i32
  }
  func.func @transform_1(%arg0: i32) -> (i32, i32) {
    %c0_i32 = arith.constant 0 : i32
    %c0_i32_0 = arith.constant 0 : i32
    %c0_i32_1 = arith.constant 0 : i32
    return %c0_i32, %c0_i32_0 : i32, i32
  }
  func.func @transform_2(%arg0: i32) -> (i32, i32) {
    %c0_i32 = arith.constant 0 : i32
    %c0_i32_0 = arith.constant 0 : i32
    %c0_i32_1 = arith.constant 0 : i32
    return %c0_i32, %c0_i32_0 : i32, i32
  }
  func.func @transform_3(%arg0: i32) -> (i32, i32) {
    %c0_i32 = arith.constant 0 : i32
    %c0_i32_0 = arith.constant 0 : i32
    %c0_i32_1 = arith.constant 0 : i32
    return %c0_i32, %c0_i32_0 : i32, i32
  }
  func.func @transform_4(%arg0: i32) -> (i32, i32, i32) {
    %c0_i32 = arith.constant 0 : i32
    %c0_i32_0 = arith.constant 0 : i32
    %c0_i32_1 = arith.constant 0 : i32
    %c0_i32_2 = arith.constant 0 : i32
    return %c0_i32, %c0_i32_0, %c0_i32_1 : i32, i32, i32
  }
}

module attributes {stable_mosaic.version = 11 : i64} {
  func.func @kernel(%arg0: i32, %arg1: memref<2x8x32xf32, #tpu.memory_space<vmem>>, %arg2: memref<8x7xf32, #tpu.memory_space<vmem>>, %arg3: memref<1x1xf32, #tpu.memory_space<vmem>>, %arg4: memref<2x1x32xf32, #tpu.memory_space<vmem>>, %arg5: memref<2x8x38xf32, #tpu.memory_space<vmem>>) attributes {dimension_semantics = [#tpu.dimension_semantics<arbitrary>], iteration_bounds = array<i64: 1>, scalar_prefetch = 0 : i64, scratch_operands = 1 : i64, tpu.core_type = #tpu.core_type<tc>, window_params = [{pipeline_mode = #tpu.pipeline_mode<synchronous>, transform_indices = @transform_0, window_bounds = array<i64: 2, 8, 32>}, {pipeline_mode = #tpu.pipeline_mode<synchronous>, transform_indices = @transform_1, window_bounds = array<i64: 8, 7>}, {pipeline_mode = #tpu.pipeline_mode<synchronous>, transform_indices = @transform_2, window_bounds = array<i64: 1, 1>}, {pipeline_mode = #tpu.pipeline_mode<synchronous>, transform_indices = @transform_3, window_bounds = array<i64: 2, 1, 32>}]} {
    %c0 = arith.constant 0 : index
    %c0_0 = arith.constant 0 : index
    %c0_1 = arith.constant 0 : index
    %0 = vector.load %arg1[%c0, %c0_0, %c0_1] : memref<2x8x32xf32, #tpu.memory_space<vmem>>, vector<1x8x32xf32>
    %1 = vector.shape_cast %0 : vector<1x8x32xf32> to vector<8x32xf32>
    %cst = arith.constant 0.000000e+00 : f32
    %2 = vector.broadcast %cst : f32 to vector<8x32xf32>
    %3 = arith.cmpf oge, %1, %2 : vector<8x32xf32>
    %cst_2 = arith.constant 0.00999999977 : f32
    %4 = vector.broadcast %cst_2 : f32 to vector<8x32xf32>
    %5 = arith.mulf %4, %1 : vector<8x32xf32>
    %6 = arith.select %3, %1, %5 : vector<8x32xi1>, vector<8x32xf32>
    %cst_3 = arith.constant 0.000000e+00 : f32
    %7 = vector.broadcast %cst_3 : f32 to vector<8x3xf32>
    %c0_4 = arith.constant 0 : index
    %c0_5 = arith.constant 0 : index
    %c0_6 = arith.constant 0 : index
    %8 = vector.load %arg5[%c0_4, %c0_5, %c0_6] : memref<2x8x38xf32, #tpu.memory_space<vmem>>, vector<1x8x3xf32>
    %9 = vector.shape_cast %8 : vector<1x8x3xf32> to vector<8x3xf32>
    %10 = vector.shape_cast %7 : vector<8x3xf32> to vector<1x8x3xf32>
    tpu.vector_store %arg5[%c0_4, %c0_5, %c0_6], %10 {strides = array<i32>} : memref<2x8x38xf32, #tpu.memory_space<vmem>>, vector<1x8x3xf32>,
    %cst_7 = arith.constant 0.000000e+00 : f32
    %11 = vector.broadcast %cst_7 : f32 to vector<8x3xf32>
    %c0_8 = arith.constant 0 : index
    %c0_9 = arith.constant 0 : index
    %c35 = arith.constant 35 : index
    %12 = vector.load %arg5[%c0_8, %c0_9, %c35] : memref<2x8x38xf32, #tpu.memory_space<vmem>>, vector<1x8x3xf32>
    %13 = vector.shape_cast %12 : vector<1x8x3xf32> to vector<8x3xf32>
    %14 = vector.shape_cast %11 : vector<8x3xf32> to vector<1x8x3xf32>
    tpu.vector_store %arg5[%c0_8, %c0_9, %c35], %14 {strides = array<i32>} : memref<2x8x38xf32, #tpu.memory_space<vmem>>, vector<1x8x3xf32>,
    %c0_10 = arith.constant 0 : index
    %c0_11 = arith.constant 0 : index
    %c3 = arith.constant 3 : index
    %15 = vector.load %arg5[%c0_10, %c0_11, %c3] : memref<2x8x38xf32, #tpu.memory_space<vmem>>, vector<1x8x32xf32>
    %16 = vector.shape_cast %15 : vector<1x8x32xf32> to vector<8x32xf32>
    %17 = vector.shape_cast %6 : vector<8x32xf32> to vector<1x8x32xf32>
    tpu.vector_store %arg5[%c0_10, %c0_11, %c3], %17 {strides = array<i32>} : memref<2x8x38xf32, #tpu.memory_space<vmem>>, vector<1x8x32xf32>,
    %cst_12 = arith.constant 0.000000e+00 : f32
    %18 = vector.broadcast %cst_12 : f32 to vector<8x32xf32>
    %c0_13 = arith.constant 0 : index
    %c0_14 = arith.constant 0 : index
    %c0_15 = arith.constant 0 : index
    %19 = vector.load %arg5[%c0_13, %c0_14, %c0_15] : memref<2x8x38xf32, #tpu.memory_space<vmem>>, vector<1x8x32xf32>
    %20 = vector.shape_cast %19 : vector<1x8x32xf32> to vector<8x32xf32>
    %c0_16 = arith.constant 0 : index
    %c0_17 = arith.constant 0 : index
    %21 = vector.load %arg2[%c0_16, %c0_17] : memref<8x7xf32, #tpu.memory_space<vmem>>, vector<8x1xf32>
    %22 = vector.broadcast %21 : vector<8x1xf32> to vector<8x32xf32>
    %23 = arith.mulf %20, %22 : vector<8x32xf32>
    %24 = arith.addf %18, %23 : vector<8x32xf32>
    %c0_18 = arith.constant 0 : index
    %c0_19 = arith.constant 0 : index
    %c1 = arith.constant 1 : index
    %25 = vector.load %arg5[%c0_18, %c0_19, %c1] : memref<2x8x38xf32, #tpu.memory_space<vmem>>, vector<1x8x32xf32>
    %26 = vector.shape_cast %25 : vector<1x8x32xf32> to vector<8x32xf32>
    %c0_20 = arith.constant 0 : index
    %c1_21 = arith.constant 1 : index
    %27 = vector.load %arg2[%c0_20, %c1_21] : memref<8x7xf32, #tpu.memory_space<vmem>>, vector<8x1xf32>
    %28 = vector.broadcast %27 : vector<8x1xf32> to vector<8x32xf32>
    %29 = arith.mulf %26, %28 : vector<8x32xf32>
    %30 = arith.addf %24, %29 : vector<8x32xf32>
    %c0_22 = arith.constant 0 : index
    %c0_23 = arith.constant 0 : index
    %c2 = arith.constant 2 : index
    %31 = vector.load %arg5[%c0_22, %c0_23, %c2] : memref<2x8x38xf32, #tpu.memory_space<vmem>>, vector<1x8x32xf32>
    %32 = vector.shape_cast %31 : vector<1x8x32xf32> to vector<8x32xf32>
    %c0_24 = arith.constant 0 : index
    %c2_25 = arith.constant 2 : index
    %33 = vector.load %arg2[%c0_24, %c2_25] : memref<8x7xf32, #tpu.memory_space<vmem>>, vector<8x1xf32>
    %34 = vector.broadcast %33 : vector<8x1xf32> to vector<8x32xf32>
    %35 = arith.mulf %32, %34 : vector<8x32xf32>
    %36 = arith.addf %30, %35 : vector<8x32xf32>
    %c0_26 = arith.constant 0 : index
    %c0_27 = arith.constant 0 : index
    %c3_28 = arith.constant 3 : index
    %37 = vector.load %arg5[%c0_26, %c0_27, %c3_28] : memref<2x8x38xf32, #tpu.memory_space<vmem>>, vector<1x8x32xf32>
    %38 = vector.shape_cast %37 : vector<1x8x32xf32> to vector<8x32xf32>
    %c0_29 = arith.constant 0 : index
    %c3_30 = arith.constant 3 : index
    %39 = vector.load %arg2[%c0_29, %c3_30] : memref<8x7xf32, #tpu.memory_space<vmem>>, vector<8x1xf32>
    %40 = vector.broadcast %39 : vector<8x1xf32> to vector<8x32xf32>
    %41 = arith.mulf %38, %40 : vector<8x32xf32>
    %42 = arith.addf %36, %41 : vector<8x32xf32>
    %c0_31 = arith.constant 0 : index
    %c0_32 = arith.constant 0 : index
    %c4 = arith.constant 4 : index
    %43 = vector.load %arg5[%c0_31, %c0_32, %c4] : memref<2x8x38xf32, #tpu.memory_space<vmem>>, vector<1x8x32xf32>
    %44 = vector.shape_cast %43 : vector<1x8x32xf32> to vector<8x32xf32>
    %c0_33 = arith.constant 0 : index
    %c4_34 = arith.constant 4 : index
    %45 = vector.load %arg2[%c0_33, %c4_34] : memref<8x7xf32, #tpu.memory_space<vmem>>, vector<8x1xf32>
    %46 = vector.broadcast %45 : vector<8x1xf32> to vector<8x32xf32>
    %47 = arith.mulf %44, %46 : vector<8x32xf32>
    %48 = arith.addf %42, %47 : vector<8x32xf32>
    %c0_35 = arith.constant 0 : index
    %c0_36 = arith.constant 0 : index
    %c5 = arith.constant 5 : index
    %49 = vector.load %arg5[%c0_35, %c0_36, %c5] : memref<2x8x38xf32, #tpu.memory_space<vmem>>, vector<1x8x32xf32>
    %50 = vector.shape_cast %49 : vector<1x8x32xf32> to vector<8x32xf32>
    %c0_37 = arith.constant 0 : index
    %c5_38 = arith.constant 5 : index
    %51 = vector.load %arg2[%c0_37, %c5_38] : memref<8x7xf32, #tpu.memory_space<vmem>>, vector<8x1xf32>
    %52 = vector.broadcast %51 : vector<8x1xf32> to vector<8x32xf32>
    %53 = arith.mulf %50, %52 : vector<8x32xf32>
    %54 = arith.addf %48, %53 : vector<8x32xf32>
    %c0_39 = arith.constant 0 : index
    %c0_40 = arith.constant 0 : index
    %c6 = arith.constant 6 : index
    %55 = vector.load %arg5[%c0_39, %c0_40, %c6] : memref<2x8x38xf32, #tpu.memory_space<vmem>>, vector<1x8x32xf32>
    %56 = vector.shape_cast %55 : vector<1x8x32xf32> to vector<8x32xf32>
    %c0_41 = arith.constant 0 : index
    %c6_42 = arith.constant 6 : index
    %57 = vector.load %arg2[%c0_41, %c6_42] : memref<8x7xf32, #tpu.memory_space<vmem>>, vector<8x1xf32>
    %58 = vector.broadcast %57 : vector<8x1xf32> to vector<8x32xf32>
    %59 = arith.mulf %56, %58 : vector<8x32xf32>
    %60 = arith.addf %54, %59 : vector<8x32xf32>
    %cst_43 = arith.constant dense<0.000000e+00> : vector<32xf32>
    %61 = vector.multi_reduction <add>, %60, %cst_43 [0] : vector<8x32xf32> to vector<32xf32>
    %62 = vector.shape_cast %61 : vector<32xf32> to vector<1x32xf32>
    %c0_44 = arith.constant 0 : index
    %c0_45 = arith.constant 0 : index
    %63 = vector.load %arg3[%c0_44, %c0_45] : memref<1x1xf32, #tpu.memory_space<vmem>>, vector<1x1xf32>
    %64 = vector.broadcast %63 : vector<1x1xf32> to vector<1x32xf32>
    %65 = arith.addf %62, %64 : vector<1x32xf32>
    %66 = math.tanh %65 : vector<1x32xf32>
    %c0_46 = arith.constant 0 : index
    %c0_47 = arith.constant 0 : index
    %c0_48 = arith.constant 0 : index
    %67 = vector.load %arg4[%c0_46, %c0_47, %c0_48] : memref<2x1x32xf32, #tpu.memory_space<vmem>>, vector<1x1x32xf32>
    %68 = vector.shape_cast %67 : vector<1x1x32xf32> to vector<1x32xf32>
    %69 = vector.shape_cast %66 : vector<1x32xf32> to vector<1x1x32xf32>
    tpu.vector_store %arg4[%c0_46, %c0_47, %c0_48], %69 {strides = array<i32>} : memref<2x1x32xf32, #tpu.memory_space<vmem>>, vector<1x1x32xf32>,
    %c1_49 = arith.constant 1 : index
    %c0_50 = arith.constant 0 : index
    %c0_51 = arith.constant 0 : index
    %70 = vector.load %arg1[%c1_49, %c0_50, %c0_51] : memref<2x8x32xf32, #tpu.memory_space<vmem>>, vector<1x8x32xf32>
    %71 = vector.shape_cast %70 : vector<1x8x32xf32> to vector<8x32xf32>
    %cst_52 = arith.constant 0.000000e+00 : f32
    %72 = vector.broadcast %cst_52 : f32 to vector<8x32xf32>
    %73 = arith.cmpf oge, %71, %72 : vector<8x32xf32>
    %cst_53 = arith.constant 0.00999999977 : f32
    %74 = vector.broadcast %cst_53 : f32 to vector<8x32xf32>
    %75 = arith.mulf %74, %71 : vector<8x32xf32>
    %76 = arith.select %73, %71, %75 : vector<8x32xi1>, vector<8x32xf32>
    %cst_54 = arith.constant 0.000000e+00 : f32
    %77 = vector.broadcast %cst_54 : f32 to vector<8x3xf32>
    %c1_55 = arith.constant 1 : index
    %c0_56 = arith.constant 0 : index
    %c0_57 = arith.constant 0 : index
    %78 = vector.load %arg5[%c1_55, %c0_56, %c0_57] : memref<2x8x38xf32, #tpu.memory_space<vmem>>, vector<1x8x3xf32>
    %79 = vector.shape_cast %78 : vector<1x8x3xf32> to vector<8x3xf32>
    %80 = vector.shape_cast %77 : vector<8x3xf32> to vector<1x8x3xf32>
    tpu.vector_store %arg5[%c1_55, %c0_56, %c0_57], %80 {strides = array<i32>} : memref<2x8x38xf32, #tpu.memory_space<vmem>>, vector<1x8x3xf32>,
    %cst_58 = arith.constant 0.000000e+00 : f32
    %81 = vector.broadcast %cst_58 : f32 to vector<8x3xf32>
    %c1_59 = arith.constant 1 : index
    %c0_60 = arith.constant 0 : index
    %c35_61 = arith.constant 35 : index
    %82 = vector.load %arg5[%c1_59, %c0_60, %c35_61] : memref<2x8x38xf32, #tpu.memory_space<vmem>>, vector<1x8x3xf32>
    %83 = vector.shape_cast %82 : vector<1x8x3xf32> to vector<8x3xf32>
    %84 = vector.shape_cast %81 : vector<8x3xf32> to vector<1x8x3xf32>
    tpu.vector_store %arg5[%c1_59, %c0_60, %c35_61], %84 {strides = array<i32>} : memref<2x8x38xf32, #tpu.memory_space<vmem>>, vector<1x8x3xf32>,
    %c1_62 = arith.constant 1 : index
    %c0_63 = arith.constant 0 : index
    %c3_64 = arith.constant 3 : index
    %85 = vector.load %arg5[%c1_62, %c0_63, %c3_64] : memref<2x8x38xf32, #tpu.memory_space<vmem>>, vector<1x8x32xf32>
    %86 = vector.shape_cast %85 : vector<1x8x32xf32> to vector<8x32xf32>
    %87 = vector.shape_cast %76 : vector<8x32xf32> to vector<1x8x32xf32>
    tpu.vector_store %arg5[%c1_62, %c0_63, %c3_64], %87 {strides = array<i32>} : memref<2x8x38xf32, #tpu.memory_space<vmem>>, vector<1x8x32xf32>,
    %cst_65 = arith.constant 0.000000e+00 : f32
    %88 = vector.broadcast %cst_65 : f32 to vector<8x32xf32>
    %c1_66 = arith.constant 1 : index
    %c0_67 = arith.constant 0 : index
    %c0_68 = arith.constant 0 : index
    %89 = vector.load %arg5[%c1_66, %c0_67, %c0_68] : memref<2x8x38xf32, #tpu.memory_space<vmem>>, vector<1x8x32xf32>
    %90 = vector.shape_cast %89 : vector<1x8x32xf32> to vector<8x32xf32>
    %c0_69 = arith.constant 0 : index
    %c0_70 = arith.constant 0 : index
    %91 = vector.load %arg2[%c0_69, %c0_70] : memref<8x7xf32, #tpu.memory_space<vmem>>, vector<8x1xf32>
    %92 = vector.broadcast %91 : vector<8x1xf32> to vector<8x32xf32>
    %93 = arith.mulf %90, %92 : vector<8x32xf32>
    %94 = arith.addf %88, %93 : vector<8x32xf32>
    %c1_71 = arith.constant 1 : index
    %c0_72 = arith.constant 0 : index
    %c1_73 = arith.constant 1 : index
    %95 = vector.load %arg5[%c1_71, %c0_72, %c1_73] : memref<2x8x38xf32, #tpu.memory_space<vmem>>, vector<1x8x32xf32>
    %96 = vector.shape_cast %95 : vector<1x8x32xf32> to vector<8x32xf32>
    %c0_74 = arith.constant 0 : index
    %c1_75 = arith.constant 1 : index
    %97 = vector.load %arg2[%c0_74, %c1_75] : memref<8x7xf32, #tpu.memory_space<vmem>>, vector<8x1xf32>
    %98 = vector.broadcast %97 : vector<8x1xf32> to vector<8x32xf32>
    %99 = arith.mulf %96, %98 : vector<8x32xf32>
    %100 = arith.addf %94, %99 : vector<8x32xf32>
    %c1_76 = arith.constant 1 : index
    %c0_77 = arith.constant 0 : index
    %c2_78 = arith.constant 2 : index
    %101 = vector.load %arg5[%c1_76, %c0_77, %c2_78] : memref<2x8x38xf32, #tpu.memory_space<vmem>>, vector<1x8x32xf32>
    %102 = vector.shape_cast %101 : vector<1x8x32xf32> to vector<8x32xf32>
    %c0_79 = arith.constant 0 : index
    %c2_80 = arith.constant 2 : index
    %103 = vector.load %arg2[%c0_79, %c2_80] : memref<8x7xf32, #tpu.memory_space<vmem>>, vector<8x1xf32>
    %104 = vector.broadcast %103 : vector<8x1xf32> to vector<8x32xf32>
    %105 = arith.mulf %102, %104 : vector<8x32xf32>
    %106 = arith.addf %100, %105 : vector<8x32xf32>
    %c1_81 = arith.constant 1 : index
    %c0_82 = arith.constant 0 : index
    %c3_83 = arith.constant 3 : index
    %107 = vector.load %arg5[%c1_81, %c0_82, %c3_83] : memref<2x8x38xf32, #tpu.memory_space<vmem>>, vector<1x8x32xf32>
    %108 = vector.shape_cast %107 : vector<1x8x32xf32> to vector<8x32xf32>
    %c0_84 = arith.constant 0 : index
    %c3_85 = arith.constant 3 : index
    %109 = vector.load %arg2[%c0_84, %c3_85] : memref<8x7xf32, #tpu.memory_space<vmem>>, vector<8x1xf32>
    %110 = vector.broadcast %109 : vector<8x1xf32> to vector<8x32xf32>
    %111 = arith.mulf %108, %110 : vector<8x32xf32>
    %112 = arith.addf %106, %111 : vector<8x32xf32>
    %c1_86 = arith.constant 1 : index
    %c0_87 = arith.constant 0 : index
    %c4_88 = arith.constant 4 : index
    %113 = vector.load %arg5[%c1_86, %c0_87, %c4_88] : memref<2x8x38xf32, #tpu.memory_space<vmem>>, vector<1x8x32xf32>
    %114 = vector.shape_cast %113 : vector<1x8x32xf32> to vector<8x32xf32>
    %c0_89 = arith.constant 0 : index
    %c4_90 = arith.constant 4 : index
    %115 = vector.load %arg2[%c0_89, %c4_90] : memref<8x7xf32, #tpu.memory_space<vmem>>, vector<8x1xf32>
    %116 = vector.broadcast %115 : vector<8x1xf32> to vector<8x32xf32>
    %117 = arith.mulf %114, %116 : vector<8x32xf32>
    %118 = arith.addf %112, %117 : vector<8x32xf32>
    %c1_91 = arith.constant 1 : index
    %c0_92 = arith.constant 0 : index
    %c5_93 = arith.constant 5 : index
    %119 = vector.load %arg5[%c1_91, %c0_92, %c5_93] : memref<2x8x38xf32, #tpu.memory_space<vmem>>, vector<1x8x32xf32>
    %120 = vector.shape_cast %119 : vector<1x8x32xf32> to vector<8x32xf32>
    %c0_94 = arith.constant 0 : index
    %c5_95 = arith.constant 5 : index
    %121 = vector.load %arg2[%c0_94, %c5_95] : memref<8x7xf32, #tpu.memory_space<vmem>>, vector<8x1xf32>
    %122 = vector.broadcast %121 : vector<8x1xf32> to vector<8x32xf32>
    %123 = arith.mulf %120, %122 : vector<8x32xf32>
    %124 = arith.addf %118, %123 : vector<8x32xf32>
    %c1_96 = arith.constant 1 : index
    %c0_97 = arith.constant 0 : index
    %c6_98 = arith.constant 6 : index
    %125 = vector.load %arg5[%c1_96, %c0_97, %c6_98] : memref<2x8x38xf32, #tpu.memory_space<vmem>>, vector<1x8x32xf32>
    %126 = vector.shape_cast %125 : vector<1x8x32xf32> to vector<8x32xf32>
    %c0_99 = arith.constant 0 : index
    %c6_100 = arith.constant 6 : index
    %127 = vector.load %arg2[%c0_99, %c6_100] : memref<8x7xf32, #tpu.memory_space<vmem>>, vector<8x1xf32>
    %128 = vector.broadcast %127 : vector<8x1xf32> to vector<8x32xf32>
    %129 = arith.mulf %126, %128 : vector<8x32xf32>
    %130 = arith.addf %124, %129 : vector<8x32xf32>
    %cst_101 = arith.constant dense<0.000000e+00> : vector<32xf32>
    %131 = vector.multi_reduction <add>, %130, %cst_101 [0] : vector<8x32xf32> to vector<32xf32>
    %132 = vector.shape_cast %131 : vector<32xf32> to vector<1x32xf32>
    %c0_102 = arith.constant 0 : index
    %c0_103 = arith.constant 0 : index
    %133 = vector.load %arg3[%c0_102, %c0_103] : memref<1x1xf32, #tpu.memory_space<vmem>>, vector<1x1xf32>
    %134 = vector.broadcast %133 : vector<1x1xf32> to vector<1x32xf32>
    %135 = arith.addf %132, %134 : vector<1x32xf32>
    %136 = math.tanh %135 : vector<1x32xf32>
    %c1_104 = arith.constant 1 : index
    %c0_105 = arith.constant 0 : index
    %c0_106 = arith.constant 0 : index
    %137 = vector.load %arg4[%c1_104, %c0_105, %c0_106] : memref<2x1x32xf32, #tpu.memory_space<vmem>>, vector<1x1x32xf32>
    %138 = vector.shape_cast %137 : vector<1x1x32xf32> to vector<1x32xf32>
    %139 = vector.shape_cast %136 : vector<1x32xf32> to vector<1x1x32xf32>
    tpu.vector_store %arg4[%c1_104, %c0_105, %c0_106], %139 {strides = array<i32>} : memref<2x1x32xf32, #tpu.memory_space<vmem>>, vector<1x1x32xf32>,
    return
  }
  func.func @transform_0(%arg0: i32) -> (i32, i32, i32) {
    %c0_i32 = arith.constant 0 : i32
    %c0_i32_0 = arith.constant 0 : i32
    %c0_i32_1 = arith.constant 0 : i32
    %c0_i32_2 = arith.constant 0 : i32
    return %c0_i32, %c0_i32_0, %c0_i32_1 : i32, i32, i32
  }
  func.func @transform_1(%arg0: i32) -> (i32, i32) {
    %c0_i32 = arith.constant 0 : i32
    %c0_i32_0 = arith.constant 0 : i32
    %c0_i32_1 = arith.constant 0 : i32
    return %c0_i32, %c0_i32_0 : i32, i32
  }
  func.func @transform_2(%arg0: i32) -> (i32, i32) {
    %c0_i32 = arith.constant 0 : i32
    %c0_i32_0 = arith.constant 0 : i32
    %c0_i32_1 = arith.constant 0 : i32
    return %c0_i32, %c0_i32_0 : i32, i32
  }
  func.func @transform_3(%arg0: i32) -> (i32, i32, i32) {
    %c0_i32 = arith.constant 0 : i32
    %c0_i32_0 = arith.constant 0 : i32
    %c0_i32_1 = arith.constant 0 : i32
    %c0_i32_2 = arith.constant 0 : i32
    return %c0_i32, %c0_i32_0, %c0_i32_1 : i32, i32, i32
  }
}

module attributes {stable_mosaic.version = 11 : i64} {
  func.func @kernel(%arg0: i32, %arg1: memref<2x32x8xf32, #tpu.memory_space<vmem>>, %arg2: memref<32x96xbf16, #tpu.memory_space<vmem>>, %arg3: memref<16x1xf32, #tpu.memory_space<vmem>>, %arg4: memref<16x32xf32, #tpu.memory_space<vmem>>, %arg5: memref<16x32xf32, #tpu.memory_space<vmem>>, %arg6: memref<16x48xbf16, #tpu.memory_space<vmem>>, %arg7: memref<16x1xf32, #tpu.memory_space<vmem>>, %arg8: memref<16x48xbf16, #tpu.memory_space<vmem>>, %arg9: memref<16x1xf32, #tpu.memory_space<vmem>>, %arg10: memref<16x80xbf16, #tpu.memory_space<vmem>>, %arg11: memref<16x1xf32, #tpu.memory_space<vmem>>, %arg12: memref<16x80xbf16, #tpu.memory_space<vmem>>, %arg13: memref<16x1xf32, #tpu.memory_space<vmem>>, %arg14: memref<2x16x16xf32, #tpu.memory_space<vmem>>, %arg15: memref<2x32x10xbf16, #tpu.memory_space<vmem>>, %arg16: memref<96x16xbf16, #tpu.memory_space<vmem>>, %arg17: memref<2x16x28xbf16, #tpu.memory_space<vmem>>, %arg18: memref<80x32xbf16, #tpu.memory_space<vmem>>) attributes {dimension_semantics = [#tpu.dimension_semantics<arbitrary>], iteration_bounds = array<i64: 1>, scalar_prefetch = 0 : i64, scratch_operands = 4 : i64, tpu.core_type = #tpu.core_type<tc>, window_params = [{pipeline_mode = #tpu.pipeline_mode<synchronous>, transform_indices = @transform_0, window_bounds = array<i64: 2, 32, 8>}, {pipeline_mode = #tpu.pipeline_mode<synchronous>, transform_indices = @transform_1, window_bounds = array<i64: 32, 96>}, {pipeline_mode = #tpu.pipeline_mode<synchronous>, transform_indices = @transform_2, window_bounds = array<i64: 16, 1>}, {pipeline_mode = #tpu.pipeline_mode<synchronous>, transform_indices = @transform_3, window_bounds = array<i64: 16, 32>}, {pipeline_mode = #tpu.pipeline_mode<synchronous>, transform_indices = @transform_4, window_bounds = array<i64: 16, 32>}, {pipeline_mode = #tpu.pipeline_mode<synchronous>, transform_indices = @transform_5, window_bounds = array<i64: 16, 48>}, {pipeline_mode = #tpu.pipeline_mode<synchronous>, transform_indices = @transform_6, window_bounds = array<i64: 16, 1>}, {pipeline_mode = #tpu.pipeline_mode<synchronous>, transform_indices = @transform_7, window_bounds = array<i64: 16, 48>}, {pipeline_mode = #tpu.pipeline_mode<synchronous>, transform_indices = @transform_8, window_bounds = array<i64: 16, 1>}, {pipeline_mode = #tpu.pipeline_mode<synchronous>, transform_indices = @transform_9, window_bounds = array<i64: 16, 80>}, {pipeline_mode = #tpu.pipeline_mode<synchronous>, transform_indices = @transform_10, window_bounds = array<i64: 16, 1>}, {pipeline_mode = #tpu.pipeline_mode<synchronous>, transform_indices = @transform_11, window_bounds = array<i64: 16, 80>}, {pipeline_mode = #tpu.pipeline_mode<synchronous>, transform_indices = @transform_12, window_bounds = array<i64: 16, 1>}, {pipeline_mode = #tpu.pipeline_mode<synchronous>, transform_indices = @transform_13, window_bounds = array<i64: 2, 16, 16>}]} {
    %c0 = arith.constant 0 : index
    %c0_0 = arith.constant 0 : index
    %c0_1 = arith.constant 0 : index
    %0 = vector.load %arg1[%c0, %c0_0, %c0_1] : memref<2x32x8xf32, #tpu.memory_space<vmem>>, vector<1x32x8xf32>
    %1 = vector.shape_cast %0 : vector<1x32x8xf32> to vector<32x8xf32>
    %cst = arith.constant 0.000000e+00 : f32
    %2 = vector.broadcast %cst : f32 to vector<32x8xf32>
    %3 = arith.cmpf oge, %1, %2 : vector<32x8xf32>
    %cst_2 = arith.constant 1.000000e-01 : f32
    %4 = vector.broadcast %cst_2 : f32 to vector<32x8xf32>
    %5 = arith.mulf %4, %1 : vector<32x8xf32>
    %6 = arith.select %3, %1, %5 : vector<32x8xi1>, vector<32x8xf32>
    %cst_3 = arith.constant 0.000000e+00 : bf16
    %7 = vector.broadcast %cst_3 : bf16 to vector<32x1xbf16>
    %c0_4 = arith.constant 0 : index
    %c0_5 = arith.constant 0 : index
    %c0_6 = arith.constant 0 : index
    %8 = vector.load %arg15[%c0_4, %c0_5, %c0_6] : memref<2x32x10xbf16, #tpu.memory_space<vmem>>, vector<1x32x1xbf16>
    %9 = vector.shape_cast %8 : vector<1x32x1xbf16> to vector<32x1xbf16>
    %10 = vector.shape_cast %7 : vector<32x1xbf16> to vector<1x32x1xbf16>
    tpu.vector_store %arg15[%c0_4, %c0_5, %c0_6], %10 {strides = array<i32>} : memref<2x32x10xbf16, #tpu.memory_space<vmem>>, vector<1x32x1xbf16>,
    %cst_7 = arith.constant 0.000000e+00 : bf16
    %11 = vector.broadcast %cst_7 : bf16 to vector<32x1xbf16>
    %c0_8 = arith.constant 0 : index
    %c0_9 = arith.constant 0 : index
    %c9 = arith.constant 9 : index
    %12 = vector.load %arg15[%c0_8, %c0_9, %c9] : memref<2x32x10xbf16, #tpu.memory_space<vmem>>, vector<1x32x1xbf16>
    %13 = vector.shape_cast %12 : vector<1x32x1xbf16> to vector<32x1xbf16>
    %14 = vector.shape_cast %11 : vector<32x1xbf16> to vector<1x32x1xbf16>
    tpu.vector_store %arg15[%c0_8, %c0_9, %c9], %14 {strides = array<i32>} : memref<2x32x10xbf16, #tpu.memory_space<vmem>>, vector<1x32x1xbf16>,
    %15 = arith.truncf %6 : vector<32x8xf32> to vector<32x8xbf16>
    %c0_10 = arith.constant 0 : index
    %c0_11 = arith.constant 0 : index
    %c1 = arith.constant 1 : index
    %16 = vector.load %arg15[%c0_10, %c0_11, %c1] : memref<2x32x10xbf16, #tpu.memory_space<vmem>>, vector<1x32x8xbf16>
    %17 = vector.shape_cast %16 : vector<1x32x8xbf16> to vector<32x8xbf16>
    %18 = vector.shape_cast %15 : vector<32x8xbf16> to vector<1x32x8xbf16>
    tpu.vector_store %arg15[%c0_10, %c0_11, %c1], %18 {strides = array<i32>} : memref<2x32x10xbf16, #tpu.memory_space<vmem>>, vector<1x32x8xbf16>,
    %c1_12 = arith.constant 1 : index
    %c0_13 = arith.constant 0 : index
    %c0_14 = arith.constant 0 : index
    %19 = vector.load %arg1[%c1_12, %c0_13, %c0_14] : memref<2x32x8xf32, #tpu.memory_space<vmem>>, vector<1x32x8xf32>
    %20 = vector.shape_cast %19 : vector<1x32x8xf32> to vector<32x8xf32>
    %cst_15 = arith.constant 0.000000e+00 : f32
    %21 = vector.broadcast %cst_15 : f32 to vector<32x8xf32>
    %22 = arith.cmpf oge, %20, %21 : vector<32x8xf32>
    %cst_16 = arith.constant 1.000000e-01 : f32
    %23 = vector.broadcast %cst_16 : f32 to vector<32x8xf32>
    %24 = arith.mulf %23, %20 : vector<32x8xf32>
    %25 = arith.select %22, %20, %24 : vector<32x8xi1>, vector<32x8xf32>
    %cst_17 = arith.constant 0.000000e+00 : bf16
    %26 = vector.broadcast %cst_17 : bf16 to vector<32x1xbf16>
    %c1_18 = arith.constant 1 : index
    %c0_19 = arith.constant 0 : index
    %c0_20 = arith.constant 0 : index
    %27 = vector.load %arg15[%c1_18, %c0_19, %c0_20] : memref<2x32x10xbf16, #tpu.memory_space<vmem>>, vector<1x32x1xbf16>
    %28 = vector.shape_cast %27 : vector<1x32x1xbf16> to vector<32x1xbf16>
    %29 = vector.shape_cast %26 : vector<32x1xbf16> to vector<1x32x1xbf16>
    tpu.vector_store %arg15[%c1_18, %c0_19, %c0_20], %29 {strides = array<i32>} : memref<2x32x10xbf16, #tpu.memory_space<vmem>>, vector<1x32x1xbf16>,
    %cst_21 = arith.constant 0.000000e+00 : bf16
    %30 = vector.broadcast %cst_21 : bf16 to vector<32x1xbf16>
    %c1_22 = arith.constant 1 : index
    %c0_23 = arith.constant 0 : index
    %c9_24 = arith.constant 9 : index
    %31 = vector.load %arg15[%c1_22, %c0_23, %c9_24] : memref<2x32x10xbf16, #tpu.memory_space<vmem>>, vector<1x32x1xbf16>
    %32 = vector.shape_cast %31 : vector<1x32x1xbf16> to vector<32x1xbf16>
    %33 = vector.shape_cast %30 : vector<32x1xbf16> to vector<1x32x1xbf16>
    tpu.vector_store %arg15[%c1_22, %c0_23, %c9_24], %33 {strides = array<i32>} : memref<2x32x10xbf16, #tpu.memory_space<vmem>>, vector<1x32x1xbf16>,
    %34 = arith.truncf %25 : vector<32x8xf32> to vector<32x8xbf16>
    %c1_25 = arith.constant 1 : index
    %c0_26 = arith.constant 0 : index
    %c1_27 = arith.constant 1 : index
    %35 = vector.load %arg15[%c1_25, %c0_26, %c1_27] : memref<2x32x10xbf16, #tpu.memory_space<vmem>>, vector<1x32x8xbf16>
    %36 = vector.shape_cast %35 : vector<1x32x8xbf16> to vector<32x8xbf16>
    %37 = vector.shape_cast %34 : vector<32x8xbf16> to vector<1x32x8xbf16>
    tpu.vector_store %arg15[%c1_25, %c0_26, %c1_27], %37 {strides = array<i32>} : memref<2x32x10xbf16, #tpu.memory_space<vmem>>, vector<1x32x8xbf16>,
    %c0_28 = arith.constant 0 : index
    %c0_29 = arith.constant 0 : index
    %c2 = arith.constant 2 : index
    %38 = vector.load %arg15[%c0_28, %c0_29, %c2] : memref<2x32x10xbf16, #tpu.memory_space<vmem>>, vector<1x32x8xbf16>
    %39 = vector.shape_cast %38 : vector<1x32x8xbf16> to vector<32x8xbf16>
    %c0_30 = arith.constant 0 : index
    %c0_31 = arith.constant 0 : index
    %40 = vector.load %arg16[%c0_30, %c0_31] : memref<96x16xbf16, #tpu.memory_space<vmem>>, vector<32x8xbf16>
    tpu.vector_store %arg16[%c0_30, %c0_31], %39 {strides = array<i32>} : memref<96x16xbf16, #tpu.memory_space<vmem>>, vector<32x8xbf16>,
    %c0_32 = arith.constant 0 : index
    %c0_33 = arith.constant 0 : index
    %c1_34 = arith.constant 1 : index
    %41 = vector.load %arg15[%c0_32, %c0_33, %c1_34] : memref<2x32x10xbf16, #tpu.memory_space<vmem>>, vector<1x32x8xbf16>
    %42 = vector.shape_cast %41 : vector<1x32x8xbf16> to vector<32x8xbf16>
    %c32 = arith.constant 32 : index
    %c0_35 = arith.constant 0 : index
    %43 = vector.load %arg16[%c32, %c0_35] : memref<96x16xbf16, #tpu.memory_space<vmem>>, vector<32x8xbf16>
    tpu.vector_store %arg16[%c32, %c0_35], %42 {strides = array<i32>} : memref<96x16xbf16, #tpu.memory_space<vmem>>, vector<32x8xbf16>,
    %c0_36 = arith.constant 0 : index
    %c0_37 = arith.constant 0 : index
    %c0_38 = arith.constant 0 : index
    %44 = vector.load %arg15[%c0_36, %c0_37, %c0_38] : memref<2x32x10xbf16, #tpu.memory_space<vmem>>, vector<1x32x8xbf16>
    %45 = vector.shape_cast %44 : vector<1x32x8xbf16> to vector<32x8xbf16>
    %c64 = arith.constant 64 : index
    %c0_39 = arith.constant 0 : index
    %46 = vector.load %arg16[%c64, %c0_39] : memref<96x16xbf16, #tpu.memory_space<vmem>>, vector<32x8xbf16>
    tpu.vector_store %arg16[%c64, %c0_39], %45 {strides = array<i32>} : memref<96x16xbf16, #tpu.memory_space<vmem>>, vector<32x8xbf16>,
    %c1_40 = arith.constant 1 : index
    %c0_41 = arith.constant 0 : index
    %c2_42 = arith.constant 2 : index
    %47 = vector.load %arg15[%c1_40, %c0_41, %c2_42] : memref<2x32x10xbf16, #tpu.memory_space<vmem>>, vector<1x32x8xbf16>
    %48 = vector.shape_cast %47 : vector<1x32x8xbf16> to vector<32x8xbf16>
    %c0_43 = arith.constant 0 : index
    %c8 = arith.constant 8 : index
    %49 = vector.load %arg16[%c0_43, %c8] : memref<96x16xbf16, #tpu.memory_space<vmem>>, vector<32x8xbf16>
    tpu.vector_store %arg16[%c0_43, %c8], %48 {strides = array<i32>} : memref<96x16xbf16, #tpu.memory_space<vmem>>, vector<32x8xbf16>,
    %c1_44 = arith.constant 1 : index
    %c0_45 = arith.constant 0 : index
    %c1_46 = arith.constant 1 : index
    %50 = vector.load %arg15[%c1_44, %c0_45, %c1_46] : memref<2x32x10xbf16, #tpu.memory_space<vmem>>, vector<1x32x8xbf16>
    %51 = vector.shape_cast %50 : vector<1x32x8xbf16> to vector<32x8xbf16>
    %c32_47 = arith.constant 32 : index
    %c8_48 = arith.constant 8 : index
    %52 = vector.load %arg16[%c32_47, %c8_48] : memref<96x16xbf16, #tpu.memory_space<vmem>>, vector<32x8xbf16>
    tpu.vector_store %arg16[%c32_47, %c8_48], %51 {strides = array<i32>} : memref<96x16xbf16, #tpu.memory_space<vmem>>, vector<32x8xbf16>,
    %c1_49 = arith.constant 1 : index
    %c0_50 = arith.constant 0 : index
    %c0_51 = arith.constant 0 : index
    %53 = vector.load %arg15[%c1_49, %c0_50, %c0_51] : memref<2x32x10xbf16, #tpu.memory_space<vmem>>, vector<1x32x8xbf16>
    %54 = vector.shape_cast %53 : vector<1x32x8xbf16> to vector<32x8xbf16>
    %c64_52 = arith.constant 64 : index
    %c8_53 = arith.constant 8 : index
    %55 = vector.load %arg16[%c64_52, %c8_53] : memref<96x16xbf16, #tpu.memory_space<vmem>>, vector<32x8xbf16>
    tpu.vector_store %arg16[%c64_52, %c8_53], %54 {strides = array<i32>} : memref<96x16xbf16, #tpu.memory_space<vmem>>, vector<32x8xbf16>,
    %c0_54 = arith.constant 0 : index
    %c0_55 = arith.constant 0 : index
    %56 = vector.load %arg2[%c0_54, %c0_55] : memref<32x96xbf16, #tpu.memory_space<vmem>>, vector<32x96xbf16>
    %c0_56 = arith.constant 0 : index
    %c0_57 = arith.constant 0 : index
    %57 = vector.load %arg16[%c0_56, %c0_57] : memref<96x16xbf16, #tpu.memory_space<vmem>>, vector<96x16xbf16>
    %cst_58 = arith.constant dense<0.000000e+00> : vector<32x16xf32>
    %58 = tpu.matmul %56, %57, %cst_58 {dimension_numbers = #tpu.dot_dimension_numbers<[1], [0], [0], [1], [0, 0, 1, 1], [], []>} : vector<32x96xbf16>, vector<96x16xbf16>, vector<32x16xf32> -> vector<32x16xf32>
    %cst_59 = arith.constant 0.000000e+00 : f32
    %59 = vector.broadcast %cst_59 : f32 to vector<16x32xf32>
    %60 = vector.extract_strided_slice %58 {offsets = [0, 0], sizes = [16, 16], strides = [1, 1]} : vector<32x16xf32> to vector<16x16xf32>
    %c0_60 = arith.constant 0 : index
    %c0_61 = arith.constant 0 : index
    %61 = vector.load %arg4[%c0_60, %c0_61] : memref<16x32xf32, #tpu.memory_space<vmem>>, vector<16x32xf32>
    %cst_62 = arith.constant dense<0.000000e+00> : vector<16x32xf32>
    %62 = tpu.matmul %60, %61, %cst_62 {dimension_numbers = #tpu.dot_dimension_numbers<[1], [0], [0], [1], [0, 0, 1, 1], [], []>} : vector<16x16xf32>, vector<16x32xf32>, vector<16x32xf32> -> vector<16x32xf32>
    %63 = arith.addf %59, %62 : vector<16x32xf32>
    %64 = vector.extract_strided_slice %58 {offsets = [16, 0], sizes = [16, 16], strides = [1, 1]} : vector<32x16xf32> to vector<16x16xf32>
    %c0_63 = arith.constant 0 : index
    %c0_64 = arith.constant 0 : index
    %65 = vector.load %arg5[%c0_63, %c0_64] : memref<16x32xf32, #tpu.memory_space<vmem>>, vector<16x32xf32>
    %cst_65 = arith.constant dense<0.000000e+00> : vector<16x32xf32>
    %66 = tpu.matmul %64, %65, %cst_65 {dimension_numbers = #tpu.dot_dimension_numbers<[1], [0], [0], [1], [0, 0, 1, 1], [], []>} : vector<16x16xf32>, vector<16x32xf32>, vector<16x32xf32> -> vector<16x32xf32>
    %67 = arith.addf %63, %66 : vector<16x32xf32>
    %c0_66 = arith.constant 0 : index
    %c0_67 = arith.constant 0 : index
    %68 = vector.load %arg3[%c0_66, %c0_67] : memref<16x1xf32, #tpu.memory_space<vmem>>, vector<16x1xf32>
    %69 = vector.broadcast %68 : vector<16x1xf32> to vector<16x32xf32>
    %70 = arith.addf %67, %69 : vector<16x32xf32>
    %cst_68 = arith.constant 0.000000e+00 : f32
    %71 = vector.broadcast %cst_68 : f32 to vector<16x32xf32>
    %cst_69 = arith.constant 0.000000e+00 : f32
    %72 = vector.broadcast %cst_69 : f32 to vector<16x32xf32>
    %73 = arith.cmpf oge, %70, %72 : vector<16x32xf32>
    %cst_70 = arith.constant 1.000000e-01 : f32
    %74 = vector.broadcast %cst_70 : f32 to vector<16x32xf32>
    %75 = arith.mulf %74, %70 : vector<16x32xf32>
    %76 = arith.select %73, %70, %75 : vector<16x32xi1>, vector<16x32xf32>
    %cst_71 = arith.constant 0.000000e+00 : bf16
    %77 = vector.broadcast %cst_71 : bf16 to vector<16x1xbf16>
    %c0_72 = arith.constant 0 : index
    %c0_73 = arith.constant 0 : index
    %c0_74 = arith.constant 0 : index
    %78 = vector.load %arg17[%c0_72, %c0_73, %c0_74] : memref<2x16x28xbf16, #tpu.memory_space<vmem>>, vector<1x16x1xbf16>
    %79 = vector.shape_cast %78 : vector<1x16x1xbf16> to vector<16x1xbf16>
    %80 = vector.shape_cast %77 : vector<16x1xbf16> to vector<1x16x1xbf16>
    tpu.vector_store %arg17[%c0_72, %c0_73, %c0_74], %80 {strides = array<i32>} : memref<2x16x28xbf16, #tpu.memory_space<vmem>>, vector<1x16x1xbf16>,
    %cst_75 = arith.constant 0.000000e+00 : bf16
    %81 = vector.broadcast %cst_75 : bf16 to vector<16x1xbf16>
    %c0_76 = arith.constant 0 : index
    %c0_77 = arith.constant 0 : index
    %c17 = arith.constant 17 : index
    %82 = vector.load %arg17[%c0_76, %c0_77, %c17] : memref<2x16x28xbf16, #tpu.memory_space<vmem>>, vector<1x16x1xbf16>
    %83 = vector.shape_cast %82 : vector<1x16x1xbf16> to vector<16x1xbf16>
    %84 = vector.shape_cast %81 : vector<16x1xbf16> to vector<1x16x1xbf16>
    tpu.vector_store %arg17[%c0_76, %c0_77, %c17], %84 {strides = array<i32>} : memref<2x16x28xbf16, #tpu.memory_space<vmem>>, vector<1x16x1xbf16>,
    %85 = vector.extract_strided_slice %76 {offsets = [0, 0], sizes = [16, 16], strides = [1, 1]} : vector<16x32xf32> to vector<16x16xf32>
    %86 = arith.truncf %85 : vector<16x16xf32> to vector<16x16xbf16>
    %c0_78 = arith.constant 0 : index
    %c0_79 = arith.constant 0 : index
    %c1_80 = arith.constant 1 : index
    %87 = vector.load %arg17[%c0_78, %c0_79, %c1_80] : memref<2x16x28xbf16, #tpu.memory_space<vmem>>, vector<1x16x16xbf16>
    %88 = vector.shape_cast %87 : vector<1x16x16xbf16> to vector<16x16xbf16>
    %89 = vector.shape_cast %86 : vector<16x16xbf16> to vector<1x16x16xbf16>
    tpu.vector_store %arg17[%c0_78, %c0_79, %c1_80], %89 {strides = array<i32>} : memref<2x16x28xbf16, #tpu.memory_space<vmem>>, vector<1x16x16xbf16>,
    %cst_81 = arith.constant 0.000000e+00 : bf16
    %90 = vector.broadcast %cst_81 : bf16 to vector<16x1xbf16>
    %c1_82 = arith.constant 1 : index
    %c0_83 = arith.constant 0 : index
    %c0_84 = arith.constant 0 : index
    %91 = vector.load %arg17[%c1_82, %c0_83, %c0_84] : memref<2x16x28xbf16, #tpu.memory_space<vmem>>, vector<1x16x1xbf16>
    %92 = vector.shape_cast %91 : vector<1x16x1xbf16> to vector<16x1xbf16>
    %93 = vector.shape_cast %90 : vector<16x1xbf16> to vector<1x16x1xbf16>
    tpu.vector_store %arg17[%c1_82, %c0_83, %c0_84], %93 {strides = array<i32>} : memref<2x16x28xbf16, #tpu.memory_space<vmem>>, vector<1x16x1xbf16>,
    %cst_85 = arith.constant 0.000000e+00 : bf16
    %94 = vector.broadcast %cst_85 : bf16 to vector<16x1xbf16>
    %c1_86 = arith.constant 1 : index
    %c0_87 = arith.constant 0 : index
    %c17_88 = arith.constant 17 : index
    %95 = vector.load %arg17[%c1_86, %c0_87, %c17_88] : memref<2x16x28xbf16, #tpu.memory_space<vmem>>, vector<1x16x1xbf16>
    %96 = vector.shape_cast %95 : vector<1x16x1xbf16> to vector<16x1xbf16>
    %97 = vector.shape_cast %94 : vector<16x1xbf16> to vector<1x16x1xbf16>
    tpu.vector_store %arg17[%c1_86, %c0_87, %c17_88], %97 {strides = array<i32>} : memref<2x16x28xbf16, #tpu.memory_space<vmem>>, vector<1x16x1xbf16>,
    %98 = vector.extract_strided_slice %76 {offsets = [0, 16], sizes = [16, 16], strides = [1, 1]} : vector<16x32xf32> to vector<16x16xf32>
    %99 = arith.truncf %98 : vector<16x16xf32> to vector<16x16xbf16>
    %c1_89 = arith.constant 1 : index
    %c0_90 = arith.constant 0 : index
    %c1_91 = arith.constant 1 : index
    %100 = vector.load %arg17[%c1_89, %c0_90, %c1_91] : memref<2x16x28xbf16, #tpu.memory_space<vmem>>, vector<1x16x16xbf16>
    %101 = vector.shape_cast %100 : vector<1x16x16xbf16> to vector<16x16xbf16>
    %102 = vector.shape_cast %99 : vector<16x16xbf16> to vector<1x16x16xbf16>
    tpu.vector_store %arg17[%c1_89, %c0_90, %c1_91], %102 {strides = array<i32>} : memref<2x16x28xbf16, #tpu.memory_space<vmem>>, vector<1x16x16xbf16>,
    %c0_92 = arith.constant 0 : index
    %c0_93 = arith.constant 0 : index
    %c0_94 = arith.constant 0 : index
    %103 = vector.load %arg17[%c0_92, %c0_93, %c0_94] : memref<2x16x28xbf16, #tpu.memory_space<vmem>>, vector<1x16x16xbf16>
    %104 = vector.shape_cast %103 : vector<1x16x16xbf16> to vector<16x16xbf16>
    %c0_95 = arith.constant 0 : index
    %c0_96 = arith.constant 0 : index
    %105 = vector.load %arg18[%c0_95, %c0_96] : memref<80x32xbf16, #tpu.memory_space<vmem>>, vector<16x16xbf16>
    tpu.vector_store %arg18[%c0_95, %c0_96], %104 {strides = array<i32>} : memref<80x32xbf16, #tpu.memory_space<vmem>>, vector<16x16xbf16>,
    %c0_97 = arith.constant 0 : index
    %c0_98 = arith.constant 0 : index
    %c1_99 = arith.constant 1 : index
    %106 = vector.load %arg17[%c0_97, %c0_98, %c1_99] : memref<2x16x28xbf16, #tpu.memory_space<vmem>>, vector<1x16x16xbf16>
    %107 = vector.shape_cast %106 : vector<1x16x16xbf16> to vector<16x16xbf16>
    %c16 = arith.constant 16 : index
    %c0_100 = arith.constant 0 : index
    %108 = vector.load %arg18[%c16, %c0_100] : memref<80x32xbf16, #tpu.memory_space<vmem>>, vector<16x16xbf16>
    tpu.vector_store %arg18[%c16, %c0_100], %107 {strides = array<i32>} : memref<80x32xbf16, #tpu.memory_space<vmem>>, vector<16x16xbf16>,
    %c0_101 = arith.constant 0 : index
    %c0_102 = arith.constant 0 : index
    %c2_103 = arith.constant 2 : index
    %109 = vector.load %arg17[%c0_101, %c0_102, %c2_103] : memref<2x16x28xbf16, #tpu.memory_space<vmem>>, vector<1x16x16xbf16>
    %110 = vector.shape_cast %109 : vector<1x16x16xbf16> to vector<16x16xbf16>
    %c32_104 = arith.constant 32 : index
    %c0_105 = arith.constant 0 : index
    %111 = vector.load %arg18[%c32_104, %c0_105] : memref<80x32xbf16, #tpu.memory_space<vmem>>, vector<16x16xbf16>
    tpu.vector_store %arg18[%c32_104, %c0_105], %110 {strides = array<i32>} : memref<80x32xbf16, #tpu.memory_space<vmem>>, vector<16x16xbf16>,
    %c1_106 = arith.constant 1 : index
    %c0_107 = arith.constant 0 : index
    %c0_108 = arith.constant 0 : index
    %112 = vector.load %arg17[%c1_106, %c0_107, %c0_108] : memref<2x16x28xbf16, #tpu.memory_space<vmem>>, vector<1x16x16xbf16>
    %113 = vector.shape_cast %112 : vector<1x16x16xbf16> to vector<16x16xbf16>
    %c0_109 = arith.constant 0 : index
    %c16_110 = arith.constant 16 : index
    %114 = vector.load %arg18[%c0_109, %c16_110] : memref<80x32xbf16, #tpu.memory_space<vmem>>, vector<16x16xbf16>
    tpu.vector_store %arg18[%c0_109, %c16_110], %113 {strides = array<i32>} : memref<80x32xbf16, #tpu.memory_space<vmem>>, vector<16x16xbf16>,
    %c1_111 = arith.constant 1 : index
    %c0_112 = arith.constant 0 : index
    %c1_113 = arith.constant 1 : index
    %115 = vector.load %arg17[%c1_111, %c0_112, %c1_113] : memref<2x16x28xbf16, #tpu.memory_space<vmem>>, vector<1x16x16xbf16>
    %116 = vector.shape_cast %115 : vector<1x16x16xbf16> to vector<16x16xbf16>
    %c16_114 = arith.constant 16 : index
    %c16_115 = arith.constant 16 : index
    %117 = vector.load %arg18[%c16_114, %c16_115] : memref<80x32xbf16, #tpu.memory_space<vmem>>, vector<16x16xbf16>
    tpu.vector_store %arg18[%c16_114, %c16_115], %116 {strides = array<i32>} : memref<80x32xbf16, #tpu.memory_space<vmem>>, vector<16x16xbf16>,
    %c1_116 = arith.constant 1 : index
    %c0_117 = arith.constant 0 : index
    %c2_118 = arith.constant 2 : index
    %118 = vector.load %arg17[%c1_116, %c0_117, %c2_118] : memref<2x16x28xbf16, #tpu.memory_space<vmem>>, vector<1x16x16xbf16>
    %119 = vector.shape_cast %118 : vector<1x16x16xbf16> to vector<16x16xbf16>
    %c32_119 = arith.constant 32 : index
    %c16_120 = arith.constant 16 : index
    %120 = vector.load %arg18[%c32_119, %c16_120] : memref<80x32xbf16, #tpu.memory_space<vmem>>, vector<16x16xbf16>
    tpu.vector_store %arg18[%c32_119, %c16_120], %119 {strides = array<i32>} : memref<80x32xbf16, #tpu.memory_space<vmem>>, vector<16x16xbf16>,
    %c0_121 = arith.constant 0 : index
    %c0_122 = arith.constant 0 : index
    %121 = vector.load %arg6[%c0_121, %c0_122] : memref<16x48xbf16, #tpu.memory_space<vmem>>, vector<16x48xbf16>
    %c0_123 = arith.constant 0 : index
    %c0_124 = arith.constant 0 : index
    %122 = vector.load %arg18[%c0_123, %c0_124] : memref<80x32xbf16, #tpu.memory_space<vmem>>, vector<48x32xbf16>
    %cst_125 = arith.constant dense<0.000000e+00> : vector<16x32xf32>
    %123 = tpu.matmul %121, %122, %cst_125 {dimension_numbers = #tpu.dot_dimension_numbers<[1], [0], [0], [1], [0, 0, 1, 1], [], []>} : vector<16x48xbf16>, vector<48x32xbf16>, vector<16x32xf32> -> vector<16x32xf32>
    %c0_126 = arith.constant 0 : index
    %c0_127 = arith.constant 0 : index
    %124 = vector.load %arg7[%c0_126, %c0_127] : memref<16x1xf32, #tpu.memory_space<vmem>>, vector<16x1xf32>
    %125 = vector.broadcast %124 : vector<16x1xf32> to vector<16x32xf32>
    %126 = arith.addf %123, %125 : vector<16x32xf32>
    %127 = arith.addf %126, %70 : vector<16x32xf32>
    %cst_128 = arith.constant 0.000000e+00 : f32
    %128 = vector.broadcast %cst_128 : f32 to vector<16x32xf32>
    %129 = arith.cmpf oge, %127, %128 : vector<16x32xf32>
    %cst_129 = arith.constant 1.000000e-01 : f32
    %130 = vector.broadcast %cst_129 : f32 to vector<16x32xf32>
    %131 = arith.mulf %130, %127 : vector<16x32xf32>
    %132 = arith.select %129, %127, %131 : vector<16x32xi1>, vector<16x32xf32>
    %cst_130 = arith.constant 0.000000e+00 : bf16
    %133 = vector.broadcast %cst_130 : bf16 to vector<16x3xbf16>
    %c0_131 = arith.constant 0 : index
    %c0_132 = arith.constant 0 : index
    %c0_133 = arith.constant 0 : index
    %134 = vector.load %arg17[%c0_131, %c0_132, %c0_133] : memref<2x16x28xbf16, #tpu.memory_space<vmem>>, vector<1x16x3xbf16>
    %135 = vector.shape_cast %134 : vector<1x16x3xbf16> to vector<16x3xbf16>
    %136 = vector.shape_cast %133 : vector<16x3xbf16> to vector<1x16x3xbf16>
    tpu.vector_store %arg17[%c0_131, %c0_132, %c0_133], %136 {strides = array<i32>} : memref<2x16x28xbf16, #tpu.memory_space<vmem>>, vector<1x16x3xbf16>,
    %cst_134 = arith.constant 0.000000e+00 : bf16
    %137 = vector.broadcast %cst_134 : bf16 to vector<16x3xbf16>
    %c0_135 = arith.constant 0 : index
    %c0_136 = arith.constant 0 : index
    %c19 = arith.constant 19 : index
    %138 = vector.load %arg17[%c0_135, %c0_136, %c19] : memref<2x16x28xbf16, #tpu.memory_space<vmem>>, vector<1x16x3xbf16>
    %139 = vector.shape_cast %138 : vector<1x16x3xbf16> to vector<16x3xbf16>
    %140 = vector.shape_cast %137 : vector<16x3xbf16> to vector<1x16x3xbf16>
    tpu.vector_store %arg17[%c0_135, %c0_136, %c19], %140 {strides = array<i32>} : memref<2x16x28xbf16, #tpu.memory_space<vmem>>, vector<1x16x3xbf16>,
    %141 = vector.extract_strided_slice %132 {offsets = [0, 0], sizes = [16, 16], strides = [1, 1]} : vector<16x32xf32> to vector<16x16xf32>
    %142 = arith.truncf %141 : vector<16x16xf32> to vector<16x16xbf16>
    %c0_137 = arith.constant 0 : index
    %c0_138 = arith.constant 0 : index
    %c3 = arith.constant 3 : index
    %143 = vector.load %arg17[%c0_137, %c0_138, %c3] : memref<2x16x28xbf16, #tpu.memory_space<vmem>>, vector<1x16x16xbf16>
    %144 = vector.shape_cast %143 : vector<1x16x16xbf16> to vector<16x16xbf16>
    %145 = vector.shape_cast %142 : vector<16x16xbf16> to vector<1x16x16xbf16>
    tpu.vector_store %arg17[%c0_137, %c0_138, %c3], %145 {strides = array<i32>} : memref<2x16x28xbf16, #tpu.memory_space<vmem>>, vector<1x16x16xbf16>,
    %cst_139 = arith.constant 0.000000e+00 : bf16
    %146 = vector.broadcast %cst_139 : bf16 to vector<16x3xbf16>
    %c1_140 = arith.constant 1 : index
    %c0_141 = arith.constant 0 : index
    %c0_142 = arith.constant 0 : index
    %147 = vector.load %arg17[%c1_140, %c0_141, %c0_142] : memref<2x16x28xbf16, #tpu.memory_space<vmem>>, vector<1x16x3xbf16>
    %148 = vector.shape_cast %147 : vector<1x16x3xbf16> to vector<16x3xbf16>
    %149 = vector.shape_cast %146 : vector<16x3xbf16> to vector<1x16x3xbf16>
    tpu.vector_store %arg17[%c1_140, %c0_141, %c0_142], %149 {strides = array<i32>} : memref<2x16x28xbf16, #tpu.memory_space<vmem>>, vector<1x16x3xbf16>,
    %cst_143 = arith.constant 0.000000e+00 : bf16
    %150 = vector.broadcast %cst_143 : bf16 to vector<16x3xbf16>
    %c1_144 = arith.constant 1 : index
    %c0_145 = arith.constant 0 : index
    %c19_146 = arith.constant 19 : index
    %151 = vector.load %arg17[%c1_144, %c0_145, %c19_146] : memref<2x16x28xbf16, #tpu.memory_space<vmem>>, vector<1x16x3xbf16>
    %152 = vector.shape_cast %151 : vector<1x16x3xbf16> to vector<16x3xbf16>
    %153 = vector.shape_cast %150 : vector<16x3xbf16> to vector<1x16x3xbf16>
    tpu.vector_store %arg17[%c1_144, %c0_145, %c19_146], %153 {strides = array<i32>} : memref<2x16x28xbf16, #tpu.memory_space<vmem>>, vector<1x16x3xbf16>,
    %154 = vector.extract_strided_slice %132 {offsets = [0, 16], sizes = [16, 16], strides = [1, 1]} : vector<16x32xf32> to vector<16x16xf32>
    %155 = arith.truncf %154 : vector<16x16xf32> to vector<16x16xbf16>
    %c1_147 = arith.constant 1 : index
    %c0_148 = arith.constant 0 : index
    %c3_149 = arith.constant 3 : index
    %156 = vector.load %arg17[%c1_147, %c0_148, %c3_149] : memref<2x16x28xbf16, #tpu.memory_space<vmem>>, vector<1x16x16xbf16>
    %157 = vector.shape_cast %156 : vector<1x16x16xbf16> to vector<16x16xbf16>
    %158 = vector.shape_cast %155 : vector<16x16xbf16> to vector<1x16x16xbf16>
    tpu.vector_store %arg17[%c1_147, %c0_148, %c3_149], %158 {strides = array<i32>} : memref<2x16x28xbf16, #tpu.memory_space<vmem>>, vector<1x16x16xbf16>,
    %c0_150 = arith.constant 0 : index
    %c0_151 = arith.constant 0 : index
    %c0_152 = arith.constant 0 : index
    %159 = vector.load %arg17[%c0_150, %c0_151, %c0_152] : memref<2x16x28xbf16, #tpu.memory_space<vmem>>, vector<1x16x16xbf16>
    %160 = vector.shape_cast %159 : vector<1x16x16xbf16> to vector<16x16xbf16>
    %c0_153 = arith.constant 0 : index
    %c0_154 = arith.constant 0 : index
    %161 = vector.load %arg18[%c0_153, %c0_154] : memref<80x32xbf16, #tpu.memory_space<vmem>>, vector<16x16xbf16>
    tpu.vector_store %arg18[%c0_153, %c0_154], %160 {strides = array<i32>} : memref<80x32xbf16, #tpu.memory_space<vmem>>, vector<16x16xbf16>,
    %c0_155 = arith.constant 0 : index
    %c0_156 = arith.constant 0 : index
    %c3_157 = arith.constant 3 : index
    %162 = vector.load %arg17[%c0_155, %c0_156, %c3_157] : memref<2x16x28xbf16, #tpu.memory_space<vmem>>, vector<1x16x16xbf16>
    %163 = vector.shape_cast %162 : vector<1x16x16xbf16> to vector<16x16xbf16>
    %c16_158 = arith.constant 16 : index
    %c0_159 = arith.constant 0 : index
    %164 = vector.load %arg18[%c16_158, %c0_159] : memref<80x32xbf16, #tpu.memory_space<vmem>>, vector<16x16xbf16>
    tpu.vector_store %arg18[%c16_158, %c0_159], %163 {strides = array<i32>} : memref<80x32xbf16, #tpu.memory_space<vmem>>, vector<16x16xbf16>,
    %c0_160 = arith.constant 0 : index
    %c0_161 = arith.constant 0 : index
    %c6 = arith.constant 6 : index
    %165 = vector.load %arg17[%c0_160, %c0_161, %c6] : memref<2x16x28xbf16, #tpu.memory_space<vmem>>, vector<1x16x16xbf16>
    %166 = vector.shape_cast %165 : vector<1x16x16xbf16> to vector<16x16xbf16>
    %c32_162 = arith.constant 32 : index
    %c0_163 = arith.constant 0 : index
    %167 = vector.load %arg18[%c32_162, %c0_163] : memref<80x32xbf16, #tpu.memory_space<vmem>>, vector<16x16xbf16>
    tpu.vector_store %arg18[%c32_162, %c0_163], %166 {strides = array<i32>} : memref<80x32xbf16, #tpu.memory_space<vmem>>, vector<16x16xbf16>,
    %c1_164 = arith.constant 1 : index
    %c0_165 = arith.constant 0 : index
    %c0_166 = arith.constant 0 : index
    %168 = vector.load %arg17[%c1_164, %c0_165, %c0_166] : memref<2x16x28xbf16, #tpu.memory_space<vmem>>, vector<1x16x16xbf16>
    %169 = vector.shape_cast %168 : vector<1x16x16xbf16> to vector<16x16xbf16>
    %c0_167 = arith.constant 0 : index
    %c16_168 = arith.constant 16 : index
    %170 = vector.load %arg18[%c0_167, %c16_168] : memref<80x32xbf16, #tpu.memory_space<vmem>>, vector<16x16xbf16>
    tpu.vector_store %arg18[%c0_167, %c16_168], %169 {strides = array<i32>} : memref<80x32xbf16, #tpu.memory_space<vmem>>, vector<16x16xbf16>,
    %c1_169 = arith.constant 1 : index
    %c0_170 = arith.constant 0 : index
    %c3_171 = arith.constant 3 : index
    %171 = vector.load %arg17[%c1_169, %c0_170, %c3_171] : memref<2x16x28xbf16, #tpu.memory_space<vmem>>, vector<1x16x16xbf16>
    %172 = vector.shape_cast %171 : vector<1x16x16xbf16> to vector<16x16xbf16>
    %c16_172 = arith.constant 16 : index
    %c16_173 = arith.constant 16 : index
    %173 = vector.load %arg18[%c16_172, %c16_173] : memref<80x32xbf16, #tpu.memory_space<vmem>>, vector<16x16xbf16>
    tpu.vector_store %arg18[%c16_172, %c16_173], %172 {strides = array<i32>} : memref<80x32xbf16, #tpu.memory_space<vmem>>, vector<16x16xbf16>,
    %c1_174 = arith.constant 1 : index
    %c0_175 = arith.constant 0 : index
    %c6_176 = arith.constant 6 : index
    %174 = vector.load %arg17[%c1_174, %c0_175, %c6_176] : memref<2x16x28xbf16, #tpu.memory_space<vmem>>, vector<1x16x16xbf16>
    %175 = vector.shape_cast %174 : vector<1x16x16xbf16> to vector<16x16xbf16>
    %c32_177 = arith.constant 32 : index
    %c16_178 = arith.constant 16 : index
    %176 = vector.load %arg18[%c32_177, %c16_178] : memref<80x32xbf16, #tpu.memory_space<vmem>>, vector<16x16xbf16>
    tpu.vector_store %arg18[%c32_177, %c16_178], %175 {strides = array<i32>} : memref<80x32xbf16, #tpu.memory_space<vmem>>, vector<16x16xbf16>,
    %c0_179 = arith.constant 0 : index
    %c0_180 = arith.constant 0 : index
    %177 = vector.load %arg8[%c0_179, %c0_180] : memref<16x48xbf16, #tpu.memory_space<vmem>>, vector<16x48xbf16>
    %c0_181 = arith.constant 0 : index
    %c0_182 = arith.constant 0 : index
    %178 = vector.load %arg18[%c0_181, %c0_182] : memref<80x32xbf16, #tpu.memory_space<vmem>>, vector<48x32xbf16>
    %cst_183 = arith.constant dense<0.000000e+00> : vector<16x32xf32>
    %179 = tpu.matmul %177, %178, %cst_183 {dimension_numbers = #tpu.dot_dimension_numbers<[1], [0], [0], [1], [0, 0, 1, 1], [], []>} : vector<16x48xbf16>, vector<48x32xbf16>, vector<16x32xf32> -> vector<16x32xf32>
    %c0_184 = arith.constant 0 : index
    %c0_185 = arith.constant 0 : index
    %180 = vector.load %arg9[%c0_184, %c0_185] : memref<16x1xf32, #tpu.memory_space<vmem>>, vector<16x1xf32>
    %181 = vector.broadcast %180 : vector<16x1xf32> to vector<16x32xf32>
    %182 = arith.addf %179, %181 : vector<16x32xf32>
    %183 = arith.addf %182, %127 : vector<16x32xf32>
    %184 = arith.addf %71, %183 : vector<16x32xf32>
    %cst_186 = arith.constant 0.000000e+00 : f32
    %185 = vector.broadcast %cst_186 : f32 to vector<16x32xf32>
    %186 = arith.cmpf oge, %70, %185 : vector<16x32xf32>
    %cst_187 = arith.constant 1.000000e-01 : f32
    %187 = vector.broadcast %cst_187 : f32 to vector<16x32xf32>
    %188 = arith.mulf %187, %70 : vector<16x32xf32>
    %189 = arith.select %186, %70, %188 : vector<16x32xi1>, vector<16x32xf32>
    %cst_188 = arith.constant 0.000000e+00 : bf16
    %190 = vector.broadcast %cst_188 : bf16 to vector<16x2xbf16>
    %c0_189 = arith.constant 0 : index
    %c0_190 = arith.constant 0 : index
    %c0_191 = arith.constant 0 : index
    %191 = vector.load %arg17[%c0_189, %c0_190, %c0_191] : memref<2x16x28xbf16, #tpu.memory_space<vmem>>, vector<1x16x2xbf16>
    %192 = vector.shape_cast %191 : vector<1x16x2xbf16> to vector<16x2xbf16>
    %193 = vector.shape_cast %190 : vector<16x2xbf16> to vector<1x16x2xbf16>
    tpu.vector_store %arg17[%c0_189, %c0_190, %c0_191], %193 {strides = array<i32>} : memref<2x16x28xbf16, #tpu.memory_space<vmem>>, vector<1x16x2xbf16>,
    %cst_192 = arith.constant 0.000000e+00 : bf16
    %194 = vector.broadcast %cst_192 : bf16 to vector<16x2xbf16>
    %c0_193 = arith.constant 0 : index
    %c0_194 = arith.constant 0 : index
    %c18 = arith.constant 18 : index
    %195 = vector.load %arg17[%c0_193, %c0_194, %c18] : memref<2x16x28xbf16, #tpu.memory_space<vmem>>, vector<1x16x2xbf16>
    %196 = vector.shape_cast %195 : vector<1x16x2xbf16> to vector<16x2xbf16>
    %197 = vector.shape_cast %194 : vector<16x2xbf16> to vector<1x16x2xbf16>
    tpu.vector_store %arg17[%c0_193, %c0_194, %c18], %197 {strides = array<i32>} : memref<2x16x28xbf16, #tpu.memory_space<vmem>>, vector<1x16x2xbf16>,
    %198 = vector.extract_strided_slice %189 {offsets = [0, 0], sizes = [16, 16], strides = [1, 1]} : vector<16x32xf32> to vector<16x16xf32>
    %199 = arith.truncf %198 : vector<16x16xf32> to vector<16x16xbf16>
    %c0_195 = arith.constant 0 : index
    %c0_196 = arith.constant 0 : index
    %c2_197 = arith.constant 2 : index
    %200 = vector.load %arg17[%c0_195, %c0_196, %c2_197] : memref<2x16x28xbf16, #tpu.memory_space<vmem>>, vector<1x16x16xbf16>
    %201 = vector.shape_cast %200 : vector<1x16x16xbf16> to vector<16x16xbf16>
    %202 = vector.shape_cast %199 : vector<16x16xbf16> to vector<1x16x16xbf16>
    tpu.vector_store %arg17[%c0_195, %c0_196, %c2_197], %202 {strides = array<i32>} : memref<2x16x28xbf16, #tpu.memory_space<vmem>>, vector<1x16x16xbf16>,
    %cst_198 = arith.constant 0.000000e+00 : bf16
    %203 = vector.broadcast %cst_198 : bf16 to vector<16x2xbf16>
    %c1_199 = arith.constant 1 : index
    %c0_200 = arith.constant 0 : index
    %c0_201 = arith.constant 0 : index
    %204 = vector.load %arg17[%c1_199, %c0_200, %c0_201] : memref<2x16x28xbf16, #tpu.memory_space<vmem>>, vector<1x16x2xbf16>
    %205 = vector.shape_cast %204 : vector<1x16x2xbf16> to vector<16x2xbf16>
    %206 = vector.shape_cast %203 : vector<16x2xbf16> to vector<1x16x2xbf16>
    tpu.vector_store %arg17[%c1_199, %c0_200, %c0_201], %206 {strides = array<i32>} : memref<2x16x28xbf16, #tpu.memory_space<vmem>>, vector<1x16x2xbf16>,
    %cst_202 = arith.constant 0.000000e+00 : bf16
    %207 = vector.broadcast %cst_202 : bf16 to vector<16x2xbf16>
    %c1_203 = arith.constant 1 : index
    %c0_204 = arith.constant 0 : index
    %c18_205 = arith.constant 18 : index
    %208 = vector.load %arg17[%c1_203, %c0_204, %c18_205] : memref<2x16x28xbf16, #tpu.memory_space<vmem>>, vector<1x16x2xbf16>
    %209 = vector.shape_cast %208 : vector<1x16x2xbf16> to vector<16x2xbf16>
    %210 = vector.shape_cast %207 : vector<16x2xbf16> to vector<1x16x2xbf16>
    tpu.vector_store %arg17[%c1_203, %c0_204, %c18_205], %210 {strides = array<i32>} : memref<2x16x28xbf16, #tpu.memory_space<vmem>>, vector<1x16x2xbf16>,
    %211 = vector.extract_strided_slice %189 {offsets = [0, 16], sizes = [16, 16], strides = [1, 1]} : vector<16x32xf32> to vector<16x16xf32>
    %212 = arith.truncf %211 : vector<16x16xf32> to vector<16x16xbf16>
    %c1_206 = arith.constant 1 : index
    %c0_207 = arith.constant 0 : index
    %c2_208 = arith.constant 2 : index
    %213 = vector.load %arg17[%c1_206, %c0_207, %c2_208] : memref<2x16x28xbf16, #tpu.memory_space<vmem>>, vector<1x16x16xbf16>
    %214 = vector.shape_cast %213 : vector<1x16x16xbf16> to vector<16x16xbf16>
    %215 = vector.shape_cast %212 : vector<16x16xbf16> to vector<1x16x16xbf16>
    tpu.vector_store %arg17[%c1_206, %c0_207, %c2_208], %215 {strides = array<i32>} : memref<2x16x28xbf16, #tpu.memory_space<vmem>>, vector<1x16x16xbf16>,
    %c0_209 = arith.constant 0 : index
    %c0_210 = arith.constant 0 : index
    %c0_211 = arith.constant 0 : index
    %216 = vector.load %arg17[%c0_209, %c0_210, %c0_211] : memref<2x16x28xbf16, #tpu.memory_space<vmem>>, vector<1x16x16xbf16>
    %217 = vector.shape_cast %216 : vector<1x16x16xbf16> to vector<16x16xbf16>
    %c0_212 = arith.constant 0 : index
    %c0_213 = arith.constant 0 : index
    %218 = vector.load %arg18[%c0_212, %c0_213] : memref<80x32xbf16, #tpu.memory_space<vmem>>, vector<16x16xbf16>
    tpu.vector_store %arg18[%c0_212, %c0_213], %217 {strides = array<i32>} : memref<80x32xbf16, #tpu.memory_space<vmem>>, vector<16x16xbf16>,
    %c0_214 = arith.constant 0 : index
    %c0_215 = arith.constant 0 : index
    %c1_216 = arith.constant 1 : index
    %219 = vector.load %arg17[%c0_214, %c0_215, %c1_216] : memref<2x16x28xbf16, #tpu.memory_space<vmem>>, vector<1x16x16xbf16>
    %220 = vector.shape_cast %219 : vector<1x16x16xbf16> to vector<16x16xbf16>
    %c16_217 = arith.constant 16 : index
    %c0_218 = arith.constant 0 : index
    %221 = vector.load %arg18[%c16_217, %c0_218] : memref<80x32xbf16, #tpu.memory_space<vmem>>, vector<16x16xbf16>
    tpu.vector_store %arg18[%c16_217, %c0_218], %220 {strides = array<i32>} : memref<80x32xbf16, #tpu.memory_space<vmem>>, vector<16x16xbf16>,
    %c0_219 = arith.constant 0 : index
    %c0_220 = arith.constant 0 : index
    %c2_221 = arith.constant 2 : index
    %222 = vector.load %arg17[%c0_219, %c0_220, %c2_221] : memref<2x16x28xbf16, #tpu.memory_space<vmem>>, vector<1x16x16xbf16>
    %223 = vector.shape_cast %222 : vector<1x16x16xbf16> to vector<16x16xbf16>
    %c32_222 = arith.constant 32 : index
    %c0_223 = arith.constant 0 : index
    %224 = vector.load %arg18[%c32_222, %c0_223] : memref<80x32xbf16, #tpu.memory_space<vmem>>, vector<16x16xbf16>
    tpu.vector_store %arg18[%c32_222, %c0_223], %223 {strides = array<i32>} : memref<80x32xbf16, #tpu.memory_space<vmem>>, vector<16x16xbf16>,
    %c0_224 = arith.constant 0 : index
    %c0_225 = arith.constant 0 : index
    %c3_226 = arith.constant 3 : index
    %225 = vector.load %arg17[%c0_224, %c0_225, %c3_226] : memref<2x16x28xbf16, #tpu.memory_space<vmem>>, vector<1x16x16xbf16>
    %226 = vector.shape_cast %225 : vector<1x16x16xbf16> to vector<16x16xbf16>
    %c48 = arith.constant 48 : index
    %c0_227 = arith.constant 0 : index
    %227 = vector.load %arg18[%c48, %c0_227] : memref<80x32xbf16, #tpu.memory_space<vmem>>, vector<16x16xbf16>
    tpu.vector_store %arg18[%c48, %c0_227], %226 {strides = array<i32>} : memref<80x32xbf16, #tpu.memory_space<vmem>>, vector<16x16xbf16>,
    %c0_228 = arith.constant 0 : index
    %c0_229 = arith.constant 0 : index
    %c4 = arith.constant 4 : index
    %228 = vector.load %arg17[%c0_228, %c0_229, %c4] : memref<2x16x28xbf16, #tpu.memory_space<vmem>>, vector<1x16x16xbf16>
    %229 = vector.shape_cast %228 : vector<1x16x16xbf16> to vector<16x16xbf16>
    %c64_230 = arith.constant 64 : index
    %c0_231 = arith.constant 0 : index
    %230 = vector.load %arg18[%c64_230, %c0_231] : memref<80x32xbf16, #tpu.memory_space<vmem>>, vector<16x16xbf16>
    tpu.vector_store %arg18[%c64_230, %c0_231], %229 {strides = array<i32>} : memref<80x32xbf16, #tpu.memory_space<vmem>>, vector<16x16xbf16>,
    %c1_232 = arith.constant 1 : index
    %c0_233 = arith.constant 0 : index
    %c0_234 = arith.constant 0 : index
    %231 = vector.load %arg17[%c1_232, %c0_233, %c0_234] : memref<2x16x28xbf16, #tpu.memory_space<vmem>>, vector<1x16x16xbf16>
    %232 = vector.shape_cast %231 : vector<1x16x16xbf16> to vector<16x16xbf16>
    %c0_235 = arith.constant 0 : index
    %c16_236 = arith.constant 16 : index
    %233 = vector.load %arg18[%c0_235, %c16_236] : memref<80x32xbf16, #tpu.memory_space<vmem>>, vector<16x16xbf16>
    tpu.vector_store %arg18[%c0_235, %c16_236], %232 {strides = array<i32>} : memref<80x32xbf16, #tpu.memory_space<vmem>>, vector<16x16xbf16>,
    %c1_237 = arith.constant 1 : index
    %c0_238 = arith.constant 0 : index
    %c1_239 = arith.constant 1 : index
    %234 = vector.load %arg17[%c1_237, %c0_238, %c1_239] : memref<2x16x28xbf16, #tpu.memory_space<vmem>>, vector<1x16x16xbf16>
    %235 = vector.shape_cast %234 : vector<1x16x16xbf16> to vector<16x16xbf16>
    %c16_240 = arith.constant 16 : index
    %c16_241 = arith.constant 16 : index
    %236 = vector.load %arg18[%c16_240, %c16_241] : memref<80x32xbf16, #tpu.memory_space<vmem>>, vector<16x16xbf16>
    tpu.vector_store %arg18[%c16_240, %c16_241], %235 {strides = array<i32>} : memref<80x32xbf16, #tpu.memory_space<vmem>>, vector<16x16xbf16>,
    %c1_242 = arith.constant 1 : index
    %c0_243 = arith.constant 0 : index
    %c2_244 = arith.constant 2 : index
    %237 = vector.load %arg17[%c1_242, %c0_243, %c2_244] : memref<2x16x28xbf16, #tpu.memory_space<vmem>>, vector<1x16x16xbf16>
    %238 = vector.shape_cast %237 : vector<1x16x16xbf16> to vector<16x16xbf16>
    %c32_245 = arith.constant 32 : index
    %c16_246 = arith.constant 16 : index
    %239 = vector.load %arg18[%c32_245, %c16_246] : memref<80x32xbf16, #tpu.memory_space<vmem>>, vector<16x16xbf16>
    tpu.vector_store %arg18[%c32_245, %c16_246], %238 {strides = array<i32>} : memref<80x32xbf16, #tpu.memory_space<vmem>>, vector<16x16xbf16>,
    %c1_247 = arith.constant 1 : index
    %c0_248 = arith.constant 0 : index
    %c3_249 = arith.constant 3 : index
    %240 = vector.load %arg17[%c1_247, %c0_248, %c3_249] : memref<2x16x28xbf16, #tpu.memory_space<vmem>>, vector<1x16x16xbf16>
    %241 = vector.shape_cast %240 : vector<1x16x16xbf16> to vector<16x16xbf16>
    %c48_250 = arith.constant 48 : index
    %c16_251 = arith.constant 16 : index
    %242 = vector.load %arg18[%c48_250, %c16_251] : memref<80x32xbf16, #tpu.memory_space<vmem>>, vector<16x16xbf16>
    tpu.vector_store %arg18[%c48_250, %c16_251], %241 {strides = array<i32>} : memref<80x32xbf16, #tpu.memory_space<vmem>>, vector<16x16xbf16>,
    %c1_252 = arith.constant 1 : index
    %c0_253 = arith.constant 0 : index
    %c4_254 = arith.constant 4 : index
    %243 = vector.load %arg17[%c1_252, %c0_253, %c4_254] : memref<2x16x28xbf16, #tpu.memory_space<vmem>>, vector<1x16x16xbf16>
    %244 = vector.shape_cast %243 : vector<1x16x16xbf16> to vector<16x16xbf16>
    %c64_255 = arith.constant 64 : index
    %c16_256 = arith.constant 16 : index
    %245 = vector.load %arg18[%c64_255, %c16_256] : memref<80x32xbf16, #tpu.memory_space<vmem>>, vector<16x16xbf16>
    tpu.vector_store %arg18[%c64_255, %c16_256], %244 {strides = array<i32>} : memref<80x32xbf16, #tpu.memory_space<vmem>>, vector<16x16xbf16>,
    %c0_257 = arith.constant 0 : index
    %c0_258 = arith.constant 0 : index
    %246 = vector.load %arg10[%c0_257, %c0_258] : memref<16x80xbf16, #tpu.memory_space<vmem>>, vector<16x80xbf16>
    %c0_259 = arith.constant 0 : index
    %c0_260 = arith.constant 0 : index
    %247 = vector.load %arg18[%c0_259, %c0_260] : memref<80x32xbf16, #tpu.memory_space<vmem>>, vector<80x32xbf16>
    %cst_261 = arith.constant dense<0.000000e+00> : vector<16x32xf32>
    %248 = tpu.matmul %246, %247, %cst_261 {dimension_numbers = #tpu.dot_dimension_numbers<[1], [0], [0], [1], [0, 0, 1, 1], [], []>} : vector<16x80xbf16>, vector<80x32xbf16>, vector<16x32xf32> -> vector<16x32xf32>
    %c0_262 = arith.constant 0 : index
    %c0_263 = arith.constant 0 : index
    %249 = vector.load %arg11[%c0_262, %c0_263] : memref<16x1xf32, #tpu.memory_space<vmem>>, vector<16x1xf32>
    %250 = vector.broadcast %249 : vector<16x1xf32> to vector<16x32xf32>
    %251 = arith.addf %248, %250 : vector<16x32xf32>
    %252 = arith.addf %251, %70 : vector<16x32xf32>
    %cst_264 = arith.constant 0.000000e+00 : f32
    %253 = vector.broadcast %cst_264 : f32 to vector<16x32xf32>
    %254 = arith.cmpf oge, %252, %253 : vector<16x32xf32>
    %cst_265 = arith.constant 1.000000e-01 : f32
    %255 = vector.broadcast %cst_265 : f32 to vector<16x32xf32>
    %256 = arith.mulf %255, %252 : vector<16x32xf32>
    %257 = arith.select %254, %252, %256 : vector<16x32xi1>, vector<16x32xf32>
    %cst_266 = arith.constant 0.000000e+00 : bf16
    %258 = vector.broadcast %cst_266 : bf16 to vector<16x6xbf16>
    %c0_267 = arith.constant 0 : index
    %c0_268 = arith.constant 0 : index
    %c0_269 = arith.constant 0 : index
    %259 = vector.load %arg17[%c0_267, %c0_268, %c0_269] : memref<2x16x28xbf16, #tpu.memory_space<vmem>>, vector<1x16x6xbf16>
    %260 = vector.shape_cast %259 : vector<1x16x6xbf16> to vector<16x6xbf16>
    %261 = vector.shape_cast %258 : vector<16x6xbf16> to vector<1x16x6xbf16>
    tpu.vector_store %arg17[%c0_267, %c0_268, %c0_269], %261 {strides = array<i32>} : memref<2x16x28xbf16, #tpu.memory_space<vmem>>, vector<1x16x6xbf16>,
    %cst_270 = arith.constant 0.000000e+00 : bf16
    %262 = vector.broadcast %cst_270 : bf16 to vector<16x6xbf16>
    %c0_271 = arith.constant 0 : index
    %c0_272 = arith.constant 0 : index
    %c22 = arith.constant 22 : index
    %263 = vector.load %arg17[%c0_271, %c0_272, %c22] : memref<2x16x28xbf16, #tpu.memory_space<vmem>>, vector<1x16x6xbf16>
    %264 = vector.shape_cast %263 : vector<1x16x6xbf16> to vector<16x6xbf16>
    %265 = vector.shape_cast %262 : vector<16x6xbf16> to vector<1x16x6xbf16>
    tpu.vector_store %arg17[%c0_271, %c0_272, %c22], %265 {strides = array<i32>} : memref<2x16x28xbf16, #tpu.memory_space<vmem>>, vector<1x16x6xbf16>,
    %266 = vector.extract_strided_slice %257 {offsets = [0, 0], sizes = [16, 16], strides = [1, 1]} : vector<16x32xf32> to vector<16x16xf32>
    %267 = arith.truncf %266 : vector<16x16xf32> to vector<16x16xbf16>
    %c0_273 = arith.constant 0 : index
    %c0_274 = arith.constant 0 : index
    %c6_275 = arith.constant 6 : index
    %268 = vector.load %arg17[%c0_273, %c0_274, %c6_275] : memref<2x16x28xbf16, #tpu.memory_space<vmem>>, vector<1x16x16xbf16>
    %269 = vector.shape_cast %268 : vector<1x16x16xbf16> to vector<16x16xbf16>
    %270 = vector.shape_cast %267 : vector<16x16xbf16> to vector<1x16x16xbf16>
    tpu.vector_store %arg17[%c0_273, %c0_274, %c6_275], %270 {strides = array<i32>} : memref<2x16x28xbf16, #tpu.memory_space<vmem>>, vector<1x16x16xbf16>,
    %cst_276 = arith.constant 0.000000e+00 : bf16
    %271 = vector.broadcast %cst_276 : bf16 to vector<16x6xbf16>
    %c1_277 = arith.constant 1 : index
    %c0_278 = arith.constant 0 : index
    %c0_279 = arith.constant 0 : index
    %272 = vector.load %arg17[%c1_277, %c0_278, %c0_279] : memref<2x16x28xbf16, #tpu.memory_space<vmem>>, vector<1x16x6xbf16>
    %273 = vector.shape_cast %272 : vector<1x16x6xbf16> to vector<16x6xbf16>
    %274 = vector.shape_cast %271 : vector<16x6xbf16> to vector<1x16x6xbf16>
    tpu.vector_store %arg17[%c1_277, %c0_278, %c0_279], %274 {strides = array<i32>} : memref<2x16x28xbf16, #tpu.memory_space<vmem>>, vector<1x16x6xbf16>,
    %cst_280 = arith.constant 0.000000e+00 : bf16
    %275 = vector.broadcast %cst_280 : bf16 to vector<16x6xbf16>
    %c1_281 = arith.constant 1 : index
    %c0_282 = arith.constant 0 : index
    %c22_283 = arith.constant 22 : index
    %276 = vector.load %arg17[%c1_281, %c0_282, %c22_283] : memref<2x16x28xbf16, #tpu.memory_space<vmem>>, vector<1x16x6xbf16>
    %277 = vector.shape_cast %276 : vector<1x16x6xbf16> to vector<16x6xbf16>
    %278 = vector.shape_cast %275 : vector<16x6xbf16> to vector<1x16x6xbf16>
    tpu.vector_store %arg17[%c1_281, %c0_282, %c22_283], %278 {strides = array<i32>} : memref<2x16x28xbf16, #tpu.memory_space<vmem>>, vector<1x16x6xbf16>,
    %279 = vector.extract_strided_slice %257 {offsets = [0, 16], sizes = [16, 16], strides = [1, 1]} : vector<16x32xf32> to vector<16x16xf32>
    %280 = arith.truncf %279 : vector<16x16xf32> to vector<16x16xbf16>
    %c1_284 = arith.constant 1 : index
    %c0_285 = arith.constant 0 : index
    %c6_286 = arith.constant 6 : index
    %281 = vector.load %arg17[%c1_284, %c0_285, %c6_286] : memref<2x16x28xbf16, #tpu.memory_space<vmem>>, vector<1x16x16xbf16>
    %282 = vector.shape_cast %281 : vector<1x16x16xbf16> to vector<16x16xbf16>
    %283 = vector.shape_cast %280 : vector<16x16xbf16> to vector<1x16x16xbf16>
    tpu.vector_store %arg17[%c1_284, %c0_285, %c6_286], %283 {strides = array<i32>} : memref<2x16x28xbf16, #tpu.memory_space<vmem>>, vector<1x16x16xbf16>,
    %c0_287 = arith.constant 0 : index
    %c0_288 = arith.constant 0 : index
    %c0_289 = arith.constant 0 : index
    %284 = vector.load %arg17[%c0_287, %c0_288, %c0_289] : memref<2x16x28xbf16, #tpu.memory_space<vmem>>, vector<1x16x16xbf16>
    %285 = vector.shape_cast %284 : vector<1x16x16xbf16> to vector<16x16xbf16>
    %c0_290 = arith.constant 0 : index
    %c0_291 = arith.constant 0 : index
    %286 = vector.load %arg18[%c0_290, %c0_291] : memref<80x32xbf16, #tpu.memory_space<vmem>>, vector<16x16xbf16>
    tpu.vector_store %arg18[%c0_290, %c0_291], %285 {strides = array<i32>} : memref<80x32xbf16, #tpu.memory_space<vmem>>, vector<16x16xbf16>,
    %c0_292 = arith.constant 0 : index
    %c0_293 = arith.constant 0 : index
    %c3_294 = arith.constant 3 : index
    %287 = vector.load %arg17[%c0_292, %c0_293, %c3_294] : memref<2x16x28xbf16, #tpu.memory_space<vmem>>, vector<1x16x16xbf16>
    %288 = vector.shape_cast %287 : vector<1x16x16xbf16> to vector<16x16xbf16>
    %c16_295 = arith.constant 16 : index
    %c0_296 = arith.constant 0 : index
    %289 = vector.load %arg18[%c16_295, %c0_296] : memref<80x32xbf16, #tpu.memory_space<vmem>>, vector<16x16xbf16>
    tpu.vector_store %arg18[%c16_295, %c0_296], %288 {strides = array<i32>} : memref<80x32xbf16, #tpu.memory_space<vmem>>, vector<16x16xbf16>,
    %c0_297 = arith.constant 0 : index
    %c0_298 = arith.constant 0 : index
    %c6_299 = arith.constant 6 : index
    %290 = vector.load %arg17[%c0_297, %c0_298, %c6_299] : memref<2x16x28xbf16, #tpu.memory_space<vmem>>, vector<1x16x16xbf16>
    %291 = vector.shape_cast %290 : vector<1x16x16xbf16> to vector<16x16xbf16>
    %c32_300 = arith.constant 32 : index
    %c0_301 = arith.constant 0 : index
    %292 = vector.load %arg18[%c32_300, %c0_301] : memref<80x32xbf16, #tpu.memory_space<vmem>>, vector<16x16xbf16>
    tpu.vector_store %arg18[%c32_300, %c0_301], %291 {strides = array<i32>} : memref<80x32xbf16, #tpu.memory_space<vmem>>, vector<16x16xbf16>,
    %c0_302 = arith.constant 0 : index
    %c0_303 = arith.constant 0 : index
    %c9_304 = arith.constant 9 : index
    %293 = vector.load %arg17[%c0_302, %c0_303, %c9_304] : memref<2x16x28xbf16, #tpu.memory_space<vmem>>, vector<1x16x16xbf16>
    %294 = vector.shape_cast %293 : vector<1x16x16xbf16> to vector<16x16xbf16>
    %c48_305 = arith.constant 48 : index
    %c0_306 = arith.constant 0 : index
    %295 = vector.load %arg18[%c48_305, %c0_306] : memref<80x32xbf16, #tpu.memory_space<vmem>>, vector<16x16xbf16>
    tpu.vector_store %arg18[%c48_305, %c0_306], %294 {strides = array<i32>} : memref<80x32xbf16, #tpu.memory_space<vmem>>, vector<16x16xbf16>,
    %c0_307 = arith.constant 0 : index
    %c0_308 = arith.constant 0 : index
    %c12 = arith.constant 12 : index
    %296 = vector.load %arg17[%c0_307, %c0_308, %c12] : memref<2x16x28xbf16, #tpu.memory_space<vmem>>, vector<1x16x16xbf16>
    %297 = vector.shape_cast %296 : vector<1x16x16xbf16> to vector<16x16xbf16>
    %c64_309 = arith.constant 64 : index
    %c0_310 = arith.constant 0 : index
    %298 = vector.load %arg18[%c64_309, %c0_310] : memref<80x32xbf16, #tpu.memory_space<vmem>>, vector<16x16xbf16>
    tpu.vector_store %arg18[%c64_309, %c0_310], %297 {strides = array<i32>} : memref<80x32xbf16, #tpu.memory_space<vmem>>, vector<16x16xbf16>,
    %c1_311 = arith.constant 1 : index
    %c0_312 = arith.constant 0 : index
    %c0_313 = arith.constant 0 : index
    %299 = vector.load %arg17[%c1_311, %c0_312, %c0_313] : memref<2x16x28xbf16, #tpu.memory_space<vmem>>, vector<1x16x16xbf16>
    %300 = vector.shape_cast %299 : vector<1x16x16xbf16> to vector<16x16xbf16>
    %c0_314 = arith.constant 0 : index
    %c16_315 = arith.constant 16 : index
    %301 = vector.load %arg18[%c0_314, %c16_315] : memref<80x32xbf16, #tpu.memory_space<vmem>>, vector<16x16xbf16>
    tpu.vector_store %arg18[%c0_314, %c16_315], %300 {strides = array<i32>} : memref<80x32xbf16, #tpu.memory_space<vmem>>, vector<16x16xbf16>,
    %c1_316 = arith.constant 1 : index
    %c0_317 = arith.constant 0 : index
    %c3_318 = arith.constant 3 : index
    %302 = vector.load %arg17[%c1_316, %c0_317, %c3_318] : memref<2x16x28xbf16, #tpu.memory_space<vmem>>, vector<1x16x16xbf16>
    %303 = vector.shape_cast %302 : vector<1x16x16xbf16> to vector<16x16xbf16>
    %c16_319 = arith.constant 16 : index
    %c16_320 = arith.constant 16 : index
    %304 = vector.load %arg18[%c16_319, %c16_320] : memref<80x32xbf16, #tpu.memory_space<vmem>>, vector<16x16xbf16>
    tpu.vector_store %arg18[%c16_319, %c16_320], %303 {strides = array<i32>} : memref<80x32xbf16, #tpu.memory_space<vmem>>, vector<16x16xbf16>,
    %c1_321 = arith.constant 1 : index
    %c0_322 = arith.constant 0 : index
    %c6_323 = arith.constant 6 : index
    %305 = vector.load %arg17[%c1_321, %c0_322, %c6_323] : memref<2x16x28xbf16, #tpu.memory_space<vmem>>, vector<1x16x16xbf16>
    %306 = vector.shape_cast %305 : vector<1x16x16xbf16> to vector<16x16xbf16>
    %c32_324 = arith.constant 32 : index
    %c16_325 = arith.constant 16 : index
    %307 = vector.load %arg18[%c32_324, %c16_325] : memref<80x32xbf16, #tpu.memory_space<vmem>>, vector<16x16xbf16>
    tpu.vector_store %arg18[%c32_324, %c16_325], %306 {strides = array<i32>} : memref<80x32xbf16, #tpu.memory_space<vmem>>, vector<16x16xbf16>,
    %c1_326 = arith.constant 1 : index
    %c0_327 = arith.constant 0 : index
    %c9_328 = arith.constant 9 : index
    %308 = vector.load %arg17[%c1_326, %c0_327, %c9_328] : memref<2x16x28xbf16, #tpu.memory_space<vmem>>, vector<1x16x16xbf16>
    %309 = vector.shape_cast %308 : vector<1x16x16xbf16> to vector<16x16xbf16>
    %c48_329 = arith.constant 48 : index
    %c16_330 = arith.constant 16 : index
    %310 = vector.load %arg18[%c48_329, %c16_330] : memref<80x32xbf16, #tpu.memory_space<vmem>>, vector<16x16xbf16>
    tpu.vector_store %arg18[%c48_329, %c16_330], %309 {strides = array<i32>} : memref<80x32xbf16, #tpu.memory_space<vmem>>, vector<16x16xbf16>,
    %c1_331 = arith.constant 1 : index
    %c0_332 = arith.constant 0 : index
    %c12_333 = arith.constant 12 : index
    %311 = vector.load %arg17[%c1_331, %c0_332, %c12_333] : memref<2x16x28xbf16, #tpu.memory_space<vmem>>, vector<1x16x16xbf16>
    %312 = vector.shape_cast %311 : vector<1x16x16xbf16> to vector<16x16xbf16>
    %c64_334 = arith.constant 64 : index
    %c16_335 = arith.constant 16 : index
    %313 = vector.load %arg18[%c64_334, %c16_335] : memref<80x32xbf16, #tpu.memory_space<vmem>>, vector<16x16xbf16>
    tpu.vector_store %arg18[%c64_334, %c16_335], %312 {strides = array<i32>} : memref<80x32xbf16, #tpu.memory_space<vmem>>, vector<16x16xbf16>,
    %c0_336 = arith.constant 0 : index
    %c0_337 = arith.constant 0 : index
    %314 = vector.load %arg12[%c0_336, %c0_337] : memref<16x80xbf16, #tpu.memory_space<vmem>>, vector<16x80xbf16>
    %c0_338 = arith.constant 0 : index
    %c0_339 = arith.constant 0 : index
    %315 = vector.load %arg18[%c0_338, %c0_339] : memref<80x32xbf16, #tpu.memory_space<vmem>>, vector<80x32xbf16>
    %cst_340 = arith.constant dense<0.000000e+00> : vector<16x32xf32>
    %316 = tpu.matmul %314, %315, %cst_340 {dimension_numbers = #tpu.dot_dimension_numbers<[1], [0], [0], [1], [0, 0, 1, 1], [], []>} : vector<16x80xbf16>, vector<80x32xbf16>, vector<16x32xf32> -> vector<16x32xf32>
    %c0_341 = arith.constant 0 : index
    %c0_342 = arith.constant 0 : index
    %317 = vector.load %arg13[%c0_341, %c0_342] : memref<16x1xf32, #tpu.memory_space<vmem>>, vector<16x1xf32>
    %318 = vector.broadcast %317 : vector<16x1xf32> to vector<16x32xf32>
    %319 = arith.addf %316, %318 : vector<16x32xf32>
    %320 = arith.addf %319, %252 : vector<16x32xf32>
    %321 = arith.addf %184, %320 : vector<16x32xf32>
    %cst_343 = arith.constant 5.000000e-01 : f32
    %322 = vector.broadcast %cst_343 : f32 to vector<16x32xf32>
    %323 = arith.mulf %321, %322 : vector<16x32xf32>
    %324 = vector.extract_strided_slice %323 {offsets = [0, 0], sizes = [16, 16], strides = [1, 1]} : vector<16x32xf32> to vector<16x16xf32>
    %c0_344 = arith.constant 0 : index
    %c0_345 = arith.constant 0 : index
    %c0_346 = arith.constant 0 : index
    %325 = vector.load %arg14[%c0_344, %c0_345, %c0_346] : memref<2x16x16xf32, #tpu.memory_space<vmem>>, vector<1x16x16xf32>
    %326 = vector.shape_cast %325 : vector<1x16x16xf32> to vector<16x16xf32>
    %327 = vector.shape_cast %324 : vector<16x16xf32> to vector<1x16x16xf32>
    tpu.vector_store %arg14[%c0_344, %c0_345, %c0_346], %327 {strides = array<i32>} : memref<2x16x16xf32, #tpu.memory_space<vmem>>, vector<1x16x16xf32>,
    %328 = vector.extract_strided_slice %323 {offsets = [0, 16], sizes = [16, 16], strides = [1, 1]} : vector<16x32xf32> to vector<16x16xf32>
    %c1_347 = arith.constant 1 : index
    %c0_348 = arith.constant 0 : index
    %c0_349 = arith.constant 0 : index
    %329 = vector.load %arg14[%c1_347, %c0_348, %c0_349] : memref<2x16x16xf32, #tpu.memory_space<vmem>>, vector<1x16x16xf32>
    %330 = vector.shape_cast %329 : vector<1x16x16xf32> to vector<16x16xf32>
    %331 = vector.shape_cast %328 : vector<16x16xf32> to vector<1x16x16xf32>
    tpu.vector_store %arg14[%c1_347, %c0_348, %c0_349], %331 {strides = array<i32>} : memref<2x16x16xf32, #tpu.memory_space<vmem>>, vector<1x16x16xf32>,
    return
  }
  func.func @transform_0(%arg0: i32) -> (i32, i32, i32) {
    %c0_i32 = arith.constant 0 : i32
    %c0_i32_0 = arith.constant 0 : i32
    %c0_i32_1 = arith.constant 0 : i32
    %c0_i32_2 = arith.constant 0 : i32
    return %c0_i32, %c0_i32_0, %c0_i32_1 : i32, i32, i32
  }
  func.func @transform_1(%arg0: i32) -> (i32, i32) {
    %c0_i32 = arith.constant 0 : i32
    %c0_i32_0 = arith.constant 0 : i32
    %c0_i32_1 = arith.constant 0 : i32
    return %c0_i32, %c0_i32_0 : i32, i32
  }
  func.func @transform_2(%arg0: i32) -> (i32, i32) {
    %c0_i32 = arith.constant 0 : i32
    %c0_i32_0 = arith.constant 0 : i32
    %c0_i32_1 = arith.constant 0 : i32
    return %c0_i32, %c0_i32_0 : i32, i32
  }
  func.func @transform_3(%arg0: i32) -> (i32, i32) {
    %c0_i32 = arith.constant 0 : i32
    %c0_i32_0 = arith.constant 0 : i32
    %c0_i32_1 = arith.constant 0 : i32
    return %c0_i32, %c0_i32_0 : i32, i32
  }
  func.func @transform_4(%arg0: i32) -> (i32, i32) {
    %c0_i32 = arith.constant 0 : i32
    %c0_i32_0 = arith.constant 0 : i32
    %c0_i32_1 = arith.constant 0 : i32
    return %c0_i32, %c0_i32_0 : i32, i32
  }
  func.func @transform_5(%arg0: i32) -> (i32, i32) {
    %c0_i32 = arith.constant 0 : i32
    %c0_i32_0 = arith.constant 0 : i32
    %c0_i32_1 = arith.constant 0 : i32
    return %c0_i32, %c0_i32_0 : i32, i32
  }
  func.func @transform_6(%arg0: i32) -> (i32, i32) {
    %c0_i32 = arith.constant 0 : i32
    %c0_i32_0 = arith.constant 0 : i32
    %c0_i32_1 = arith.constant 0 : i32
    return %c0_i32, %c0_i32_0 : i32, i32
  }
  func.func @transform_7(%arg0: i32) -> (i32, i32) {
    %c0_i32 = arith.constant 0 : i32
    %c0_i32_0 = arith.constant 0 : i32
    %c0_i32_1 = arith.constant 0 : i32
    return %c0_i32, %c0_i32_0 : i32, i32
  }
  func.func @transform_8(%arg0: i32) -> (i32, i32) {
    %c0_i32 = arith.constant 0 : i32
    %c0_i32_0 = arith.constant 0 : i32
    %c0_i32_1 = arith.constant 0 : i32
    return %c0_i32, %c0_i32_0 : i32, i32
  }
  func.func @transform_9(%arg0: i32) -> (i32, i32) {
    %c0_i32 = arith.constant 0 : i32
    %c0_i32_0 = arith.constant 0 : i32
    %c0_i32_1 = arith.constant 0 : i32
    return %c0_i32, %c0_i32_0 : i32, i32
  }
  func.func @transform_10(%arg0: i32) -> (i32, i32) {
    %c0_i32 = arith.constant 0 : i32
    %c0_i32_0 = arith.constant 0 : i32
    %c0_i32_1 = arith.constant 0 : i32
    return %c0_i32, %c0_i32_0 : i32, i32
  }
  func.func @transform_11(%arg0: i32) -> (i32, i32) {
    %c0_i32 = arith.constant 0 : i32
    %c0_i32_0 = arith.constant 0 : i32
    %c0_i32_1 = arith.constant 0 : i32
    return %c0_i32, %c0_i32_0 : i32, i32
  }
  func.func @transform_12(%arg0: i32) -> (i32, i32) {
    %c0_i32 = arith.constant 0 : i32
    %c0_i32_0 = arith.constant 0 : i32
    %c0_i32_1 = arith.constant 0 : i32
    return %c0_i32, %c0_i32_0 : i32, i32
  }
  func.func @transform_13(%arg0: i32) -> (i32, i32, i32) {
    %c0_i32 = arith.constant 0 : i32
    %c0_i32_0 = arith.constant 0 : i32
    %c0_i32_1 = arith.constant 0 : i32
    %c0_i32_2 = arith.constant 0 : i32
    return %c0_i32, %c0_i32_0, %c0_i32_1 : i32, i32, i32
  }
}

module attributes {stable_mosaic.version = 11 : i64} {
  func.func @kernel(%arg0: i32, %arg1: memref<2x16x16xf32, #tpu.memory_space<vmem>>, %arg2: memref<16x48xbf16, #tpu.memory_space<vmem>>, %arg3: memref<8x1xf32, #tpu.memory_space<vmem>>, %arg4: memref<32x64xf32, #tpu.memory_space<vmem>>, %arg5: memref<32x64xf32, #tpu.memory_space<vmem>>, %arg6: memref<8x24xbf16, #tpu.memory_space<vmem>>, %arg7: memref<8x1xf32, #tpu.memory_space<vmem>>, %arg8: memref<8x24xbf16, #tpu.memory_space<vmem>>, %arg9: memref<8x1xf32, #tpu.memory_space<vmem>>, %arg10: memref<8x40xbf16, #tpu.memory_space<vmem>>, %arg11: memref<8x1xf32, #tpu.memory_space<vmem>>, %arg12: memref<8x40xbf16, #tpu.memory_space<vmem>>, %arg13: memref<8x1xf32, #tpu.memory_space<vmem>>, %arg14: memref<2x8x32xf32, #tpu.memory_space<vmem>>, %arg15: memref<2x16x18xbf16, #tpu.memory_space<vmem>>, %arg16: memref<48x32xbf16, #tpu.memory_space<vmem>>, %arg17: memref<2x8x44xbf16, #tpu.memory_space<vmem>>, %arg18: memref<40x64xbf16, #tpu.memory_space<vmem>>) attributes {dimension_semantics = [#tpu.dimension_semantics<arbitrary>], iteration_bounds = array<i64: 1>, scalar_prefetch = 0 : i64, scratch_operands = 4 : i64, tpu.core_type = #tpu.core_type<tc>, window_params = [{pipeline_mode = #tpu.pipeline_mode<synchronous>, transform_indices = @transform_0, window_bounds = array<i64: 2, 16, 16>}, {pipeline_mode = #tpu.pipeline_mode<synchronous>, transform_indices = @transform_1, window_bounds = array<i64: 16, 48>}, {pipeline_mode = #tpu.pipeline_mode<synchronous>, transform_indices = @transform_2, window_bounds = array<i64: 8, 1>}, {pipeline_mode = #tpu.pipeline_mode<synchronous>, transform_indices = @transform_3, window_bounds = array<i64: 32, 64>}, {pipeline_mode = #tpu.pipeline_mode<synchronous>, transform_indices = @transform_4, window_bounds = array<i64: 32, 64>}, {pipeline_mode = #tpu.pipeline_mode<synchronous>, transform_indices = @transform_5, window_bounds = array<i64: 8, 24>}, {pipeline_mode = #tpu.pipeline_mode<synchronous>, transform_indices = @transform_6, window_bounds = array<i64: 8, 1>}, {pipeline_mode = #tpu.pipeline_mode<synchronous>, transform_indices = @transform_7, window_bounds = array<i64: 8, 24>}, {pipeline_mode = #tpu.pipeline_mode<synchronous>, transform_indices = @transform_8, window_bounds = array<i64: 8, 1>}, {pipeline_mode = #tpu.pipeline_mode<synchronous>, transform_indices = @transform_9, window_bounds = array<i64: 8, 40>}, {pipeline_mode = #tpu.pipeline_mode<synchronous>, transform_indices = @transform_10, window_bounds = array<i64: 8, 1>}, {pipeline_mode = #tpu.pipeline_mode<synchronous>, transform_indices = @transform_11, window_bounds = array<i64: 8, 40>}, {pipeline_mode = #tpu.pipeline_mode<synchronous>, transform_indices = @transform_12, window_bounds = array<i64: 8, 1>}, {pipeline_mode = #tpu.pipeline_mode<synchronous>, transform_indices = @transform_13, window_bounds = array<i64: 2, 8, 32>}]} {
    %c0 = arith.constant 0 : index
    %c0_0 = arith.constant 0 : index
    %c0_1 = arith.constant 0 : index
    %0 = vector.load %arg1[%c0, %c0_0, %c0_1] : memref<2x16x16xf32, #tpu.memory_space<vmem>>, vector<1x16x16xf32>
    %1 = vector.shape_cast %0 : vector<1x16x16xf32> to vector<16x16xf32>
    %cst = arith.constant 0.000000e+00 : f32
    %2 = vector.broadcast %cst : f32 to vector<16x16xf32>
    %3 = arith.cmpf oge, %1, %2 : vector<16x16xf32>
    %cst_2 = arith.constant 1.000000e-01 : f32
    %4 = vector.broadcast %cst_2 : f32 to vector<16x16xf32>
    %5 = arith.mulf %4, %1 : vector<16x16xf32>
    %6 = arith.select %3, %1, %5 : vector<16x16xi1>, vector<16x16xf32>
    %cst_3 = arith.constant 0.000000e+00 : bf16
    %7 = vector.broadcast %cst_3 : bf16 to vector<16x1xbf16>
    %c0_4 = arith.constant 0 : index
    %c0_5 = arith.constant 0 : index
    %c0_6 = arith.constant 0 : index
    %8 = vector.load %arg15[%c0_4, %c0_5, %c0_6] : memref<2x16x18xbf16, #tpu.memory_space<vmem>>, vector<1x16x1xbf16>
    %9 = vector.shape_cast %8 : vector<1x16x1xbf16> to vector<16x1xbf16>
    %10 = vector.shape_cast %7 : vector<16x1xbf16> to vector<1x16x1xbf16>
    tpu.vector_store %arg15[%c0_4, %c0_5, %c0_6], %10 {strides = array<i32>} : memref<2x16x18xbf16, #tpu.memory_space<vmem>>, vector<1x16x1xbf16>,
    %cst_7 = arith.constant 0.000000e+00 : bf16
    %11 = vector.broadcast %cst_7 : bf16 to vector<16x1xbf16>
    %c0_8 = arith.constant 0 : index
    %c0_9 = arith.constant 0 : index
    %c17 = arith.constant 17 : index
    %12 = vector.load %arg15[%c0_8, %c0_9, %c17] : memref<2x16x18xbf16, #tpu.memory_space<vmem>>, vector<1x16x1xbf16>
    %13 = vector.shape_cast %12 : vector<1x16x1xbf16> to vector<16x1xbf16>
    %14 = vector.shape_cast %11 : vector<16x1xbf16> to vector<1x16x1xbf16>
    tpu.vector_store %arg15[%c0_8, %c0_9, %c17], %14 {strides = array<i32>} : memref<2x16x18xbf16, #tpu.memory_space<vmem>>, vector<1x16x1xbf16>,
    %15 = arith.truncf %6 : vector<16x16xf32> to vector<16x16xbf16>
    %c0_10 = arith.constant 0 : index
    %c0_11 = arith.constant 0 : index
    %c1 = arith.constant 1 : index
    %16 = vector.load %arg15[%c0_10, %c0_11, %c1] : memref<2x16x18xbf16, #tpu.memory_space<vmem>>, vector<1x16x16xbf16>
    %17 = vector.shape_cast %16 : vector<1x16x16xbf16> to vector<16x16xbf16>
    %18 = vector.shape_cast %15 : vector<16x16xbf16> to vector<1x16x16xbf16>
    tpu.vector_store %arg15[%c0_10, %c0_11, %c1], %18 {strides = array<i32>} : memref<2x16x18xbf16, #tpu.memory_space<vmem>>, vector<1x16x16xbf16>,
    %c1_12 = arith.constant 1 : index
    %c0_13 = arith.constant 0 : index
    %c0_14 = arith.constant 0 : index
    %19 = vector.load %arg1[%c1_12, %c0_13, %c0_14] : memref<2x16x16xf32, #tpu.memory_space<vmem>>, vector<1x16x16xf32>
    %20 = vector.shape_cast %19 : vector<1x16x16xf32> to vector<16x16xf32>
    %cst_15 = arith.constant 0.000000e+00 : f32
    %21 = vector.broadcast %cst_15 : f32 to vector<16x16xf32>
    %22 = arith.cmpf oge, %20, %21 : vector<16x16xf32>
    %cst_16 = arith.constant 1.000000e-01 : f32
    %23 = vector.broadcast %cst_16 : f32 to vector<16x16xf32>
    %24 = arith.mulf %23, %20 : vector<16x16xf32>
    %25 = arith.select %22, %20, %24 : vector<16x16xi1>, vector<16x16xf32>
    %cst_17 = arith.constant 0.000000e+00 : bf16
    %26 = vector.broadcast %cst_17 : bf16 to vector<16x1xbf16>
    %c1_18 = arith.constant 1 : index
    %c0_19 = arith.constant 0 : index
    %c0_20 = arith.constant 0 : index
    %27 = vector.load %arg15[%c1_18, %c0_19, %c0_20] : memref<2x16x18xbf16, #tpu.memory_space<vmem>>, vector<1x16x1xbf16>
    %28 = vector.shape_cast %27 : vector<1x16x1xbf16> to vector<16x1xbf16>
    %29 = vector.shape_cast %26 : vector<16x1xbf16> to vector<1x16x1xbf16>
    tpu.vector_store %arg15[%c1_18, %c0_19, %c0_20], %29 {strides = array<i32>} : memref<2x16x18xbf16, #tpu.memory_space<vmem>>, vector<1x16x1xbf16>,
    %cst_21 = arith.constant 0.000000e+00 : bf16
    %30 = vector.broadcast %cst_21 : bf16 to vector<16x1xbf16>
    %c1_22 = arith.constant 1 : index
    %c0_23 = arith.constant 0 : index
    %c17_24 = arith.constant 17 : index
    %31 = vector.load %arg15[%c1_22, %c0_23, %c17_24] : memref<2x16x18xbf16, #tpu.memory_space<vmem>>, vector<1x16x1xbf16>
    %32 = vector.shape_cast %31 : vector<1x16x1xbf16> to vector<16x1xbf16>
    %33 = vector.shape_cast %30 : vector<16x1xbf16> to vector<1x16x1xbf16>
    tpu.vector_store %arg15[%c1_22, %c0_23, %c17_24], %33 {strides = array<i32>} : memref<2x16x18xbf16, #tpu.memory_space<vmem>>, vector<1x16x1xbf16>,
    %34 = arith.truncf %25 : vector<16x16xf32> to vector<16x16xbf16>
    %c1_25 = arith.constant 1 : index
    %c0_26 = arith.constant 0 : index
    %c1_27 = arith.constant 1 : index
    %35 = vector.load %arg15[%c1_25, %c0_26, %c1_27] : memref<2x16x18xbf16, #tpu.memory_space<vmem>>, vector<1x16x16xbf16>
    %36 = vector.shape_cast %35 : vector<1x16x16xbf16> to vector<16x16xbf16>
    %37 = vector.shape_cast %34 : vector<16x16xbf16> to vector<1x16x16xbf16>
    tpu.vector_store %arg15[%c1_25, %c0_26, %c1_27], %37 {strides = array<i32>} : memref<2x16x18xbf16, #tpu.memory_space<vmem>>, vector<1x16x16xbf16>,
    %c0_28 = arith.constant 0 : index
    %c0_29 = arith.constant 0 : index
    %c2 = arith.constant 2 : index
    %38 = vector.load %arg15[%c0_28, %c0_29, %c2] : memref<2x16x18xbf16, #tpu.memory_space<vmem>>, vector<1x16x16xbf16>
    %39 = vector.shape_cast %38 : vector<1x16x16xbf16> to vector<16x16xbf16>
    %c0_30 = arith.constant 0 : index
    %c0_31 = arith.constant 0 : index
    %40 = vector.load %arg16[%c0_30, %c0_31] : memref<48x32xbf16, #tpu.memory_space<vmem>>, vector<16x16xbf16>
    tpu.vector_store %arg16[%c0_30, %c0_31], %39 {strides = array<i32>} : memref<48x32xbf16, #tpu.memory_space<vmem>>, vector<16x16xbf16>,
    %c0_32 = arith.constant 0 : index
    %c0_33 = arith.constant 0 : index
    %c1_34 = arith.constant 1 : index
    %41 = vector.load %arg15[%c0_32, %c0_33, %c1_34] : memref<2x16x18xbf16, #tpu.memory_space<vmem>>, vector<1x16x16xbf16>
    %42 = vector.shape_cast %41 : vector<1x16x16xbf16> to vector<16x16xbf16>
    %c16 = arith.constant 16 : index
    %c0_35 = arith.constant 0 : index
    %43 = vector.load %arg16[%c16, %c0_35] : memref<48x32xbf16, #tpu.memory_space<vmem>>, vector<16x16xbf16>
    tpu.vector_store %arg16[%c16, %c0_35], %42 {strides = array<i32>} : memref<48x32xbf16, #tpu.memory_space<vmem>>, vector<16x16xbf16>,
    %c0_36 = arith.constant 0 : index
    %c0_37 = arith.constant 0 : index
    %c0_38 = arith.constant 0 : index
    %44 = vector.load %arg15[%c0_36, %c0_37, %c0_38] : memref<2x16x18xbf16, #tpu.memory_space<vmem>>, vector<1x16x16xbf16>
    %45 = vector.shape_cast %44 : vector<1x16x16xbf16> to vector<16x16xbf16>
    %c32 = arith.constant 32 : index
    %c0_39 = arith.constant 0 : index
    %46 = vector.load %arg16[%c32, %c0_39] : memref<48x32xbf16, #tpu.memory_space<vmem>>, vector<16x16xbf16>
    tpu.vector_store %arg16[%c32, %c0_39], %45 {strides = array<i32>} : memref<48x32xbf16, #tpu.memory_space<vmem>>, vector<16x16xbf16>,
    %c1_40 = arith.constant 1 : index
    %c0_41 = arith.constant 0 : index
    %c2_42 = arith.constant 2 : index
    %47 = vector.load %arg15[%c1_40, %c0_41, %c2_42] : memref<2x16x18xbf16, #tpu.memory_space<vmem>>, vector<1x16x16xbf16>
    %48 = vector.shape_cast %47 : vector<1x16x16xbf16> to vector<16x16xbf16>
    %c0_43 = arith.constant 0 : index
    %c16_44 = arith.constant 16 : index
    %49 = vector.load %arg16[%c0_43, %c16_44] : memref<48x32xbf16, #tpu.memory_space<vmem>>, vector<16x16xbf16>
    tpu.vector_store %arg16[%c0_43, %c16_44], %48 {strides = array<i32>} : memref<48x32xbf16, #tpu.memory_space<vmem>>, vector<16x16xbf16>,
    %c1_45 = arith.constant 1 : index
    %c0_46 = arith.constant 0 : index
    %c1_47 = arith.constant 1 : index
    %50 = vector.load %arg15[%c1_45, %c0_46, %c1_47] : memref<2x16x18xbf16, #tpu.memory_space<vmem>>, vector<1x16x16xbf16>
    %51 = vector.shape_cast %50 : vector<1x16x16xbf16> to vector<16x16xbf16>
    %c16_48 = arith.constant 16 : index
    %c16_49 = arith.constant 16 : index
    %52 = vector.load %arg16[%c16_48, %c16_49] : memref<48x32xbf16, #tpu.memory_space<vmem>>, vector<16x16xbf16>
    tpu.vector_store %arg16[%c16_48, %c16_49], %51 {strides = array<i32>} : memref<48x32xbf16, #tpu.memory_space<vmem>>, vector<16x16xbf16>,
    %c1_50 = arith.constant 1 : index
    %c0_51 = arith.constant 0 : index
    %c0_52 = arith.constant 0 : index
    %53 = vector.load %arg15[%c1_50, %c0_51, %c0_52] : memref<2x16x18xbf16, #tpu.memory_space<vmem>>, vector<1x16x16xbf16>
    %54 = vector.shape_cast %53 : vector<1x16x16xbf16> to vector<16x16xbf16>
    %c32_53 = arith.constant 32 : index
    %c16_54 = arith.constant 16 : index
    %55 = vector.load %arg16[%c32_53, %c16_54] : memref<48x32xbf16, #tpu.memory_space<vmem>>, vector<16x16xbf16>
    tpu.vector_store %arg16[%c32_53, %c16_54], %54 {strides = array<i32>} : memref<48x32xbf16, #tpu.memory_space<vmem>>, vector<16x16xbf16>,
    %c0_55 = arith.constant 0 : index
    %c0_56 = arith.constant 0 : index
    %56 = vector.load %arg2[%c0_55, %c0_56] : memref<16x48xbf16, #tpu.memory_space<vmem>>, vector<16x48xbf16>
    %c0_57 = arith.constant 0 : index
    %c0_58 = arith.constant 0 : index
    %57 = vector.load %arg16[%c0_57, %c0_58] : memref<48x32xbf16, #tpu.memory_space<vmem>>, vector<48x32xbf16>
    %cst_59 = arith.constant dense<0.000000e+00> : vector<16x32xf32>
    %58 = tpu.matmul %56, %57, %cst_59 {dimension_numbers = #tpu.dot_dimension_numbers<[1], [0], [0], [1], [0, 0, 1, 1], [], []>} : vector<16x48xbf16>, vector<48x32xbf16>, vector<16x32xf32> -> vector<16x32xf32>
    %cst_60 = arith.constant 0.000000e+00 : f32
    %59 = vector.broadcast %cst_60 : f32 to vector<8x64xf32>
    %60 = vector.extract_strided_slice %58 {offsets = [0, 0], sizes = [8, 32], strides = [1, 1]} : vector<16x32xf32> to vector<8x32xf32>
    %c0_61 = arith.constant 0 : index
    %c0_62 = arith.constant 0 : index
    %61 = vector.load %arg4[%c0_61, %c0_62] : memref<32x64xf32, #tpu.memory_space<vmem>>, vector<32x64xf32>
    %cst_63 = arith.constant dense<0.000000e+00> : vector<8x64xf32>
    %62 = tpu.matmul %60, %61, %cst_63 {dimension_numbers = #tpu.dot_dimension_numbers<[1], [0], [0], [1], [0, 0, 1, 1], [], []>} : vector<8x32xf32>, vector<32x64xf32>, vector<8x64xf32> -> vector<8x64xf32>
    %63 = arith.addf %59, %62 : vector<8x64xf32>
    %64 = vector.extract_strided_slice %58 {offsets = [8, 0], sizes = [8, 32], strides = [1, 1]} : vector<16x32xf32> to vector<8x32xf32>
    %c0_64 = arith.constant 0 : index
    %c0_65 = arith.constant 0 : index
    %65 = vector.load %arg5[%c0_64, %c0_65] : memref<32x64xf32, #tpu.memory_space<vmem>>, vector<32x64xf32>
    %cst_66 = arith.constant dense<0.000000e+00> : vector<8x64xf32>
    %66 = tpu.matmul %64, %65, %cst_66 {dimension_numbers = #tpu.dot_dimension_numbers<[1], [0], [0], [1], [0, 0, 1, 1], [], []>} : vector<8x32xf32>, vector<32x64xf32>, vector<8x64xf32> -> vector<8x64xf32>
    %67 = arith.addf %63, %66 : vector<8x64xf32>
    %c0_67 = arith.constant 0 : index
    %c0_68 = arith.constant 0 : index
    %68 = vector.load %arg3[%c0_67, %c0_68] : memref<8x1xf32, #tpu.memory_space<vmem>>, vector<8x1xf32>
    %69 = vector.broadcast %68 : vector<8x1xf32> to vector<8x64xf32>
    %70 = arith.addf %67, %69 : vector<8x64xf32>
    %cst_69 = arith.constant 0.000000e+00 : f32
    %71 = vector.broadcast %cst_69 : f32 to vector<8x64xf32>
    %cst_70 = arith.constant 0.000000e+00 : f32
    %72 = vector.broadcast %cst_70 : f32 to vector<8x64xf32>
    %73 = arith.cmpf oge, %70, %72 : vector<8x64xf32>
    %cst_71 = arith.constant 1.000000e-01 : f32
    %74 = vector.broadcast %cst_71 : f32 to vector<8x64xf32>
    %75 = arith.mulf %74, %70 : vector<8x64xf32>
    %76 = arith.select %73, %70, %75 : vector<8x64xi1>, vector<8x64xf32>
    %cst_72 = arith.constant 0.000000e+00 : bf16
    %77 = vector.broadcast %cst_72 : bf16 to vector<8x1xbf16>
    %c0_73 = arith.constant 0 : index
    %c0_74 = arith.constant 0 : index
    %c0_75 = arith.constant 0 : index
    %78 = vector.load %arg17[%c0_73, %c0_74, %c0_75] : memref<2x8x44xbf16, #tpu.memory_space<vmem>>, vector<1x8x1xbf16>
    %79 = vector.shape_cast %78 : vector<1x8x1xbf16> to vector<8x1xbf16>
    %80 = vector.shape_cast %77 : vector<8x1xbf16> to vector<1x8x1xbf16>
    tpu.vector_store %arg17[%c0_73, %c0_74, %c0_75], %80 {strides = array<i32>} : memref<2x8x44xbf16, #tpu.memory_space<vmem>>, vector<1x8x1xbf16>,
    %cst_76 = arith.constant 0.000000e+00 : bf16
    %81 = vector.broadcast %cst_76 : bf16 to vector<8x1xbf16>
    %c0_77 = arith.constant 0 : index
    %c0_78 = arith.constant 0 : index
    %c33 = arith.constant 33 : index
    %82 = vector.load %arg17[%c0_77, %c0_78, %c33] : memref<2x8x44xbf16, #tpu.memory_space<vmem>>, vector<1x8x1xbf16>
    %83 = vector.shape_cast %82 : vector<1x8x1xbf16> to vector<8x1xbf16>
    %84 = vector.shape_cast %81 : vector<8x1xbf16> to vector<1x8x1xbf16>
    tpu.vector_store %arg17[%c0_77, %c0_78, %c33], %84 {strides = array<i32>} : memref<2x8x44xbf16, #tpu.memory_space<vmem>>, vector<1x8x1xbf16>,
    %85 = vector.extract_strided_slice %76 {offsets = [0, 0], sizes = [8, 32], strides = [1, 1]} : vector<8x64xf32> to vector<8x32xf32>
    %86 = arith.truncf %85 : vector<8x32xf32> to vector<8x32xbf16>
    %c0_79 = arith.constant 0 : index
    %c0_80 = arith.constant 0 : index
    %c1_81 = arith.constant 1 : index
    %87 = vector.load %arg17[%c0_79, %c0_80, %c1_81] : memref<2x8x44xbf16, #tpu.memory_space<vmem>>, vector<1x8x32xbf16>
    %88 = vector.shape_cast %87 : vector<1x8x32xbf16> to vector<8x32xbf16>
    %89 = vector.shape_cast %86 : vector<8x32xbf16> to vector<1x8x32xbf16>
    tpu.vector_store %arg17[%c0_79, %c0_80, %c1_81], %89 {strides = array<i32>} : memref<2x8x44xbf16, #tpu.memory_space<vmem>>, vector<1x8x32xbf16>,
    %cst_82 = arith.constant 0.000000e+00 : bf16
    %90 = vector.broadcast %cst_82 : bf16 to vector<8x1xbf16>
    %c1_83 = arith.constant 1 : index
    %c0_84 = arith.constant 0 : index
    %c0_85 = arith.constant 0 : index
    %91 = vector.load %arg17[%c1_83, %c0_84, %c0_85] : memref<2x8x44xbf16, #tpu.memory_space<vmem>>, vector<1x8x1xbf16>
    %92 = vector.shape_cast %91 : vector<1x8x1xbf16> to vector<8x1xbf16>
    %93 = vector.shape_cast %90 : vector<8x1xbf16> to vector<1x8x1xbf16>
    tpu.vector_store %arg17[%c1_83, %c0_84, %c0_85], %93 {strides = array<i32>} : memref<2x8x44xbf16, #tpu.memory_space<vmem>>, vector<1x8x1xbf16>,
    %cst_86 = arith.constant 0.000000e+00 : bf16
    %94 = vector.broadcast %cst_86 : bf16 to vector<8x1xbf16>
    %c1_87 = arith.constant 1 : index
    %c0_88 = arith.constant 0 : index
    %c33_89 = arith.constant 33 : index
    %95 = vector.load %arg17[%c1_87, %c0_88, %c33_89] : memref<2x8x44xbf16, #tpu.memory_space<vmem>>, vector<1x8x1xbf16>
    %96 = vector.shape_cast %95 : vector<1x8x1xbf16> to vector<8x1xbf16>
    %97 = vector.shape_cast %94 : vector<8x1xbf16> to vector<1x8x1xbf16>
    tpu.vector_store %arg17[%c1_87, %c0_88, %c33_89], %97 {strides = array<i32>} : memref<2x8x44xbf16, #tpu.memory_space<vmem>>, vector<1x8x1xbf16>,
    %98 = vector.extract_strided_slice %76 {offsets = [0, 32], sizes = [8, 32], strides = [1, 1]} : vector<8x64xf32> to vector<8x32xf32>
    %99 = arith.truncf %98 : vector<8x32xf32> to vector<8x32xbf16>
    %c1_90 = arith.constant 1 : index
    %c0_91 = arith.constant 0 : index
    %c1_92 = arith.constant 1 : index
    %100 = vector.load %arg17[%c1_90, %c0_91, %c1_92] : memref<2x8x44xbf16, #tpu.memory_space<vmem>>, vector<1x8x32xbf16>
    %101 = vector.shape_cast %100 : vector<1x8x32xbf16> to vector<8x32xbf16>
    %102 = vector.shape_cast %99 : vector<8x32xbf16> to vector<1x8x32xbf16>
    tpu.vector_store %arg17[%c1_90, %c0_91, %c1_92], %102 {strides = array<i32>} : memref<2x8x44xbf16, #tpu.memory_space<vmem>>, vector<1x8x32xbf16>,
    %c0_93 = arith.constant 0 : index
    %c0_94 = arith.constant 0 : index
    %c0_95 = arith.constant 0 : index
    %103 = vector.load %arg17[%c0_93, %c0_94, %c0_95] : memref<2x8x44xbf16, #tpu.memory_space<vmem>>, vector<1x8x32xbf16>
    %104 = vector.shape_cast %103 : vector<1x8x32xbf16> to vector<8x32xbf16>
    %c0_96 = arith.constant 0 : index
    %c0_97 = arith.constant 0 : index
    %105 = vector.load %arg18[%c0_96, %c0_97] : memref<40x64xbf16, #tpu.memory_space<vmem>>, vector<8x32xbf16>
    tpu.vector_store %arg18[%c0_96, %c0_97], %104 {strides = array<i32>} : memref<40x64xbf16, #tpu.memory_space<vmem>>, vector<8x32xbf16>,
    %c0_98 = arith.constant 0 : index
    %c0_99 = arith.constant 0 : index
    %c1_100 = arith.constant 1 : index
    %106 = vector.load %arg17[%c0_98, %c0_99, %c1_100] : memref<2x8x44xbf16, #tpu.memory_space<vmem>>, vector<1x8x32xbf16>
    %107 = vector.shape_cast %106 : vector<1x8x32xbf16> to vector<8x32xbf16>
    %c8 = arith.constant 8 : index
    %c0_101 = arith.constant 0 : index
    %108 = vector.load %arg18[%c8, %c0_101] : memref<40x64xbf16, #tpu.memory_space<vmem>>, vector<8x32xbf16>
    tpu.vector_store %arg18[%c8, %c0_101], %107 {strides = array<i32>} : memref<40x64xbf16, #tpu.memory_space<vmem>>, vector<8x32xbf16>,
    %c0_102 = arith.constant 0 : index
    %c0_103 = arith.constant 0 : index
    %c2_104 = arith.constant 2 : index
    %109 = vector.load %arg17[%c0_102, %c0_103, %c2_104] : memref<2x8x44xbf16, #tpu.memory_space<vmem>>, vector<1x8x32xbf16>
    %110 = vector.shape_cast %109 : vector<1x8x32xbf16> to vector<8x32xbf16>
    %c16_105 = arith.constant 16 : index
    %c0_106 = arith.constant 0 : index
    %111 = vector.load %arg18[%c16_105, %c0_106] : memref<40x64xbf16, #tpu.memory_space<vmem>>, vector<8x32xbf16>
    tpu.vector_store %arg18[%c16_105, %c0_106], %110 {strides = array<i32>} : memref<40x64xbf16, #tpu.memory_space<vmem>>, vector<8x32xbf16>,
    %c1_107 = arith.constant 1 : index
    %c0_108 = arith.constant 0 : index
    %c0_109 = arith.constant 0 : index
    %112 = vector.load %arg17[%c1_107, %c0_108, %c0_109] : memref<2x8x44xbf16, #tpu.memory_space<vmem>>, vector<1x8x32xbf16>
    %113 = vector.shape_cast %112 : vector<1x8x32xbf16> to vector<8x32xbf16>
    %c0_110 = arith.constant 0 : index
    %c32_111 = arith.constant 32 : index
    %114 = vector.load %arg18[%c0_110, %c32_111] : memref<40x64xbf16, #tpu.memory_space<vmem>>, vector<8x32xbf16>
    tpu.vector_store %arg18[%c0_110, %c32_111], %113 {strides = array<i32>} : memref<40x64xbf16, #tpu.memory_space<vmem>>, vector<8x32xbf16>,
    %c1_112 = arith.constant 1 : index
    %c0_113 = arith.constant 0 : index
    %c1_114 = arith.constant 1 : index
    %115 = vector.load %arg17[%c1_112, %c0_113, %c1_114] : memref<2x8x44xbf16, #tpu.memory_space<vmem>>, vector<1x8x32xbf16>
    %116 = vector.shape_cast %115 : vector<1x8x32xbf16> to vector<8x32xbf16>
    %c8_115 = arith.constant 8 : index
    %c32_116 = arith.constant 32 : index
    %117 = vector.load %arg18[%c8_115, %c32_116] : memref<40x64xbf16, #tpu.memory_space<vmem>>, vector<8x32xbf16>
    tpu.vector_store %arg18[%c8_115, %c32_116], %116 {strides = array<i32>} : memref<40x64xbf16, #tpu.memory_space<vmem>>, vector<8x32xbf16>,
    %c1_117 = arith.constant 1 : index
    %c0_118 = arith.constant 0 : index
    %c2_119 = arith.constant 2 : index
    %118 = vector.load %arg17[%c1_117, %c0_118, %c2_119] : memref<2x8x44xbf16, #tpu.memory_space<vmem>>, vector<1x8x32xbf16>
    %119 = vector.shape_cast %118 : vector<1x8x32xbf16> to vector<8x32xbf16>
    %c16_120 = arith.constant 16 : index
    %c32_121 = arith.constant 32 : index
    %120 = vector.load %arg18[%c16_120, %c32_121] : memref<40x64xbf16, #tpu.memory_space<vmem>>, vector<8x32xbf16>
    tpu.vector_store %arg18[%c16_120, %c32_121], %119 {strides = array<i32>} : memref<40x64xbf16, #tpu.memory_space<vmem>>, vector<8x32xbf16>,
    %c0_122 = arith.constant 0 : index
    %c0_123 = arith.constant 0 : index
    %121 = vector.load %arg6[%c0_122, %c0_123] : memref<8x24xbf16, #tpu.memory_space<vmem>>, vector<8x24xbf16>
    %c0_124 = arith.constant 0 : index
    %c0_125 = arith.constant 0 : index
    %122 = vector.load %arg18[%c0_124, %c0_125] : memref<40x64xbf16, #tpu.memory_space<vmem>>, vector<24x64xbf16>
    %cst_126 = arith.constant dense<0.000000e+00> : vector<8x64xf32>
    %123 = tpu.matmul %121, %122, %cst_126 {dimension_numbers = #tpu.dot_dimension_numbers<[1], [0], [0], [1], [0, 0, 1, 1], [], []>} : vector<8x24xbf16>, vector<24x64xbf16>, vector<8x64xf32> -> vector<8x64xf32>
    %c0_127 = arith.constant 0 : index
    %c0_128 = arith.constant 0 : index
    %124 = vector.load %arg7[%c0_127, %c0_128] : memref<8x1xf32, #tpu.memory_space<vmem>>, vector<8x1xf32>
    %125 = vector.broadcast %124 : vector<8x1xf32> to vector<8x64xf32>
    %126 = arith.addf %123, %125 : vector<8x64xf32>
    %127 = arith.addf %126, %70 : vector<8x64xf32>
    %cst_129 = arith.constant 0.000000e+00 : f32
    %128 = vector.broadcast %cst_129 : f32 to vector<8x64xf32>
    %129 = arith.cmpf oge, %127, %128 : vector<8x64xf32>
    %cst_130 = arith.constant 1.000000e-01 : f32
    %130 = vector.broadcast %cst_130 : f32 to vector<8x64xf32>
    %131 = arith.mulf %130, %127 : vector<8x64xf32>
    %132 = arith.select %129, %127, %131 : vector<8x64xi1>, vector<8x64xf32>
    %cst_131 = arith.constant 0.000000e+00 : bf16
    %133 = vector.broadcast %cst_131 : bf16 to vector<8x3xbf16>
    %c0_132 = arith.constant 0 : index
    %c0_133 = arith.constant 0 : index
    %c0_134 = arith.constant 0 : index
    %134 = vector.load %arg17[%c0_132, %c0_133, %c0_134] : memref<2x8x44xbf16, #tpu.memory_space<vmem>>, vector<1x8x3xbf16>
    %135 = vector.shape_cast %134 : vector<1x8x3xbf16> to vector<8x3xbf16>
    %136 = vector.shape_cast %133 : vector<8x3xbf16> to vector<1x8x3xbf16>
    tpu.vector_store %arg17[%c0_132, %c0_133, %c0_134], %136 {strides = array<i32>} : memref<2x8x44xbf16, #tpu.memory_space<vmem>>, vector<1x8x3xbf16>,
    %cst_135 = arith.constant 0.000000e+00 : bf16
    %137 = vector.broadcast %cst_135 : bf16 to vector<8x3xbf16>
    %c0_136 = arith.constant 0 : index
    %c0_137 = arith.constant 0 : index
    %c35 = arith.constant 35 : index
    %138 = vector.load %arg17[%c0_136, %c0_137, %c35] : memref<2x8x44xbf16, #tpu.memory_space<vmem>>, vector<1x8x3xbf16>
    %139 = vector.shape_cast %138 : vector<1x8x3xbf16> to vector<8x3xbf16>
    %140 = vector.shape_cast %137 : vector<8x3xbf16> to vector<1x8x3xbf16>
    tpu.vector_store %arg17[%c0_136, %c0_137, %c35], %140 {strides = array<i32>} : memref<2x8x44xbf16, #tpu.memory_space<vmem>>, vector<1x8x3xbf16>,
    %141 = vector.extract_strided_slice %132 {offsets = [0, 0], sizes = [8, 32], strides = [1, 1]} : vector<8x64xf32> to vector<8x32xf32>
    %142 = arith.truncf %141 : vector<8x32xf32> to vector<8x32xbf16>
    %c0_138 = arith.constant 0 : index
    %c0_139 = arith.constant 0 : index
    %c3 = arith.constant 3 : index
    %143 = vector.load %arg17[%c0_138, %c0_139, %c3] : memref<2x8x44xbf16, #tpu.memory_space<vmem>>, vector<1x8x32xbf16>
    %144 = vector.shape_cast %143 : vector<1x8x32xbf16> to vector<8x32xbf16>
    %145 = vector.shape_cast %142 : vector<8x32xbf16> to vector<1x8x32xbf16>
    tpu.vector_store %arg17[%c0_138, %c0_139, %c3], %145 {strides = array<i32>} : memref<2x8x44xbf16, #tpu.memory_space<vmem>>, vector<1x8x32xbf16>,
    %cst_140 = arith.constant 0.000000e+00 : bf16
    %146 = vector.broadcast %cst_140 : bf16 to vector<8x3xbf16>
    %c1_141 = arith.constant 1 : index
    %c0_142 = arith.constant 0 : index
    %c0_143 = arith.constant 0 : index
    %147 = vector.load %arg17[%c1_141, %c0_142, %c0_143] : memref<2x8x44xbf16, #tpu.memory_space<vmem>>, vector<1x8x3xbf16>
    %148 = vector.shape_cast %147 : vector<1x8x3xbf16> to vector<8x3xbf16>
    %149 = vector.shape_cast %146 : vector<8x3xbf16> to vector<1x8x3xbf16>
    tpu.vector_store %arg17[%c1_141, %c0_142, %c0_143], %149 {strides = array<i32>} : memref<2x8x44xbf16, #tpu.memory_space<vmem>>, vector<1x8x3xbf16>,
    %cst_144 = arith.constant 0.000000e+00 : bf16
    %150 = vector.broadcast %cst_144 : bf16 to vector<8x3xbf16>
    %c1_145 = arith.constant 1 : index
    %c0_146 = arith.constant 0 : index
    %c35_147 = arith.constant 35 : index
    %151 = vector.load %arg17[%c1_145, %c0_146, %c35_147] : memref<2x8x44xbf16, #tpu.memory_space<vmem>>, vector<1x8x3xbf16>
    %152 = vector.shape_cast %151 : vector<1x8x3xbf16> to vector<8x3xbf16>
    %153 = vector.shape_cast %150 : vector<8x3xbf16> to vector<1x8x3xbf16>
    tpu.vector_store %arg17[%c1_145, %c0_146, %c35_147], %153 {strides = array<i32>} : memref<2x8x44xbf16, #tpu.memory_space<vmem>>, vector<1x8x3xbf16>,
    %154 = vector.extract_strided_slice %132 {offsets = [0, 32], sizes = [8, 32], strides = [1, 1]} : vector<8x64xf32> to vector<8x32xf32>
    %155 = arith.truncf %154 : vector<8x32xf32> to vector<8x32xbf16>
    %c1_148 = arith.constant 1 : index
    %c0_149 = arith.constant 0 : index
    %c3_150 = arith.constant 3 : index
    %156 = vector.load %arg17[%c1_148, %c0_149, %c3_150] : memref<2x8x44xbf16, #tpu.memory_space<vmem>>, vector<1x8x32xbf16>
    %157 = vector.shape_cast %156 : vector<1x8x32xbf16> to vector<8x32xbf16>
    %158 = vector.shape_cast %155 : vector<8x32xbf16> to vector<1x8x32xbf16>
    tpu.vector_store %arg17[%c1_148, %c0_149, %c3_150], %158 {strides = array<i32>} : memref<2x8x44xbf16, #tpu.memory_space<vmem>>, vector<1x8x32xbf16>,
    %c0_151 = arith.constant 0 : index
    %c0_152 = arith.constant 0 : index
    %c0_153 = arith.constant 0 : index
    %159 = vector.load %arg17[%c0_151, %c0_152, %c0_153] : memref<2x8x44xbf16, #tpu.memory_space<vmem>>, vector<1x8x32xbf16>
    %160 = vector.shape_cast %159 : vector<1x8x32xbf16> to vector<8x32xbf16>
    %c0_154 = arith.constant 0 : index
    %c0_155 = arith.constant 0 : index
    %161 = vector.load %arg18[%c0_154, %c0_155] : memref<40x64xbf16, #tpu.memory_space<vmem>>, vector<8x32xbf16>
    tpu.vector_store %arg18[%c0_154, %c0_155], %160 {strides = array<i32>} : memref<40x64xbf16, #tpu.memory_space<vmem>>, vector<8x32xbf16>,
    %c0_156 = arith.constant 0 : index
    %c0_157 = arith.constant 0 : index
    %c3_158 = arith.constant 3 : index
    %162 = vector.load %arg17[%c0_156, %c0_157, %c3_158] : memref<2x8x44xbf16, #tpu.memory_space<vmem>>, vector<1x8x32xbf16>
    %163 = vector.shape_cast %162 : vector<1x8x32xbf16> to vector<8x32xbf16>
    %c8_159 = arith.constant 8 : index
    %c0_160 = arith.constant 0 : index
    %164 = vector.load %arg18[%c8_159, %c0_160] : memref<40x64xbf16, #tpu.memory_space<vmem>>, vector<8x32xbf16>
    tpu.vector_store %arg18[%c8_159, %c0_160], %163 {strides = array<i32>} : memref<40x64xbf16, #tpu.memory_space<vmem>>, vector<8x32xbf16>,
    %c0_161 = arith.constant 0 : index
    %c0_162 = arith.constant 0 : index
    %c6 = arith.constant 6 : index
    %165 = vector.load %arg17[%c0_161, %c0_162, %c6] : memref<2x8x44xbf16, #tpu.memory_space<vmem>>, vector<1x8x32xbf16>
    %166 = vector.shape_cast %165 : vector<1x8x32xbf16> to vector<8x32xbf16>
    %c16_163 = arith.constant 16 : index
    %c0_164 = arith.constant 0 : index
    %167 = vector.load %arg18[%c16_163, %c0_164] : memref<40x64xbf16, #tpu.memory_space<vmem>>, vector<8x32xbf16>
    tpu.vector_store %arg18[%c16_163, %c0_164], %166 {strides = array<i32>} : memref<40x64xbf16, #tpu.memory_space<vmem>>, vector<8x32xbf16>,
    %c1_165 = arith.constant 1 : index
    %c0_166 = arith.constant 0 : index
    %c0_167 = arith.constant 0 : index
    %168 = vector.load %arg17[%c1_165, %c0_166, %c0_167] : memref<2x8x44xbf16, #tpu.memory_space<vmem>>, vector<1x8x32xbf16>
    %169 = vector.shape_cast %168 : vector<1x8x32xbf16> to vector<8x32xbf16>
    %c0_168 = arith.constant 0 : index
    %c32_169 = arith.constant 32 : index
    %170 = vector.load %arg18[%c0_168, %c32_169] : memref<40x64xbf16, #tpu.memory_space<vmem>>, vector<8x32xbf16>
    tpu.vector_store %arg18[%c0_168, %c32_169], %169 {strides = array<i32>} : memref<40x64xbf16, #tpu.memory_space<vmem>>, vector<8x32xbf16>,
    %c1_170 = arith.constant 1 : index
    %c0_171 = arith.constant 0 : index
    %c3_172 = arith.constant 3 : index
    %171 = vector.load %arg17[%c1_170, %c0_171, %c3_172] : memref<2x8x44xbf16, #tpu.memory_space<vmem>>, vector<1x8x32xbf16>
    %172 = vector.shape_cast %171 : vector<1x8x32xbf16> to vector<8x32xbf16>
    %c8_173 = arith.constant 8 : index
    %c32_174 = arith.constant 32 : index
    %173 = vector.load %arg18[%c8_173, %c32_174] : memref<40x64xbf16, #tpu.memory_space<vmem>>, vector<8x32xbf16>
    tpu.vector_store %arg18[%c8_173, %c32_174], %172 {strides = array<i32>} : memref<40x64xbf16, #tpu.memory_space<vmem>>, vector<8x32xbf16>,
    %c1_175 = arith.constant 1 : index
    %c0_176 = arith.constant 0 : index
    %c6_177 = arith.constant 6 : index
    %174 = vector.load %arg17[%c1_175, %c0_176, %c6_177] : memref<2x8x44xbf16, #tpu.memory_space<vmem>>, vector<1x8x32xbf16>
    %175 = vector.shape_cast %174 : vector<1x8x32xbf16> to vector<8x32xbf16>
    %c16_178 = arith.constant 16 : index
    %c32_179 = arith.constant 32 : index
    %176 = vector.load %arg18[%c16_178, %c32_179] : memref<40x64xbf16, #tpu.memory_space<vmem>>, vector<8x32xbf16>
    tpu.vector_store %arg18[%c16_178, %c32_179], %175 {strides = array<i32>} : memref<40x64xbf16, #tpu.memory_space<vmem>>, vector<8x32xbf16>,
    %c0_180 = arith.constant 0 : index
    %c0_181 = arith.constant 0 : index
    %177 = vector.load %arg8[%c0_180, %c0_181] : memref<8x24xbf16, #tpu.memory_space<vmem>>, vector<8x24xbf16>
    %c0_182 = arith.constant 0 : index
    %c0_183 = arith.constant 0 : index
    %178 = vector.load %arg18[%c0_182, %c0_183] : memref<40x64xbf16, #tpu.memory_space<vmem>>, vector<24x64xbf16>
    %cst_184 = arith.constant dense<0.000000e+00> : vector<8x64xf32>
    %179 = tpu.matmul %177, %178, %cst_184 {dimension_numbers = #tpu.dot_dimension_numbers<[1], [0], [0], [1], [0, 0, 1, 1], [], []>} : vector<8x24xbf16>, vector<24x64xbf16>, vector<8x64xf32> -> vector<8x64xf32>
    %c0_185 = arith.constant 0 : index
    %c0_186 = arith.constant 0 : index
    %180 = vector.load %arg9[%c0_185, %c0_186] : memref<8x1xf32, #tpu.memory_space<vmem>>, vector<8x1xf32>
    %181 = vector.broadcast %180 : vector<8x1xf32> to vector<8x64xf32>
    %182 = arith.addf %179, %181 : vector<8x64xf32>
    %183 = arith.addf %182, %127 : vector<8x64xf32>
    %184 = arith.addf %71, %183 : vector<8x64xf32>
    %cst_187 = arith.constant 0.000000e+00 : f32
    %185 = vector.broadcast %cst_187 : f32 to vector<8x64xf32>
    %186 = arith.cmpf oge, %70, %185 : vector<8x64xf32>
    %cst_188 = arith.constant 1.000000e-01 : f32
    %187 = vector.broadcast %cst_188 : f32 to vector<8x64xf32>
    %188 = arith.mulf %187, %70 : vector<8x64xf32>
    %189 = arith.select %186, %70, %188 : vector<8x64xi1>, vector<8x64xf32>
    %cst_189 = arith.constant 0.000000e+00 : bf16
    %190 = vector.broadcast %cst_189 : bf16 to vector<8x2xbf16>
    %c0_190 = arith.constant 0 : index
    %c0_191 = arith.constant 0 : index
    %c0_192 = arith.constant 0 : index
    %191 = vector.load %arg17[%c0_190, %c0_191, %c0_192] : memref<2x8x44xbf16, #tpu.memory_space<vmem>>, vector<1x8x2xbf16>
    %192 = vector.shape_cast %191 : vector<1x8x2xbf16> to vector<8x2xbf16>
    %193 = vector.shape_cast %190 : vector<8x2xbf16> to vector<1x8x2xbf16>
    tpu.vector_store %arg17[%c0_190, %c0_191, %c0_192], %193 {strides = array<i32>} : memref<2x8x44xbf16, #tpu.memory_space<vmem>>, vector<1x8x2xbf16>,
    %cst_193 = arith.constant 0.000000e+00 : bf16
    %194 = vector.broadcast %cst_193 : bf16 to vector<8x2xbf16>
    %c0_194 = arith.constant 0 : index
    %c0_195 = arith.constant 0 : index
    %c34 = arith.constant 34 : index
    %195 = vector.load %arg17[%c0_194, %c0_195, %c34] : memref<2x8x44xbf16, #tpu.memory_space<vmem>>, vector<1x8x2xbf16>
    %196 = vector.shape_cast %195 : vector<1x8x2xbf16> to vector<8x2xbf16>
    %197 = vector.shape_cast %194 : vector<8x2xbf16> to vector<1x8x2xbf16>
    tpu.vector_store %arg17[%c0_194, %c0_195, %c34], %197 {strides = array<i32>} : memref<2x8x44xbf16, #tpu.memory_space<vmem>>, vector<1x8x2xbf16>,
    %198 = vector.extract_strided_slice %189 {offsets = [0, 0], sizes = [8, 32], strides = [1, 1]} : vector<8x64xf32> to vector<8x32xf32>
    %199 = arith.truncf %198 : vector<8x32xf32> to vector<8x32xbf16>
    %c0_196 = arith.constant 0 : index
    %c0_197 = arith.constant 0 : index
    %c2_198 = arith.constant 2 : index
    %200 = vector.load %arg17[%c0_196, %c0_197, %c2_198] : memref<2x8x44xbf16, #tpu.memory_space<vmem>>, vector<1x8x32xbf16>
    %201 = vector.shape_cast %200 : vector<1x8x32xbf16> to vector<8x32xbf16>
    %202 = vector.shape_cast %199 : vector<8x32xbf16> to vector<1x8x32xbf16>
    tpu.vector_store %arg17[%c0_196, %c0_197, %c2_198], %202 {strides = array<i32>} : memref<2x8x44xbf16, #tpu.memory_space<vmem>>, vector<1x8x32xbf16>,
    %cst_199 = arith.constant 0.000000e+00 : bf16
    %203 = vector.broadcast %cst_199 : bf16 to vector<8x2xbf16>
    %c1_200 = arith.constant 1 : index
    %c0_201 = arith.constant 0 : index
    %c0_202 = arith.constant 0 : index
    %204 = vector.load %arg17[%c1_200, %c0_201, %c0_202] : memref<2x8x44xbf16, #tpu.memory_space<vmem>>, vector<1x8x2xbf16>
    %205 = vector.shape_cast %204 : vector<1x8x2xbf16> to vector<8x2xbf16>
    %206 = vector.shape_cast %203 : vector<8x2xbf16> to vector<1x8x2xbf16>
    tpu.vector_store %arg17[%c1_200, %c0_201, %c0_202], %206 {strides = array<i32>} : memref<2x8x44xbf16, #tpu.memory_space<vmem>>, vector<1x8x2xbf16>,
    %cst_203 = arith.constant 0.000000e+00 : bf16
    %207 = vector.broadcast %cst_203 : bf16 to vector<8x2xbf16>
    %c1_204 = arith.constant 1 : index
    %c0_205 = arith.constant 0 : index
    %c34_206 = arith.constant 34 : index
    %208 = vector.load %arg17[%c1_204, %c0_205, %c34_206] : memref<2x8x44xbf16, #tpu.memory_space<vmem>>, vector<1x8x2xbf16>
    %209 = vector.shape_cast %208 : vector<1x8x2xbf16> to vector<8x2xbf16>
    %210 = vector.shape_cast %207 : vector<8x2xbf16> to vector<1x8x2xbf16>
    tpu.vector_store %arg17[%c1_204, %c0_205, %c34_206], %210 {strides = array<i32>} : memref<2x8x44xbf16, #tpu.memory_space<vmem>>, vector<1x8x2xbf16>,
    %211 = vector.extract_strided_slice %189 {offsets = [0, 32], sizes = [8, 32], strides = [1, 1]} : vector<8x64xf32> to vector<8x32xf32>
    %212 = arith.truncf %211 : vector<8x32xf32> to vector<8x32xbf16>
    %c1_207 = arith.constant 1 : index
    %c0_208 = arith.constant 0 : index
    %c2_209 = arith.constant 2 : index
    %213 = vector.load %arg17[%c1_207, %c0_208, %c2_209] : memref<2x8x44xbf16, #tpu.memory_space<vmem>>, vector<1x8x32xbf16>
    %214 = vector.shape_cast %213 : vector<1x8x32xbf16> to vector<8x32xbf16>
    %215 = vector.shape_cast %212 : vector<8x32xbf16> to vector<1x8x32xbf16>
    tpu.vector_store %arg17[%c1_207, %c0_208, %c2_209], %215 {strides = array<i32>} : memref<2x8x44xbf16, #tpu.memory_space<vmem>>, vector<1x8x32xbf16>,
    %c0_210 = arith.constant 0 : index
    %c0_211 = arith.constant 0 : index
    %c0_212 = arith.constant 0 : index
    %216 = vector.load %arg17[%c0_210, %c0_211, %c0_212] : memref<2x8x44xbf16, #tpu.memory_space<vmem>>, vector<1x8x32xbf16>
    %217 = vector.shape_cast %216 : vector<1x8x32xbf16> to vector<8x32xbf16>
    %c0_213 = arith.constant 0 : index
    %c0_214 = arith.constant 0 : index
    %218 = vector.load %arg18[%c0_213, %c0_214] : memref<40x64xbf16, #tpu.memory_space<vmem>>, vector<8x32xbf16>
    tpu.vector_store %arg18[%c0_213, %c0_214], %217 {strides = array<i32>} : memref<40x64xbf16, #tpu.memory_space<vmem>>, vector<8x32xbf16>,
    %c0_215 = arith.constant 0 : index
    %c0_216 = arith.constant 0 : index
    %c1_217 = arith.constant 1 : index
    %219 = vector.load %arg17[%c0_215, %c0_216, %c1_217] : memref<2x8x44xbf16, #tpu.memory_space<vmem>>, vector<1x8x32xbf16>
    %220 = vector.shape_cast %219 : vector<1x8x32xbf16> to vector<8x32xbf16>
    %c8_218 = arith.constant 8 : index
    %c0_219 = arith.constant 0 : index
    %221 = vector.load %arg18[%c8_218, %c0_219] : memref<40x64xbf16, #tpu.memory_space<vmem>>, vector<8x32xbf16>
    tpu.vector_store %arg18[%c8_218, %c0_219], %220 {strides = array<i32>} : memref<40x64xbf16, #tpu.memory_space<vmem>>, vector<8x32xbf16>,
    %c0_220 = arith.constant 0 : index
    %c0_221 = arith.constant 0 : index
    %c2_222 = arith.constant 2 : index
    %222 = vector.load %arg17[%c0_220, %c0_221, %c2_222] : memref<2x8x44xbf16, #tpu.memory_space<vmem>>, vector<1x8x32xbf16>
    %223 = vector.shape_cast %222 : vector<1x8x32xbf16> to vector<8x32xbf16>
    %c16_223 = arith.constant 16 : index
    %c0_224 = arith.constant 0 : index
    %224 = vector.load %arg18[%c16_223, %c0_224] : memref<40x64xbf16, #tpu.memory_space<vmem>>, vector<8x32xbf16>
    tpu.vector_store %arg18[%c16_223, %c0_224], %223 {strides = array<i32>} : memref<40x64xbf16, #tpu.memory_space<vmem>>, vector<8x32xbf16>,
    %c0_225 = arith.constant 0 : index
    %c0_226 = arith.constant 0 : index
    %c3_227 = arith.constant 3 : index
    %225 = vector.load %arg17[%c0_225, %c0_226, %c3_227] : memref<2x8x44xbf16, #tpu.memory_space<vmem>>, vector<1x8x32xbf16>
    %226 = vector.shape_cast %225 : vector<1x8x32xbf16> to vector<8x32xbf16>
    %c24 = arith.constant 24 : index
    %c0_228 = arith.constant 0 : index
    %227 = vector.load %arg18[%c24, %c0_228] : memref<40x64xbf16, #tpu.memory_space<vmem>>, vector<8x32xbf16>
    tpu.vector_store %arg18[%c24, %c0_228], %226 {strides = array<i32>} : memref<40x64xbf16, #tpu.memory_space<vmem>>, vector<8x32xbf16>,
    %c0_229 = arith.constant 0 : index
    %c0_230 = arith.constant 0 : index
    %c4 = arith.constant 4 : index
    %228 = vector.load %arg17[%c0_229, %c0_230, %c4] : memref<2x8x44xbf16, #tpu.memory_space<vmem>>, vector<1x8x32xbf16>
    %229 = vector.shape_cast %228 : vector<1x8x32xbf16> to vector<8x32xbf16>
    %c32_231 = arith.constant 32 : index
    %c0_232 = arith.constant 0 : index
    %230 = vector.load %arg18[%c32_231, %c0_232] : memref<40x64xbf16, #tpu.memory_space<vmem>>, vector<8x32xbf16>
    tpu.vector_store %arg18[%c32_231, %c0_232], %229 {strides = array<i32>} : memref<40x64xbf16, #tpu.memory_space<vmem>>, vector<8x32xbf16>,
    %c1_233 = arith.constant 1 : index
    %c0_234 = arith.constant 0 : index
    %c0_235 = arith.constant 0 : index
    %231 = vector.load %arg17[%c1_233, %c0_234, %c0_235] : memref<2x8x44xbf16, #tpu.memory_space<vmem>>, vector<1x8x32xbf16>
    %232 = vector.shape_cast %231 : vector<1x8x32xbf16> to vector<8x32xbf16>
    %c0_236 = arith.constant 0 : index
    %c32_237 = arith.constant 32 : index
    %233 = vector.load %arg18[%c0_236, %c32_237] : memref<40x64xbf16, #tpu.memory_space<vmem>>, vector<8x32xbf16>
    tpu.vector_store %arg18[%c0_236, %c32_237], %232 {strides = array<i32>} : memref<40x64xbf16, #tpu.memory_space<vmem>>, vector<8x32xbf16>,
    %c1_238 = arith.constant 1 : index
    %c0_239 = arith.constant 0 : index
    %c1_240 = arith.constant 1 : index
    %234 = vector.load %arg17[%c1_238, %c0_239, %c1_240] : memref<2x8x44xbf16, #tpu.memory_space<vmem>>, vector<1x8x32xbf16>
    %235 = vector.shape_cast %234 : vector<1x8x32xbf16> to vector<8x32xbf16>
    %c8_241 = arith.constant 8 : index
    %c32_242 = arith.constant 32 : index
    %236 = vector.load %arg18[%c8_241, %c32_242] : memref<40x64xbf16, #tpu.memory_space<vmem>>, vector<8x32xbf16>
    tpu.vector_store %arg18[%c8_241, %c32_242], %235 {strides = array<i32>} : memref<40x64xbf16, #tpu.memory_space<vmem>>, vector<8x32xbf16>,
    %c1_243 = arith.constant 1 : index
    %c0_244 = arith.constant 0 : index
    %c2_245 = arith.constant 2 : index
    %237 = vector.load %arg17[%c1_243, %c0_244, %c2_245] : memref<2x8x44xbf16, #tpu.memory_space<vmem>>, vector<1x8x32xbf16>
    %238 = vector.shape_cast %237 : vector<1x8x32xbf16> to vector<8x32xbf16>
    %c16_246 = arith.constant 16 : index
    %c32_247 = arith.constant 32 : index
    %239 = vector.load %arg18[%c16_246, %c32_247] : memref<40x64xbf16, #tpu.memory_space<vmem>>, vector<8x32xbf16>
    tpu.vector_store %arg18[%c16_246, %c32_247], %238 {strides = array<i32>} : memref<40x64xbf16, #tpu.memory_space<vmem>>, vector<8x32xbf16>,
    %c1_248 = arith.constant 1 : index
    %c0_249 = arith.constant 0 : index
    %c3_250 = arith.constant 3 : index
    %240 = vector.load %arg17[%c1_248, %c0_249, %c3_250] : memref<2x8x44xbf16, #tpu.memory_space<vmem>>, vector<1x8x32xbf16>
    %241 = vector.shape_cast %240 : vector<1x8x32xbf16> to vector<8x32xbf16>
    %c24_251 = arith.constant 24 : index
    %c32_252 = arith.constant 32 : index
    %242 = vector.load %arg18[%c24_251, %c32_252] : memref<40x64xbf16, #tpu.memory_space<vmem>>, vector<8x32xbf16>
    tpu.vector_store %arg18[%c24_251, %c32_252], %241 {strides = array<i32>} : memref<40x64xbf16, #tpu.memory_space<vmem>>, vector<8x32xbf16>,
    %c1_253 = arith.constant 1 : index
    %c0_254 = arith.constant 0 : index
    %c4_255 = arith.constant 4 : index
    %243 = vector.load %arg17[%c1_253, %c0_254, %c4_255] : memref<2x8x44xbf16, #tpu.memory_space<vmem>>, vector<1x8x32xbf16>
    %244 = vector.shape_cast %243 : vector<1x8x32xbf16> to vector<8x32xbf16>
    %c32_256 = arith.constant 32 : index
    %c32_257 = arith.constant 32 : index
    %245 = vector.load %arg18[%c32_256, %c32_257] : memref<40x64xbf16, #tpu.memory_space<vmem>>, vector<8x32xbf16>
    tpu.vector_store %arg18[%c32_256, %c32_257], %244 {strides = array<i32>} : memref<40x64xbf16, #tpu.memory_space<vmem>>, vector<8x32xbf16>,
    %c0_258 = arith.constant 0 : index
    %c0_259 = arith.constant 0 : index
    %246 = vector.load %arg10[%c0_258, %c0_259] : memref<8x40xbf16, #tpu.memory_space<vmem>>, vector<8x40xbf16>
    %c0_260 = arith.constant 0 : index
    %c0_261 = arith.constant 0 : index
    %247 = vector.load %arg18[%c0_260, %c0_261] : memref<40x64xbf16, #tpu.memory_space<vmem>>, vector<40x64xbf16>
    %cst_262 = arith.constant dense<0.000000e+00> : vector<8x64xf32>
    %248 = tpu.matmul %246, %247, %cst_262 {dimension_numbers = #tpu.dot_dimension_numbers<[1], [0], [0], [1], [0, 0, 1, 1], [], []>} : vector<8x40xbf16>, vector<40x64xbf16>, vector<8x64xf32> -> vector<8x64xf32>
    %c0_263 = arith.constant 0 : index
    %c0_264 = arith.constant 0 : index
    %249 = vector.load %arg11[%c0_263, %c0_264] : memref<8x1xf32, #tpu.memory_space<vmem>>, vector<8x1xf32>
    %250 = vector.broadcast %249 : vector<8x1xf32> to vector<8x64xf32>
    %251 = arith.addf %248, %250 : vector<8x64xf32>
    %252 = arith.addf %251, %70 : vector<8x64xf32>
    %cst_265 = arith.constant 0.000000e+00 : f32
    %253 = vector.broadcast %cst_265 : f32 to vector<8x64xf32>
    %254 = arith.cmpf oge, %252, %253 : vector<8x64xf32>
    %cst_266 = arith.constant 1.000000e-01 : f32
    %255 = vector.broadcast %cst_266 : f32 to vector<8x64xf32>
    %256 = arith.mulf %255, %252 : vector<8x64xf32>
    %257 = arith.select %254, %252, %256 : vector<8x64xi1>, vector<8x64xf32>
    %cst_267 = arith.constant 0.000000e+00 : bf16
    %258 = vector.broadcast %cst_267 : bf16 to vector<8x6xbf16>
    %c0_268 = arith.constant 0 : index
    %c0_269 = arith.constant 0 : index
    %c0_270 = arith.constant 0 : index
    %259 = vector.load %arg17[%c0_268, %c0_269, %c0_270] : memref<2x8x44xbf16, #tpu.memory_space<vmem>>, vector<1x8x6xbf16>
    %260 = vector.shape_cast %259 : vector<1x8x6xbf16> to vector<8x6xbf16>
    %261 = vector.shape_cast %258 : vector<8x6xbf16> to vector<1x8x6xbf16>
    tpu.vector_store %arg17[%c0_268, %c0_269, %c0_270], %261 {strides = array<i32>} : memref<2x8x44xbf16, #tpu.memory_space<vmem>>, vector<1x8x6xbf16>,
    %cst_271 = arith.constant 0.000000e+00 : bf16
    %262 = vector.broadcast %cst_271 : bf16 to vector<8x6xbf16>
    %c0_272 = arith.constant 0 : index
    %c0_273 = arith.constant 0 : index
    %c38 = arith.constant 38 : index
    %263 = vector.load %arg17[%c0_272, %c0_273, %c38] : memref<2x8x44xbf16, #tpu.memory_space<vmem>>, vector<1x8x6xbf16>
    %264 = vector.shape_cast %263 : vector<1x8x6xbf16> to vector<8x6xbf16>
    %265 = vector.shape_cast %262 : vector<8x6xbf16> to vector<1x8x6xbf16>
    tpu.vector_store %arg17[%c0_272, %c0_273, %c38], %265 {strides = array<i32>} : memref<2x8x44xbf16, #tpu.memory_space<vmem>>, vector<1x8x6xbf16>,
    %266 = vector.extract_strided_slice %257 {offsets = [0, 0], sizes = [8, 32], strides = [1, 1]} : vector<8x64xf32> to vector<8x32xf32>
    %267 = arith.truncf %266 : vector<8x32xf32> to vector<8x32xbf16>
    %c0_274 = arith.constant 0 : index
    %c0_275 = arith.constant 0 : index
    %c6_276 = arith.constant 6 : index
    %268 = vector.load %arg17[%c0_274, %c0_275, %c6_276] : memref<2x8x44xbf16, #tpu.memory_space<vmem>>, vector<1x8x32xbf16>
    %269 = vector.shape_cast %268 : vector<1x8x32xbf16> to vector<8x32xbf16>
    %270 = vector.shape_cast %267 : vector<8x32xbf16> to vector<1x8x32xbf16>
    tpu.vector_store %arg17[%c0_274, %c0_275, %c6_276], %270 {strides = array<i32>} : memref<2x8x44xbf16, #tpu.memory_space<vmem>>, vector<1x8x32xbf16>,
    %cst_277 = arith.constant 0.000000e+00 : bf16
    %271 = vector.broadcast %cst_277 : bf16 to vector<8x6xbf16>
    %c1_278 = arith.constant 1 : index
    %c0_279 = arith.constant 0 : index
    %c0_280 = arith.constant 0 : index
    %272 = vector.load %arg17[%c1_278, %c0_279, %c0_280] : memref<2x8x44xbf16, #tpu.memory_space<vmem>>, vector<1x8x6xbf16>
    %273 = vector.shape_cast %272 : vector<1x8x6xbf16> to vector<8x6xbf16>
    %274 = vector.shape_cast %271 : vector<8x6xbf16> to vector<1x8x6xbf16>
    tpu.vector_store %arg17[%c1_278, %c0_279, %c0_280], %274 {strides = array<i32>} : memref<2x8x44xbf16, #tpu.memory_space<vmem>>, vector<1x8x6xbf16>,
    %cst_281 = arith.constant 0.000000e+00 : bf16
    %275 = vector.broadcast %cst_281 : bf16 to vector<8x6xbf16>
    %c1_282 = arith.constant 1 : index
    %c0_283 = arith.constant 0 : index
    %c38_284 = arith.constant 38 : index
    %276 = vector.load %arg17[%c1_282, %c0_283, %c38_284] : memref<2x8x44xbf16, #tpu.memory_space<vmem>>, vector<1x8x6xbf16>
    %277 = vector.shape_cast %276 : vector<1x8x6xbf16> to vector<8x6xbf16>
    %278 = vector.shape_cast %275 : vector<8x6xbf16> to vector<1x8x6xbf16>
    tpu.vector_store %arg17[%c1_282, %c0_283, %c38_284], %278 {strides = array<i32>} : memref<2x8x44xbf16, #tpu.memory_space<vmem>>, vector<1x8x6xbf16>,
    %279 = vector.extract_strided_slice %257 {offsets = [0, 32], sizes = [8, 32], strides = [1, 1]} : vector<8x64xf32> to vector<8x32xf32>
    %280 = arith.truncf %279 : vector<8x32xf32> to vector<8x32xbf16>
    %c1_285 = arith.constant 1 : index
    %c0_286 = arith.constant 0 : index
    %c6_287 = arith.constant 6 : index
    %281 = vector.load %arg17[%c1_285, %c0_286, %c6_287] : memref<2x8x44xbf16, #tpu.memory_space<vmem>>, vector<1x8x32xbf16>
    %282 = vector.shape_cast %281 : vector<1x8x32xbf16> to vector<8x32xbf16>
    %283 = vector.shape_cast %280 : vector<8x32xbf16> to vector<1x8x32xbf16>
    tpu.vector_store %arg17[%c1_285, %c0_286, %c6_287], %283 {strides = array<i32>} : memref<2x8x44xbf16, #tpu.memory_space<vmem>>, vector<1x8x32xbf16>,
    %c0_288 = arith.constant 0 : index
    %c0_289 = arith.constant 0 : index
    %c0_290 = arith.constant 0 : index
    %284 = vector.load %arg17[%c0_288, %c0_289, %c0_290] : memref<2x8x44xbf16, #tpu.memory_space<vmem>>, vector<1x8x32xbf16>
    %285 = vector.shape_cast %284 : vector<1x8x32xbf16> to vector<8x32xbf16>
    %c0_291 = arith.constant 0 : index
    %c0_292 = arith.constant 0 : index
    %286 = vector.load %arg18[%c0_291, %c0_292] : memref<40x64xbf16, #tpu.memory_space<vmem>>, vector<8x32xbf16>
    tpu.vector_store %arg18[%c0_291, %c0_292], %285 {strides = array<i32>} : memref<40x64xbf16, #tpu.memory_space<vmem>>, vector<8x32xbf16>,
    %c0_293 = arith.constant 0 : index
    %c0_294 = arith.constant 0 : index
    %c3_295 = arith.constant 3 : index
    %287 = vector.load %arg17[%c0_293, %c0_294, %c3_295] : memref<2x8x44xbf16, #tpu.memory_space<vmem>>, vector<1x8x32xbf16>
    %288 = vector.shape_cast %287 : vector<1x8x32xbf16> to vector<8x32xbf16>
    %c8_296 = arith.constant 8 : index
    %c0_297 = arith.constant 0 : index
    %289 = vector.load %arg18[%c8_296, %c0_297] : memref<40x64xbf16, #tpu.memory_space<vmem>>, vector<8x32xbf16>
    tpu.vector_store %arg18[%c8_296, %c0_297], %288 {strides = array<i32>} : memref<40x64xbf16, #tpu.memory_space<vmem>>, vector<8x32xbf16>,
    %c0_298 = arith.constant 0 : index
    %c0_299 = arith.constant 0 : index
    %c6_300 = arith.constant 6 : index
    %290 = vector.load %arg17[%c0_298, %c0_299, %c6_300] : memref<2x8x44xbf16, #tpu.memory_space<vmem>>, vector<1x8x32xbf16>
    %291 = vector.shape_cast %290 : vector<1x8x32xbf16> to vector<8x32xbf16>
    %c16_301 = arith.constant 16 : index
    %c0_302 = arith.constant 0 : index
    %292 = vector.load %arg18[%c16_301, %c0_302] : memref<40x64xbf16, #tpu.memory_space<vmem>>, vector<8x32xbf16>
    tpu.vector_store %arg18[%c16_301, %c0_302], %291 {strides = array<i32>} : memref<40x64xbf16, #tpu.memory_space<vmem>>, vector<8x32xbf16>,
    %c0_303 = arith.constant 0 : index
    %c0_304 = arith.constant 0 : index
    %c9 = arith.constant 9 : index
    %293 = vector.load %arg17[%c0_303, %c0_304, %c9] : memref<2x8x44xbf16, #tpu.memory_space<vmem>>, vector<1x8x32xbf16>
    %294 = vector.shape_cast %293 : vector<1x8x32xbf16> to vector<8x32xbf16>
    %c24_305 = arith.constant 24 : index
    %c0_306 = arith.constant 0 : index
    %295 = vector.load %arg18[%c24_305, %c0_306] : memref<40x64xbf16, #tpu.memory_space<vmem>>, vector<8x32xbf16>
    tpu.vector_store %arg18[%c24_305, %c0_306], %294 {strides = array<i32>} : memref<40x64xbf16, #tpu.memory_space<vmem>>, vector<8x32xbf16>,
    %c0_307 = arith.constant 0 : index
    %c0_308 = arith.constant 0 : index
    %c12 = arith.constant 12 : index
    %296 = vector.load %arg17[%c0_307, %c0_308, %c12] : memref<2x8x44xbf16, #tpu.memory_space<vmem>>, vector<1x8x32xbf16>
    %297 = vector.shape_cast %296 : vector<1x8x32xbf16> to vector<8x32xbf16>
    %c32_309 = arith.constant 32 : index
    %c0_310 = arith.constant 0 : index
    %298 = vector.load %arg18[%c32_309, %c0_310] : memref<40x64xbf16, #tpu.memory_space<vmem>>, vector<8x32xbf16>
    tpu.vector_store %arg18[%c32_309, %c0_310], %297 {strides = array<i32>} : memref<40x64xbf16, #tpu.memory_space<vmem>>, vector<8x32xbf16>,
    %c1_311 = arith.constant 1 : index
    %c0_312 = arith.constant 0 : index
    %c0_313 = arith.constant 0 : index
    %299 = vector.load %arg17[%c1_311, %c0_312, %c0_313] : memref<2x8x44xbf16, #tpu.memory_space<vmem>>, vector<1x8x32xbf16>
    %300 = vector.shape_cast %299 : vector<1x8x32xbf16> to vector<8x32xbf16>
    %c0_314 = arith.constant 0 : index
    %c32_315 = arith.constant 32 : index
    %301 = vector.load %arg18[%c0_314, %c32_315] : memref<40x64xbf16, #tpu.memory_space<vmem>>, vector<8x32xbf16>
    tpu.vector_store %arg18[%c0_314, %c32_315], %300 {strides = array<i32>} : memref<40x64xbf16, #tpu.memory_space<vmem>>, vector<8x32xbf16>,
    %c1_316 = arith.constant 1 : index
    %c0_317 = arith.constant 0 : index
    %c3_318 = arith.constant 3 : index
    %302 = vector.load %arg17[%c1_316, %c0_317, %c3_318] : memref<2x8x44xbf16, #tpu.memory_space<vmem>>, vector<1x8x32xbf16>
    %303 = vector.shape_cast %302 : vector<1x8x32xbf16> to vector<8x32xbf16>
    %c8_319 = arith.constant 8 : index
    %c32_320 = arith.constant 32 : index
    %304 = vector.load %arg18[%c8_319, %c32_320] : memref<40x64xbf16, #tpu.memory_space<vmem>>, vector<8x32xbf16>
    tpu.vector_store %arg18[%c8_319, %c32_320], %303 {strides = array<i32>} : memref<40x64xbf16, #tpu.memory_space<vmem>>, vector<8x32xbf16>,
    %c1_321 = arith.constant 1 : index
    %c0_322 = arith.constant 0 : index
    %c6_323 = arith.constant 6 : index
    %305 = vector.load %arg17[%c1_321, %c0_322, %c6_323] : memref<2x8x44xbf16, #tpu.memory_space<vmem>>, vector<1x8x32xbf16>
    %306 = vector.shape_cast %305 : vector<1x8x32xbf16> to vector<8x32xbf16>
    %c16_324 = arith.constant 16 : index
    %c32_325 = arith.constant 32 : index
    %307 = vector.load %arg18[%c16_324, %c32_325] : memref<40x64xbf16, #tpu.memory_space<vmem>>, vector<8x32xbf16>
    tpu.vector_store %arg18[%c16_324, %c32_325], %306 {strides = array<i32>} : memref<40x64xbf16, #tpu.memory_space<vmem>>, vector<8x32xbf16>,
    %c1_326 = arith.constant 1 : index
    %c0_327 = arith.constant 0 : index
    %c9_328 = arith.constant 9 : index
    %308 = vector.load %arg17[%c1_326, %c0_327, %c9_328] : memref<2x8x44xbf16, #tpu.memory_space<vmem>>, vector<1x8x32xbf16>
    %309 = vector.shape_cast %308 : vector<1x8x32xbf16> to vector<8x32xbf16>
    %c24_329 = arith.constant 24 : index
    %c32_330 = arith.constant 32 : index
    %310 = vector.load %arg18[%c24_329, %c32_330] : memref<40x64xbf16, #tpu.memory_space<vmem>>, vector<8x32xbf16>
    tpu.vector_store %arg18[%c24_329, %c32_330], %309 {strides = array<i32>} : memref<40x64xbf16, #tpu.memory_space<vmem>>, vector<8x32xbf16>,
    %c1_331 = arith.constant 1 : index
    %c0_332 = arith.constant 0 : index
    %c12_333 = arith.constant 12 : index
    %311 = vector.load %arg17[%c1_331, %c0_332, %c12_333] : memref<2x8x44xbf16, #tpu.memory_space<vmem>>, vector<1x8x32xbf16>
    %312 = vector.shape_cast %311 : vector<1x8x32xbf16> to vector<8x32xbf16>
    %c32_334 = arith.constant 32 : index
    %c32_335 = arith.constant 32 : index
    %313 = vector.load %arg18[%c32_334, %c32_335] : memref<40x64xbf16, #tpu.memory_space<vmem>>, vector<8x32xbf16>
    tpu.vector_store %arg18[%c32_334, %c32_335], %312 {strides = array<i32>} : memref<40x64xbf16, #tpu.memory_space<vmem>>, vector<8x32xbf16>,
    %c0_336 = arith.constant 0 : index
    %c0_337 = arith.constant 0 : index
    %314 = vector.load %arg12[%c0_336, %c0_337] : memref<8x40xbf16, #tpu.memory_space<vmem>>, vector<8x40xbf16>
    %c0_338 = arith.constant 0 : index
    %c0_339 = arith.constant 0 : index
    %315 = vector.load %arg18[%c0_338, %c0_339] : memref<40x64xbf16, #tpu.memory_space<vmem>>, vector<40x64xbf16>
    %cst_340 = arith.constant dense<0.000000e+00> : vector<8x64xf32>
    %316 = tpu.matmul %314, %315, %cst_340 {dimension_numbers = #tpu.dot_dimension_numbers<[1], [0], [0], [1], [0, 0, 1, 1], [], []>} : vector<8x40xbf16>, vector<40x64xbf16>, vector<8x64xf32> -> vector<8x64xf32>
    %c0_341 = arith.constant 0 : index
    %c0_342 = arith.constant 0 : index
    %317 = vector.load %arg13[%c0_341, %c0_342] : memref<8x1xf32, #tpu.memory_space<vmem>>, vector<8x1xf32>
    %318 = vector.broadcast %317 : vector<8x1xf32> to vector<8x64xf32>
    %319 = arith.addf %316, %318 : vector<8x64xf32>
    %320 = arith.addf %319, %252 : vector<8x64xf32>
    %321 = arith.addf %184, %320 : vector<8x64xf32>
    %cst_343 = arith.constant 5.000000e-01 : f32
    %322 = vector.broadcast %cst_343 : f32 to vector<8x64xf32>
    %323 = arith.mulf %321, %322 : vector<8x64xf32>
    %324 = vector.extract_strided_slice %323 {offsets = [0, 0], sizes = [8, 32], strides = [1, 1]} : vector<8x64xf32> to vector<8x32xf32>
    %c0_344 = arith.constant 0 : index
    %c0_345 = arith.constant 0 : index
    %c0_346 = arith.constant 0 : index
    %325 = vector.load %arg14[%c0_344, %c0_345, %c0_346] : memref<2x8x32xf32, #tpu.memory_space<vmem>>, vector<1x8x32xf32>
    %326 = vector.shape_cast %325 : vector<1x8x32xf32> to vector<8x32xf32>
    %327 = vector.shape_cast %324 : vector<8x32xf32> to vector<1x8x32xf32>
    tpu.vector_store %arg14[%c0_344, %c0_345, %c0_346], %327 {strides = array<i32>} : memref<2x8x32xf32, #tpu.memory_space<vmem>>, vector<1x8x32xf32>,
    %328 = vector.extract_strided_slice %323 {offsets = [0, 32], sizes = [8, 32], strides = [1, 1]} : vector<8x64xf32> to vector<8x32xf32>
    %c1_347 = arith.constant 1 : index
    %c0_348 = arith.constant 0 : index
    %c0_349 = arith.constant 0 : index
    %329 = vector.load %arg14[%c1_347, %c0_348, %c0_349] : memref<2x8x32xf32, #tpu.memory_space<vmem>>, vector<1x8x32xf32>
    %330 = vector.shape_cast %329 : vector<1x8x32xf32> to vector<8x32xf32>
    %331 = vector.shape_cast %328 : vector<8x32xf32> to vector<1x8x32xf32>
    tpu.vector_store %arg14[%c1_347, %c0_348, %c0_349], %331 {strides = array<i32>} : memref<2x8x32xf32, #tpu.memory_space<vmem>>, vector<1x8x32xf32>,
    return
  }
  func.func @transform_0(%arg0: i32) -> (i32, i32, i32) {
    %c0_i32 = arith.constant 0 : i32
    %c0_i32_0 = arith.constant 0 : i32
    %c0_i32_1 = arith.constant 0 : i32
    %c0_i32_2 = arith.constant 0 : i32
    return %c0_i32, %c0_i32_0, %c0_i32_1 : i32, i32, i32
  }
  func.func @transform_1(%arg0: i32) -> (i32, i32) {
    %c0_i32 = arith.constant 0 : i32
    %c0_i32_0 = arith.constant 0 : i32
    %c0_i32_1 = arith.constant 0 : i32
    return %c0_i32, %c0_i32_0 : i32, i32
  }
  func.func @transform_2(%arg0: i32) -> (i32, i32) {
    %c0_i32 = arith.constant 0 : i32
    %c0_i32_0 = arith.constant 0 : i32
    %c0_i32_1 = arith.constant 0 : i32
    return %c0_i32, %c0_i32_0 : i32, i32
  }
  func.func @transform_3(%arg0: i32) -> (i32, i32) {
    %c0_i32 = arith.constant 0 : i32
    %c0_i32_0 = arith.constant 0 : i32
    %c0_i32_1 = arith.constant 0 : i32
    return %c0_i32, %c0_i32_0 : i32, i32
  }
  func.func @transform_4(%arg0: i32) -> (i32, i32) {
    %c0_i32 = arith.constant 0 : i32
    %c0_i32_0 = arith.constant 0 : i32
    %c0_i32_1 = arith.constant 0 : i32
    return %c0_i32, %c0_i32_0 : i32, i32
  }
  func.func @transform_5(%arg0: i32) -> (i32, i32) {
    %c0_i32 = arith.constant 0 : i32
    %c0_i32_0 = arith.constant 0 : i32
    %c0_i32_1 = arith.constant 0 : i32
    return %c0_i32, %c0_i32_0 : i32, i32
  }
  func.func @transform_6(%arg0: i32) -> (i32, i32) {
    %c0_i32 = arith.constant 0 : i32
    %c0_i32_0 = arith.constant 0 : i32
    %c0_i32_1 = arith.constant 0 : i32
    return %c0_i32, %c0_i32_0 : i32, i32
  }
  func.func @transform_7(%arg0: i32) -> (i32, i32) {
    %c0_i32 = arith.constant 0 : i32
    %c0_i32_0 = arith.constant 0 : i32
    %c0_i32_1 = arith.constant 0 : i32
    return %c0_i32, %c0_i32_0 : i32, i32
  }
  func.func @transform_8(%arg0: i32) -> (i32, i32) {
    %c0_i32 = arith.constant 0 : i32
    %c0_i32_0 = arith.constant 0 : i32
    %c0_i32_1 = arith.constant 0 : i32
    return %c0_i32, %c0_i32_0 : i32, i32
  }
  func.func @transform_9(%arg0: i32) -> (i32, i32) {
    %c0_i32 = arith.constant 0 : i32
    %c0_i32_0 = arith.constant 0 : i32
    %c0_i32_1 = arith.constant 0 : i32
    return %c0_i32, %c0_i32_0 : i32, i32
  }
  func.func @transform_10(%arg0: i32) -> (i32, i32) {
    %c0_i32 = arith.constant 0 : i32
    %c0_i32_0 = arith.constant 0 : i32
    %c0_i32_1 = arith.constant 0 : i32
    return %c0_i32, %c0_i32_0 : i32, i32
  }
  func.func @transform_11(%arg0: i32) -> (i32, i32) {
    %c0_i32 = arith.constant 0 : i32
    %c0_i32_0 = arith.constant 0 : i32
    %c0_i32_1 = arith.constant 0 : i32
    return %c0_i32, %c0_i32_0 : i32, i32
  }
  func.func @transform_12(%arg0: i32) -> (i32, i32) {
    %c0_i32 = arith.constant 0 : i32
    %c0_i32_0 = arith.constant 0 : i32
    %c0_i32_1 = arith.constant 0 : i32
    return %c0_i32, %c0_i32_0 : i32, i32
  }
  func.func @transform_13(%arg0: i32) -> (i32, i32, i32) {
    %c0_i32 = arith.constant 0 : i32
    %c0_i32_0 = arith.constant 0 : i32
    %c0_i32_1 = arith.constant 0 : i32
    %c0_i32_2 = arith.constant 0 : i32
    return %c0_i32, %c0_i32_0, %c0_i32_1 : i32, i32, i32
  }
}

</mosaic_0001>

<llo_original>
// kernel: _lambda_.7
$region0: #{_lambda_.7}
  #allocation0 [shape = 'u32[]', space=smem, size = 0x4, offset = 0x4, fixed_abs, tag = 'smem constant byte address 0x4 - core index']
  #allocation1 [shape = 'u32[144,128]{1,0:T(1,128)}', space=vmem, size = 0x12000, scoped, tag = 'internal scratch']
  #allocation2 [shape = 'f32[2,8,38]{2,1,0:T(8,128)}', space=vmem, size = 0x2000, scoped, tag = 'scratch operand']
  #allocation3 [shape = 'f32[1,1]{1,0:T(1,128)S(1)}', space=vmem, size = 0x200, scoped, tag = 'scoped memory for _lambda_.7']
  %s0 = inlined_call_operand.vmem [shape: f32[2,8,32], index: 0, kind: input, shape index: {}]
  %s1 = inlined_call_operand.vmem [shape: f32[8,7], index: 1, kind: input, shape index: {}]
  %s2 = inlined_call_operand.<no memory space> [shape: f32[1,1], index: 2, kind: input, shape index: {}]
  %s3 = inlined_call_operand.hbm [shape: f32[2,1,32], index: 3, kind: output, shape index: {}]
  %s4 = sld [smem:[#allocation0]]
  $region22: #{_lambda_.7} parent=0
    _
  %s6 = ssub.s32 1, %s4
  %s7 = scalar_select 0, %s6, %s4
  %v8 = vstv %s2
  %9 = vst [vmem:[#allocation3] sm:$0x1] %v8
  $region1: #{_lambda_.7} parent=0
    #allocation4 [shape = 'u8[1024]{0}', space=vmem, size = 0x400, scoped, tag = 'output window, operand 0, single buffered']
    #allocation5 [shape = 's32[1]{0}', space=sflag, size = 0x4, scoped, tag = 'scoped memory for _lambda_.7']
    %10 = vsyncpa [#allocation5], 0
    // Predicated region
    $region2: #{_lambda_.7} parent=1 // pred_check
      _
    $region3: #{_lambda_.7} parent=1 // pred_check_branch
      %12 = sbr.rel (0) target = $region5
    $region4: #{_lambda_.7} parent=1 // pred_region
      _
    $region5: #{_lambda_.7} parent=1 // pred_fallthru
      _
    // Predicated region
    $region6: #{_lambda_.7} parent=1 // pred_check
      _
    $region7: #{_lambda_.7} parent=1 // pred_check_branch
      %14 = sbr.rel (0) target = $region9
    $region8: #{_lambda_.7} parent=1 // pred_region
      _
    $region9: #{_lambda_.7} parent=1 // pred_fallthru
      _
    // Predicated region
    $region10: #{_lambda_.7} parent=1 // pred_check
      _
    $region11: #{_lambda_.7} parent=1 // pred_check_branch
      %16 = sbr.rel (0) target = $region13
    $region12: #{_lambda_.7} parent=1 // pred_region
      _
    $region13: #{_lambda_.7} parent=1 // pred_fallthru
      _
    %v17 = vld [vmem:[%s0] sm:$0xff]
    %vm18 = vcmp.ge.f32.partialorder %v17, 0.0
    %v19 = vmul.f32 %v17, 0.01
    %v20 = vsel %vm18, %v17, %v19
    %vm21 = vcmask 23552
    %22 = vst.msk [vmem:[#allocation2] sm:$0xff] %vm21, 0.0
    %vm23 = vcmask 310552
    %24 = vst.msk [vmem:[#allocation2] sm:$0xff] %vm23, 0.0
    %26 = vrot.lane.b32.xlu0 %v20, 3
    %v27 = vpop.permute.xlu0 %26
    %vm29 = vcmask 285720
    %30 = vst.msk [vmem:[#allocation2] sm:$0xff] %vm29, %v27
    %v31 = vld [vmem:[#allocation2] sm:$0xff]
    %v32 = vld [vmem:[%s1] sm:$0xff]
    %34 = vset.pattern.permute.xlu0 0
    %35 = vperm.xlu0 %34, %v32
    %v36 = vpop.permute.xlu0 %35
    %v38 = vmul.f32 %v31, %v36
    %v39 = vadd.f32 %v38, 0.0
    %40 = vset.pattern.permute.xlu0 1
    %41 = vperm.xlu0 %40, %v32
    %v42 = vpop.permute.xlu0 %41
    %v44 = vmul.f32 %v31, %v42
    %46 = vrot.lane.b32.xlu0 %v44, 127
    %v47 = vpop.permute.xlu0 %46
    %v49 = vadd.f32 %v39, %v47
    %50 = vset.pattern.permute.xlu0 2
    %51 = vperm.xlu0 %50, %v32
    %v52 = vpop.permute.xlu0 %51
    %v54 = vmul.f32 %v31, %v52
    %56 = vrot.lane.b32.xlu0 %v54, 126
    %v57 = vpop.permute.xlu0 %56
    %v59 = vadd.f32 %v49, %v57
    %60 = vset.pattern.permute.xlu0 3
    %61 = vperm.xlu0 %60, %v32
    %v62 = vpop.permute.xlu0 %61
    %v64 = vmul.f32 %v31, %v62
    %66 = vrot.lane.b32.xlu0 %v64, 125
    %v67 = vpop.permute.xlu0 %66
    %v69 = vadd.f32 %v59, %v67
    %70 = vset.pattern.permute.xlu0 4
    %71 = vperm.xlu0 %70, %v32
    %v72 = vpop.permute.xlu0 %71
    %v74 = vmul.f32 %v31, %v72
    %76 = vrot.lane.b32.xlu0 %v74, 124
    %v77 = vpop.permute.xlu0 %76
    %v79 = vadd.f32 %v69, %v77
    %80 = vset.pattern.permute.xlu0 5
    %81 = vperm.xlu0 %80, %v32
    %v82 = vpop.permute.xlu0 %81
    %v84 = vmul.f32 %v31, %v82
    %86 = vrot.lane.b32.xlu0 %v84, 123
    %v87 = vpop.permute.xlu0 %86
    %v89 = vadd.f32 %v79, %v87
    %90 = vset.pattern.permute.xlu0 6
    %91 = vperm.xlu0 %90, %v32
    %v92 = vpop.permute.xlu0 %91
    %v94 = vmul.f32 %v31, %v92
    %96 = vrot.lane.b32.xlu0 %v94, 122
    %v97 = vpop.permute.xlu0 %96
    %v99 = vadd.f32 %v89, %v97
    %vm100 = vcmask 261120
    %v101 = vsel %vm100, %v99, 0.0
    %v102 = vrot.slane %v101, 4
    %v103 = vadd.f32 %v101, %v102
    %v104 = vrot.slane %v103, 2
    %v105 = vadd.f32 %v103, %v104
    %v106 = vrot.slane %v105, 1
    %v107 = vadd.f32 %v105, %v106
    %v108 = vld [vmem:[#allocation3] sm:$0x1]
    %110 = vset.pattern.permute.xlu0 0
    %111 = vperm.xlu0 %110, %v108
    %v112 = vpop.permute.xlu0 %111
    %v114 = vlaneseq
    %v115 = vshrl.u32 %v114, 7
    %v116 = vsub.s32 0, %v115
    %v117 = vrot.slane %v112, %v116
    %v118 = vadd.f32 %v107, %v117
    %v119 = vtanh.pop %v118
    %vm120 = vcmask 253952
    %121 = vst.msk [vmem:[#allocation4] sm:$0x1] %vm120, %v119
    %s122 = scalar_lea.vmem %s0, 8
    %v123 = vld [vmem:[%s122] sm:$0xff]
    %vm124 = vcmp.ge.f32.partialorder %v123, 0.0
    %v125 = vmul.f32 %v123, 0.01
    %v126 = vsel %vm124, %v123, %v125
    %s127 = scalar_lea.vmem [#allocation2], 8
    %128 = vst.msk [vmem:[%s127] sm:$0xff] %vm21, 0.0
    %129 = vst.msk [vmem:[%s127] sm:$0xff] %vm23, 0.0
    %131 = vrot.lane.b32.xlu0 %v126, 3
    %v132 = vpop.permute.xlu0 %131
    %134 = vst.msk [vmem:[%s127] sm:$0xff] %vm29, %v132
    %v135 = vld [vmem:[%s127] sm:$0xff]
    %v136 = vld [vmem:[%s1] sm:$0xff]
    %138 = vset.pattern.permute.xlu0 0
    %139 = vperm.xlu0 %138, %v136
    %v140 = vpop.permute.xlu0 %139
    %v142 = vmul.f32 %v135, %v140
    %v143 = vadd.f32 %v142, 0.0
    %144 = vset.pattern.permute.xlu0 1
    %145 = vperm.xlu0 %144, %v136
    %v146 = vpop.permute.xlu0 %145
    %v148 = vmul.f32 %v135, %v146
    %150 = vrot.lane.b32.xlu0 %v148, 127
    %v151 = vpop.permute.xlu0 %150
    %v153 = vadd.f32 %v143, %v151
    %154 = vset.pattern.permute.xlu0 2
    %155 = vperm.xlu0 %154, %v136
    %v156 = vpop.permute.xlu0 %155
    %v158 = vmul.f32 %v135, %v156
    %160 = vrot.lane.b32.xlu0 %v158, 126
    %v161 = vpop.permute.xlu0 %160
    %v163 = vadd.f32 %v153, %v161
    %164 = vset.pattern.permute.xlu0 3
    %165 = vperm.xlu0 %164, %v136
    %v166 = vpop.permute.xlu0 %165
    %v168 = vmul.f32 %v135, %v166
    %170 = vrot.lane.b32.xlu0 %v168, 125
    %v171 = vpop.permute.xlu0 %170
    %v173 = vadd.f32 %v163, %v171
    %174 = vset.pattern.permute.xlu0 4
    %175 = vperm.xlu0 %174, %v136
    %v176 = vpop.permute.xlu0 %175
    %v178 = vmul.f32 %v135, %v176
    %180 = vrot.lane.b32.xlu0 %v178, 124
    %v181 = vpop.permute.xlu0 %180
    %v183 = vadd.f32 %v173, %v181
    %184 = vset.pattern.permute.xlu0 5
    %185 = vperm.xlu0 %184, %v136
    %v186 = vpop.permute.xlu0 %185
    %v188 = vmul.f32 %v135, %v186
    %190 = vrot.lane.b32.xlu0 %v188, 123
    %v191 = vpop.permute.xlu0 %190
    %v193 = vadd.f32 %v183, %v191
    %194 = vset.pattern.permute.xlu0 6
    %195 = vperm.xlu0 %194, %v136
    %v196 = vpop.permute.xlu0 %195
    %v198 = vmul.f32 %v135, %v196
    %200 = vrot.lane.b32.xlu0 %v198, 122
    %v201 = vpop.permute.xlu0 %200
    %v203 = vadd.f32 %v193, %v201
    %v204 = vsel %vm100, %v203, 0.0
    %v205 = vrot.slane %v204, 4
    %v206 = vadd.f32 %v204, %v205
    %v207 = vrot.slane %v206, 2
    %v208 = vadd.f32 %v206, %v207
    %v209 = vrot.slane %v208, 1
    %v210 = vadd.f32 %v208, %v209
    %v211 = vld [vmem:[#allocation3] sm:$0x1]
    %213 = vset.pattern.permute.xlu0 0
    %214 = vperm.xlu0 %213, %v211
    %v215 = vpop.permute.xlu0 %214
    %v217 = vlaneseq
    %v218 = vshrl.u32 %v217, 7
    %v219 = vsub.s32 0, %v218
    %v220 = vrot.slane %v215, %v219
    %v221 = vadd.f32 %v210, %v220
    %v222 = vtanh.pop %v221
    %s223 = scalar_lea.vmem [#allocation4], 1
    %224 = vst.msk [vmem:[%s223] sm:$0x1] %vm120, %v222
    // Predicated region
    $region14: #{_lambda_.7} parent=1 // pred_check
      _
    $region15: #{_lambda_.7} parent=1 // pred_check_branch
      %226 = sbr.rel (0) target = $region17
    $region16: #{_lambda_.7} parent=1 // pred_region
      %s228 = ssub.s32 32, 32
      %229 = vsyncadd [#allocation5], %s228
      %s230 = sshll.u32 [#allocation4], 4
      %s231 = int_to_ptr.vmem [resolvable:$true] %s230
      %236 = dma.vmem_to_hbm [thread:$0]  %s231, 32, %s3, [#allocation5], 16, 16, 1
    $region17: #{_lambda_.7} parent=1 // pred_fallthru
      _
    // Predicated region
    $region18: #{_lambda_.7} parent=1 // pred_check
      _
    $region19: #{_lambda_.7} parent=1 // pred_check_branch
      %238 = sbr.rel (0) target = $region21
    $region20: #{_lambda_.7} parent=1 // pred_region
      %239 = dma.done [#allocation5], 32
    $region21: #{_lambda_.7} parent=1 // pred_fallthru
      _
    %240 = vsyncpa [#allocation5], 1

// kernel: _lambda_.4
$region0: #{_lambda_.4}
  #allocation0 [shape = 'u32[]', space=smem, size = 0x4, offset = 0x4, fixed_abs, tag = 'smem constant byte address 0x4 - core index']
  #allocation1 [shape = 'u32[144,128]{1,0:T(1,128)}', space=vmem, size = 0x12000, scoped, tag = 'internal scratch']
  #allocation2 [shape = 'bf16[2,32,14]{2,1,0:T(16,128)(2,1)}', space=vmem, size = 0x4000, scoped, tag = 'scratch operand']
  #allocation3 [shape = 'bf16[224,16]{1,0:T(16,128)(2,1)}', space=vmem, size = 0xe000, scoped, tag = 'scratch operand']
  %s0 = inlined_call_operand.vmem [shape: s32[1,16], index: 0, kind: input, shape index: {}]
  %s1 = inlined_call_operand.vmem [shape: bf16[32,16], index: 1, kind: input, shape index: {}]
  %s2 = inlined_call_operand.vmem [shape: bf16[32,224], index: 2, kind: input, shape index: {}]
  %s3 = inlined_call_operand.vmem [shape: f32[32,1], index: 3, kind: input, shape index: {}]
  %s4 = inlined_call_operand.vmem [shape: f32[2,32,8], index: 4, kind: output, shape index: {}]
  %s5 = sld [smem:[#allocation0]]
  $region26: #{_lambda_.4} parent=0
    _
  %s7 = ssub.s32 1, %s5
  %s8 = scalar_select 0, %s7, %s5
  // Predicated region
  $region2: #{_lambda_.4} parent=0 // pred_check
    _
  $region3: #{_lambda_.4} parent=0 // pred_check_branch
    %10 = sbr.rel (0) target = $region5
  $region4: #{_lambda_.4} parent=0 // pred_region
    _
  $region5: #{_lambda_.4} parent=0 // pred_fallthru
    _
  // Predicated region
  $region6: #{_lambda_.4} parent=0 // pred_check
    _
  $region7: #{_lambda_.4} parent=0 // pred_check_branch
    %12 = sbr.rel (0) target = $region9
  $region8: #{_lambda_.4} parent=0 // pred_region
    _
  $region9: #{_lambda_.4} parent=0 // pred_fallthru
    _
  // Predicated region
  $region10: #{_lambda_.4} parent=0 // pred_check
    _
  $region11: #{_lambda_.4} parent=0 // pred_check_branch
    %14 = sbr.rel (0) target = $region13
  $region12: #{_lambda_.4} parent=0 // pred_region
    _
  $region13: #{_lambda_.4} parent=0 // pred_fallthru
    _
  // Predicated region
  $region14: #{_lambda_.4} parent=0 // pred_check
    _
  $region15: #{_lambda_.4} parent=0 // pred_check_branch
    %16 = sbr.rel (0) target = $region17
  $region16: #{_lambda_.4} parent=0 // pred_region
    _
  $region17: #{_lambda_.4} parent=0 // pred_fallthru
    _
  %v18 = vld [vmem:[%s0] sm:$0x1]
  %v19 = vlaneseq
  %v20 = vshrl.u32 %v19, 7
  %v21 = vadd.s32 %v20, 8
  %v22 = vlaneseq
  %v23 = vshrl.u32 %v22, 7
  %v24 = vsub.s32 0, %v23
  %v25 = vrot.slane %v18, %v24
  %vm26 = vcmp.eq.s32.totalorder %v20, %v25
  %vm27 = vcmp.eq.s32.totalorder %v21, %v25
  %v28 = vsel %vm26, 1.0, 0.0
  %v29 = vsel %vm27, 1.0, 0.0
  %v30 = vpack.c.bf16 %v29, %v28
  %v31 = vld [vmem:[%s1] sm:$0xf]
  %v32 = vld [vmem:[%s1 + $0x4] sm:$0xf]
  %v33 = vld [vmem:[%s1 + $0x8] sm:$0xf]
  %v34 = vld [vmem:[%s1 + $0xc] sm:$0xf]
  %v39 = vunpack.c.l.b16 %v31
  %v40 = vunpack.c.l.b16 %v32
  %v41 = vunpack.c.l.b16 %v33
  %v42 = vunpack.c.l.b16 %v34
  %v43 = vpack.c.b16 %v40, %v39
  %v44 = vpack.c.b16 %v42, %v41
  %vm45 = vcmask 130048
  %v47 = vsel %vm45, %v43, 0
  %v50 = vsel %vm45, %v44, 0
  %52 = vmatprep.subr.bf16.mxu0 0
  %53 = vmatpush1.bf16.msra.mxu0 %v30
  %54 = vmatprep.subr.bf16.mxu0 0
  %55 = vmatpush1.bf16.msra.mxu0 0
  %56 = vmatprep.subr.bf16.mxu0 0
  %57 = vmatpush1.bf16.msra.mxu0 0
  %58 = vmatprep.subr.bf16.mxu0 0
  %59 = vmatpush1.bf16.msra.mxu0 0
  %60 = vmatprep.subr.bf16.mxu0 0
  %61 = vmatpush1.bf16.msra.mxu0 0
  %62 = vmatprep.subr.bf16.mxu0 0
  %63 = vmatpush1.bf16.msra.mxu0 0
  %64 = vmatprep.subr.bf16.mxu0 0
  %65 = vmatpush1.bf16.msra.mxu0 0
  %66 = vmatprep.subr.bf16.mxu0 0
  %67 = vmatpush1.bf16.msra.mxu0 0
  %68 = vmatprep.subr.bf16.mxu0 0
  %69 = vmatpush1.bf16.msra.mxu0 0
  %70 = vmatprep.subr.bf16.mxu0 0
  %71 = vmatpush1.bf16.msra.mxu0 0
  %72 = vmatprep.subr.bf16.mxu0 0
  %73 = vmatpush1.bf16.msra.mxu0 0
  %74 = vmatprep.subr.bf16.mxu0 0
  %75 = vmatpush1.bf16.msra.mxu0 0
  %76 = vmatprep.subr.bf16.mxu0 0
  %77 = vmatpush1.bf16.msra.mxu0 0
  %78 = vmatprep.subr.bf16.mxu0 0
  %79 = vmatpush1.bf16.msra.mxu0 0
  %80 = vmatprep.subr.bf16.mxu0 0
  %81 = vmatpush1.bf16.msra.mxu0 0
  %82 = vmatprep.subr.bf16.mxu0 0
  %83 = vmatpush1.bf16.msra.mxu0 0
  %84 = vmatprep.mubr.bf16.mxu0 0
  %85 = vmatmul.mubr.bf16.gmra.mrb[0].mxu0 %v47
  %v86 = vpop.f32.mrb[0].mxu0
  %v87 = vadd.f32 0.0, %v86
  %v88 = vpop.f32.mrb[0].mxu0
  %v89 = vpop.f32.mrb[0].mxu0
  %v90 = vadd.f32 0.0, %v89
  %v91 = vpop.f32.mrb[0].mxu0
  %92 = vmatprep.mubr.bf16.mxu0 0
  %93 = vmatmul.mubr.bf16.gmra.mrb[0].mxu0 %v50
  %v94 = vpop.f32.mrb[0].mxu0
  %v95 = vadd.f32 0.0, %v94
  %v96 = vpop.f32.mrb[0].mxu0
  %v97 = vpop.f32.mrb[0].mxu0
  %v98 = vadd.f32 0.0, %v97
  %v99 = vpop.f32.mrb[0].mxu0
  %100 = vdwg.mxu0
  %vm101 = vcmask 23552
  %102 = vst.msk [vmem:[#allocation2] sm:$0xff] %vm101, 0
  %103 = vst.msk [vmem:[#allocation2 + $0x8] sm:$0xff] %vm101, 0
  %vm104 = vcmask 113752
  %105 = vst.msk [vmem:[#allocation2] sm:$0xff] %vm104, 0
  %106 = vst.msk [vmem:[#allocation2 + $0x8] sm:$0xff] %vm104, 0
  %v107 = vpack.c.bf16 %v90, %v87
  %v108 = vpack.c.bf16 %v98, %v95
  %111 = vrot.lane.b32.xlu0 %v107, 3
  %v112 = vpop.permute.xlu0 %111
  %113 = vrot.lane.b32.xlu0 %v108, 3
  %v114 = vpop.permute.xlu0 %113
  %vm117 = vcmask 89112
  %118 = vst.msk [vmem:[#allocation2] sm:$0xff] %vm117, %v112
  %119 = vst.msk [vmem:[#allocation2 + $0x8] sm:$0xff] %vm117, %v114
  %s120 = scalar_lea.vmem [#allocation2], 16
  %121 = vst.msk [vmem:[%s120] sm:$0xff] %vm101, 0
  %122 = vst.msk [vmem:[%s120 + $0x8] sm:$0xff] %vm101, 0
  %123 = vst.msk [vmem:[%s120] sm:$0xff] %vm104, 0
  %124 = vst.msk [vmem:[%s120 + $0x8] sm:$0xff] %vm104, 0
  %125 = vrot.lane.b32.xlu0 %v107, 123
  %v126 = vpop.permute.xlu0 %125
  %127 = vrot.lane.b32.xlu0 %v108, 123
  %v128 = vpop.permute.xlu0 %127
  %131 = vst.msk [vmem:[%s120] sm:$0xff] %vm117, %v126
  %132 = vst.msk [vmem:[%s120 + $0x8] sm:$0xff] %vm117, %v128
  %v133 = vld [vmem:[#allocation2] sm:$0xff]
  %v134 = vld [vmem:[#allocation2 + $0x8] sm:$0xff]
  %vm135 = vcmask 64512
  %136 = vst.msk [vmem:[#allocation3] sm:$0xff] %vm135, %v133
  %137 = vst.msk [vmem:[#allocation3 + $0x8] sm:$0xff] %vm135, %v134
  %v138 = vld [vmem:[#allocation2] sm:$0xff]
  %v139 = vld [vmem:[#allocation2 + $0x8] sm:$0xff]
  %142 = vrot.lane.b32.xlu0 %v138, 127
  %v143 = vpop.permute.xlu0 %142
  %144 = vrot.lane.b32.xlu0 %v139, 127
  %v145 = vpop.permute.xlu0 %144
  %148 = vst.msk [vmem:[#allocation3 + $0x10] sm:$0xff] %vm135, %v143
  %149 = vst.msk [vmem:[#allocation3 + $0x18] sm:$0xff] %vm135, %v145
  %v150 = vld [vmem:[#allocation2] sm:$0xff]
  %v151 = vld [vmem:[#allocation2 + $0x8] sm:$0xff]
  %154 = vrot.lane.b32.xlu0 %v150, 126
  %v155 = vpop.permute.xlu0 %154
  %156 = vrot.lane.b32.xlu0 %v151, 126
  %v157 = vpop.permute.xlu0 %156
  %160 = vst.msk [vmem:[#allocation3 + $0x20] sm:$0xff] %vm135, %v155
  %161 = vst.msk [vmem:[#allocation3 + $0x28] sm:$0xff] %vm135, %v157
  %v162 = vld [vmem:[#allocation2] sm:$0xff]
  %v163 = vld [vmem:[#allocation2 + $0x8] sm:$0xff]
  %166 = vrot.lane.b32.xlu0 %v162, 125
  %v167 = vpop.permute.xlu0 %166
  %168 = vrot.lane.b32.xlu0 %v163, 125
  %v169 = vpop.permute.xlu0 %168
  %172 = vst.msk [vmem:[#allocation3 + $0x30] sm:$0xff] %vm135, %v167
  %173 = vst.msk [vmem:[#allocation3 + $0x38] sm:$0xff] %vm135, %v169
  %v174 = vld [vmem:[#allocation2] sm:$0xff]
  %v175 = vld [vmem:[#allocation2 + $0x8] sm:$0xff]
  %178 = vrot.lane.b32.xlu0 %v174, 124
  %v179 = vpop.permute.xlu0 %178
  %180 = vrot.lane.b32.xlu0 %v175, 124
  %v181 = vpop.permute.xlu0 %180
  %184 = vst.msk [vmem:[#allocation3 + $0x40] sm:$0xff] %vm135, %v179
  %185 = vst.msk [vmem:[#allocation3 + $0x48] sm:$0xff] %vm135, %v181
  %v186 = vld [vmem:[#allocation2] sm:$0xff]
  %v187 = vld [vmem:[#allocation2 + $0x8] sm:$0xff]
  %190 = vrot.lane.b32.xlu0 %v186, 123
  %v191 = vpop.permute.xlu0 %190
  %192 = vrot.lane.b32.xlu0 %v187, 123
  %v193 = vpop.permute.xlu0 %192
  %196 = vst.msk [vmem:[#allocation3 + $0x50] sm:$0xff] %vm135, %v191
  %197 = vst.msk [vmem:[#allocation3 + $0x58] sm:$0xff] %vm135, %v193
  %v198 = vld [vmem:[#allocation2] sm:$0xff]
  %v199 = vld [vmem:[#allocation2 + $0x8] sm:$0xff]
  %202 = vrot.lane.b32.xlu0 %v198, 122
  %v203 = vpop.permute.xlu0 %202
  %204 = vrot.lane.b32.xlu0 %v199, 122
  %v205 = vpop.permute.xlu0 %204
  %208 = vst.msk [vmem:[#allocation3 + $0x60] sm:$0xff] %vm135, %v203
  %209 = vst.msk [vmem:[#allocation3 + $0x68] sm:$0xff] %vm135, %v205
  %v210 = vld [vmem:[%s120] sm:$0xff]
  %v211 = vld [vmem:[%s120 + $0x8] sm:$0xff]
  %214 = vrot.lane.b32.xlu0 %v210, 8
  %v215 = vpop.permute.xlu0 %214
  %216 = vrot.lane.b32.xlu0 %v211, 8
  %v217 = vpop.permute.xlu0 %216
  %vm220 = vcmask 130112
  %221 = vst.msk [vmem:[#allocation3] sm:$0xff] %vm220, %v215
  %222 = vst.msk [vmem:[#allocation3 + $0x8] sm:$0xff] %vm220, %v217
  %v223 = vld [vmem:[%s120] sm:$0xff]
  %v224 = vld [vmem:[%s120 + $0x8] sm:$0xff]
  %227 = vrot.lane.b32.xlu0 %v223, 7
  %v228 = vpop.permute.xlu0 %227
  %229 = vrot.lane.b32.xlu0 %v224, 7
  %v230 = vpop.permute.xlu0 %229
  %233 = vst.msk [vmem:[#allocation3 + $0x10] sm:$0xff] %vm220, %v228
  %234 = vst.msk [vmem:[#allocation3 + $0x18] sm:$0xff] %vm220, %v230
  %v235 = vld [vmem:[%s120] sm:$0xff]
  %v236 = vld [vmem:[%s120 + $0x8] sm:$0xff]
  %239 = vrot.lane.b32.xlu0 %v235, 6
  %v240 = vpop.permute.xlu0 %239
  %241 = vrot.lane.b32.xlu0 %v236, 6
  %v242 = vpop.permute.xlu0 %241
  %245 = vst.msk [vmem:[#allocation3 + $0x20] sm:$0xff] %vm220, %v240
  %246 = vst.msk [vmem:[#allocation3 + $0x28] sm:$0xff] %vm220, %v242
  %v247 = vld [vmem:[%s120] sm:$0xff]
  %v248 = vld [vmem:[%s120 + $0x8] sm:$0xff]
  %251 = vrot.lane.b32.xlu0 %v247, 5
  %v252 = vpop.permute.xlu0 %251
  %253 = vrot.lane.b32.xlu0 %v248, 5
  %v254 = vpop.permute.xlu0 %253
  %257 = vst.msk [vmem:[#allocation3 + $0x30] sm:$0xff] %vm220, %v252
  %258 = vst.msk [vmem:[#allocation3 + $0x38] sm:$0xff] %vm220, %v254
  %v259 = vld [vmem:[%s120] sm:$0xff]
  %v260 = vld [vmem:[%s120 + $0x8] sm:$0xff]
  %263 = vrot.lane.b32.xlu0 %v259, 4
  %v264 = vpop.permute.xlu0 %263
  %265 = vrot.lane.b32.xlu0 %v260, 4
  %v266 = vpop.permute.xlu0 %265
  %269 = vst.msk [vmem:[#allocation3 + $0x40] sm:$0xff] %vm220, %v264
  %270 = vst.msk [vmem:[#allocation3 + $0x48] sm:$0xff] %vm220, %v266
  %v271 = vld [vmem:[%s120] sm:$0xff]
  %v272 = vld [vmem:[%s120 + $0x8] sm:$0xff]
  %275 = vrot.lane.b32.xlu0 %v271, 3
  %v276 = vpop.permute.xlu0 %275
  %277 = vrot.lane.b32.xlu0 %v272, 3
  %v278 = vpop.permute.xlu0 %277
  %281 = vst.msk [vmem:[#allocation3 + $0x50] sm:$0xff] %vm220, %v276
  %282 = vst.msk [vmem:[#allocation3 + $0x58] sm:$0xff] %vm220, %v278
  %v283 = vld [vmem:[%s120] sm:$0xff]
  %v284 = vld [vmem:[%s120 + $0x8] sm:$0xff]
  %287 = vrot.lane.b32.xlu0 %v283, 2
  %v288 = vpop.permute.xlu0 %287
  %289 = vrot.lane.b32.xlu0 %v284, 2
  %v290 = vpop.permute.xlu0 %289
  %293 = vst.msk [vmem:[#allocation3 + $0x60] sm:$0xff] %vm220, %v288
  %294 = vst.msk [vmem:[#allocation3 + $0x68] sm:$0xff] %vm220, %v290
  %v295 = vld [vmem:[%s2] sm:$0xff]
  %v296 = vld [vmem:[%s2 + $0x8] sm:$0xff]
  %v297 = vld [vmem:[%s2 + $0x10] sm:$0xff]
  %v298 = vld [vmem:[%s2 + $0x18] sm:$0xff]
  %v299 = vld [vmem:[#allocation3] sm:$0xff]
  %v300 = vld [vmem:[#allocation3 + $0x8] sm:$0xff]
  %v301 = vld [vmem:[#allocation3 + $0x10] sm:$0xff]
  %v302 = vld [vmem:[#allocation3 + $0x18] sm:$0xff]
  %v303 = vld [vmem:[#allocation3 + $0x20] sm:$0xff]
  %v304 = vld [vmem:[#allocation3 + $0x28] sm:$0xff]
  %v305 = vld [vmem:[#allocation3 + $0x30] sm:$0xff]
  %v306 = vld [vmem:[#allocation3 + $0x38] sm:$0xff]
  %v307 = vld [vmem:[#allocation3 + $0x40] sm:$0xff]
  %v308 = vld [vmem:[#allocation3 + $0x48] sm:$0xff]
  %v309 = vld [vmem:[#allocation3 + $0x50] sm:$0xff]
  %v310 = vld [vmem:[#allocation3 + $0x58] sm:$0xff]
  %v311 = vld [vmem:[#allocation3 + $0x60] sm:$0xff]
  %v312 = vld [vmem:[#allocation3 + $0x68] sm:$0xff]
  %v313 = vld [vmem:[%s3] sm:$0xff]
  %v314 = vld [vmem:[%s3 + $0x8] sm:$0xff]
  %v315 = vld [vmem:[%s3 + $0x10] sm:$0xff]
  %v316 = vld [vmem:[%s3 + $0x18] sm:$0xff]
  %318 = vset.pattern.permute.xlu0 0
  %319 = vperm.xlu0 %318, %v313
  %v320 = vpop.permute.xlu0 %319
  %323 = vset.pattern.permute.xlu0 0
  %324 = vperm.xlu0 %323, %v314
  %v325 = vpop.permute.xlu0 %324
  %328 = vset.pattern.permute.xlu0 0
  %329 = vperm.xlu0 %328, %v315
  %v330 = vpop.permute.xlu0 %329
  %333 = vset.pattern.permute.xlu0 0
  %334 = vperm.xlu0 %333, %v316
  %v335 = vpop.permute.xlu0 %334
  %v341 = vunpack.c.l.b16 %v295
  %v342 = vunpack.c.h.b16 %v295
  %v343 = vunpack.c.l.b16 %v296
  %v344 = vunpack.c.h.b16 %v296
  %v345 = vunpack.c.l.b16 %v297
  %v346 = vunpack.c.h.b16 %v297
  %v347 = vunpack.c.l.b16 %v298
  %v348 = vunpack.c.h.b16 %v298
  %v349 = vpack.c.b16 %v343, %v341
  %v350 = vpack.c.b16 %v344, %v342
  %v351 = vpack.c.b16 %v347, %v345
  %v352 = vpack.c.b16 %v348, %v346
  %vm355 = vcmask 785408
  %v357 = vsel %vm355, %v350, 0
  %v360 = vsel %vm355, %v352, 0
  %362 = vmatprep.subr.bf16.mxu0 0
  %363 = vmatpush1.bf16.msra.mxu0 %v299
  %364 = vmatprep.subr.bf16.mxu0 0
  %365 = vmatpush1.bf16.msra.mxu0 %v300
  %366 = vmatprep.subr.bf16.mxu0 0
  %367 = vmatpush1.bf16.msra.mxu0 %v301
  %368 = vmatprep.subr.bf16.mxu0 0
  %369 = vmatpush1.bf16.msra.mxu0 %v302
  %370 = vmatprep.subr.bf16.mxu0 0
  %371 = vmatpush1.bf16.msra.mxu0 %v303
  %372 = vmatprep.subr.bf16.mxu0 0
  %373 = vmatpush1.bf16.msra.mxu0 %v304
  %374 = vmatprep.subr.bf16.mxu0 0
  %375 = vmatpush1.bf16.msra.mxu0 %v305
  %376 = vmatprep.subr.bf16.mxu0 0
  %377 = vmatpush1.bf16.msra.mxu0 %v306
  %378 = vmatprep.subr.bf16.mxu0 0
  %379 = vmatpush1.bf16.msra.mxu0 %v307
  %380 = vmatprep.subr.bf16.mxu0 0
  %381 = vmatpush1.bf16.msra.mxu0 %v308
  %382 = vmatprep.subr.bf16.mxu0 0
  %383 = vmatpush1.bf16.msra.mxu0 %v309
  %384 = vmatprep.subr.bf16.mxu0 0
  %385 = vmatpush1.bf16.msra.mxu0 %v310
  %386 = vmatprep.subr.bf16.mxu0 0
  %387 = vmatpush1.bf16.msra.mxu0 %v311
  %388 = vmatprep.subr.bf16.mxu0 0
  %389 = vmatpush1.bf16.msra.mxu0 %v312
  %390 = vmatprep.subr.bf16.mxu0 0
  %391 = vmatpush1.bf16.msra.mxu0 0
  %392 = vmatprep.subr.bf16.mxu0 0
  %393 = vmatpush1.bf16.msra.mxu0 0
  %394 = vmatprep.mubr.bf16.mxu0 %v357
  %395 = vmatmul.mubr.bf16.gmra.mrb[0].mxu0 %v349
  %v396 = vpop.f32.mrb[0].mxu0
  %v397 = vadd.f32 %v320, %v396
  %v398 = vpop.f32.mrb[0].mxu0
  %v399 = vpop.f32.mrb[0].mxu0
  %v400 = vadd.f32 %v325, %v399
  %v401 = vpop.f32.mrb[0].mxu0
  %402 = vmatprep.mubr.bf16.mxu0 %v360
  %403 = vmatmul.mubr.bf16.gmra.mrb[0].mxu0 %v351
  %v404 = vpop.f32.mrb[0].mxu0
  %v405 = vadd.f32 %v330, %v404
  %v406 = vpop.f32.mrb[0].mxu0
  %v407 = vpop.f32.mrb[0].mxu0
  %v408 = vadd.f32 %v335, %v407
  %v409 = vpop.f32.mrb[0].mxu0
  %410 = vdwg.mxu0
  %411 = vst.msk [vmem:[%s4] sm:$0xff] %vm135, %v397
  %412 = vst.msk [vmem:[%s4 + $0x8] sm:$0xff] %vm135, %v400
  %413 = vst.msk [vmem:[%s4 + $0x10] sm:$0xff] %vm135, %v405
  %414 = vst.msk [vmem:[%s4 + $0x18] sm:$0xff] %vm135, %v408
  %419 = vrot.lane.b32.xlu0 %v397, 120
  %v420 = vpop.permute.xlu0 %419
  %421 = vrot.lane.b32.xlu0 %v400, 120
  %v422 = vpop.permute.xlu0 %421
  %423 = vrot.lane.b32.xlu0 %v405, 120
  %v424 = vpop.permute.xlu0 %423
  %425 = vrot.lane.b32.xlu0 %v408, 120
  %v426 = vpop.permute.xlu0 %425
  %s431 = scalar_lea.vmem %s4, 32
  %432 = vst.msk [vmem:[%s431] sm:$0xff] %vm135, %v420
  %433 = vst.msk [vmem:[%s431 + $0x8] sm:$0xff] %vm135, %v422
  %434 = vst.msk [vmem:[%s431 + $0x10] sm:$0xff] %vm135, %v424
  %435 = vst.msk [vmem:[%s431 + $0x18] sm:$0xff] %vm135, %v426
  // Predicated region
  $region18: #{_lambda_.4} parent=0 // pred_check
    _
  $region19: #{_lambda_.4} parent=0 // pred_check_branch
    %437 = sbr.rel (0) target = $region21
  $region20: #{_lambda_.4} parent=0 // pred_region
    _
  $region21: #{_lambda_.4} parent=0 // pred_fallthru
    _
  // Predicated region
  $region22: #{_lambda_.4} parent=0 // pred_check
    _
  $region23: #{_lambda_.4} parent=0 // pred_check_branch
    %439 = sbr.rel (0) target = $region25
  $region24: #{_lambda_.4} parent=0 // pred_region
    _
  $region25: #{_lambda_.4} parent=0 // pred_fallthru
    _

// kernel: _lambda_.6
$region0: #{_lambda_.6}
  #allocation0 [shape = 'u32[]', space=smem, size = 0x4, offset = 0x4, fixed_abs, tag = 'smem constant byte address 0x4 - core index']
  #allocation1 [shape = 'u32[144,128]{1,0:T(1,128)}', space=vmem, size = 0x12000, scoped, tag = 'internal scratch']
  #allocation2 [shape = 'bf16[2,16,18]{2,1,0:T(16,128)(2,1)}', space=vmem, size = 0x2000, scoped, tag = 'scratch operand']
  #allocation3 [shape = 'bf16[48,32]{1,0:T(16,128)(2,1)}', space=vmem, size = 0x3000, scoped, tag = 'scratch operand']
  #allocation4 [shape = 'bf16[2,8,44]{2,1,0:T(8,128)(2,1)}', space=vmem, size = 0x1000, scoped, tag = 'scratch operand']
  #allocation5 [shape = 'bf16[40,64]{1,0:T(8,128)(2,1)}', space=vmem, size = 0x2800, scoped, tag = 'scratch operand']
  %s0 = inlined_call_operand.vmem [shape: f32[2,16,16], index: 0, kind: input, shape index: {}]
  %s1 = inlined_call_operand.vmem [shape: bf16[16,48], index: 1, kind: input, shape index: {}]
  %s2 = inlined_call_operand.vmem [shape: f32[8,1], index: 2, kind: input, shape index: {}]
  %s3 = inlined_call_operand.vmem [shape: f32[32,64], index: 3, kind: input, shape index: {}]
  %s4 = inlined_call_operand.vmem [shape: f32[32,64], index: 4, kind: input, shape index: {}]
  %s5 = inlined_call_operand.vmem [shape: bf16[8,24], index: 5, kind: input, shape index: {}]
  %s6 = inlined_call_operand.vmem [shape: f32[8,1], index: 6, kind: input, shape index: {}]
  %s7 = inlined_call_operand.vmem [shape: bf16[8,24], index: 7, kind: input, shape index: {}]
  %s8 = inlined_call_operand.vmem [shape: f32[8,1], index: 8, kind: input, shape index: {}]
  %s9 = inlined_call_operand.vmem [shape: bf16[8,40], index: 9, kind: input, shape index: {}]
  %s10 = inlined_call_operand.vmem [shape: f32[8,1], index: 10, kind: input, shape index: {}]
  %s11 = inlined_call_operand.vmem [shape: bf16[8,40], index: 11, kind: input, shape index: {}]
  %s12 = inlined_call_operand.vmem [shape: f32[8,1], index: 12, kind: input, shape index: {}]
  %s13 = inlined_call_operand.vmem [shape: f32[2,8,32], index: 13, kind: output, shape index: {}]
  %s14 = sld [smem:[#allocation0]]
  $region62: #{_lambda_.6} parent=0
    _
  %s16 = ssub.s32 1, %s14
  %s17 = scalar_select 0, %s16, %s14
  // Predicated region
  $region2: #{_lambda_.6} parent=0 // pred_check
    _
  $region3: #{_lambda_.6} parent=0 // pred_check_branch
    %19 = sbr.rel (0) target = $region5
  $region4: #{_lambda_.6} parent=0 // pred_region
    _
  $region5: #{_lambda_.6} parent=0 // pred_fallthru
    _
  // Predicated region
  $region6: #{_lambda_.6} parent=0 // pred_check
    _
  $region7: #{_lambda_.6} parent=0 // pred_check_branch
    %21 = sbr.rel (0) target = $region9
  $region8: #{_lambda_.6} parent=0 // pred_region
    _
  $region9: #{_lambda_.6} parent=0 // pred_fallthru
    _
  // Predicated region
  $region10: #{_lambda_.6} parent=0 // pred_check
    _
  $region11: #{_lambda_.6} parent=0 // pred_check_branch
    %23 = sbr.rel (0) target = $region13
  $region12: #{_lambda_.6} parent=0 // pred_region
    _
  $region13: #{_lambda_.6} parent=0 // pred_fallthru
    _
  // Predicated region
  $region14: #{_lambda_.6} parent=0 // pred_check
    _
  $region15: #{_lambda_.6} parent=0 // pred_check_branch
    %25 = sbr.rel (0) target = $region17
  $region16: #{_lambda_.6} parent=0 // pred_region
    _
  $region17: #{_lambda_.6} parent=0 // pred_fallthru
    _
  // Predicated region
  $region18: #{_lambda_.6} parent=0 // pred_check
    _
  $region19: #{_lambda_.6} parent=0 // pred_check_branch
    %27 = sbr.rel (0) target = $region21
  $region20: #{_lambda_.6} parent=0 // pred_region
    _
  $region21: #{_lambda_.6} parent=0 // pred_fallthru
    _
  // Predicated region
  $region22: #{_lambda_.6} parent=0 // pred_check
    _
  $region23: #{_lambda_.6} parent=0 // pred_check_branch
    %29 = sbr.rel (0) target = $region25
  $region24: #{_lambda_.6} parent=0 // pred_region
    _
  $region25: #{_lambda_.6} parent=0 // pred_fallthru
    _
  // Predicated region
  $region26: #{_lambda_.6} parent=0 // pred_check
    _
  $region27: #{_lambda_.6} parent=0 // pred_check_branch
    %31 = sbr.rel (0) target = $region29
  $region28: #{_lambda_.6} parent=0 // pred_region
    _
  $region29: #{_lambda_.6} parent=0 // pred_fallthru
    _
  // Predicated region
  $region30: #{_lambda_.6} parent=0 // pred_check
    _
  $region31: #{_lambda_.6} parent=0 // pred_check_branch
    %33 = sbr.rel (0) target = $region33
  $region32: #{_lambda_.6} parent=0 // pred_region
    _
  $region33: #{_lambda_.6} parent=0 // pred_fallthru
    _
  // Predicated region
  $region34: #{_lambda_.6} parent=0 // pred_check
    _
  $region35: #{_lambda_.6} parent=0 // pred_check_branch
    %35 = sbr.rel (0) target = $region37
  $region36: #{_lambda_.6} parent=0 // pred_region
    _
  $region37: #{_lambda_.6} parent=0 // pred_fallthru
    _
  // Predicated region
  $region38: #{_lambda_.6} parent=0 // pred_check
    _
  $region39: #{_lambda_.6} parent=0 // pred_check_branch
    %37 = sbr.rel (0) target = $region41
  $region40: #{_lambda_.6} parent=0 // pred_region
    _
  $region41: #{_lambda_.6} parent=0 // pred_fallthru
    _
  // Predicated region
  $region42: #{_lambda_.6} parent=0 // pred_check
    _
  $region43: #{_lambda_.6} parent=0 // pred_check_branch
    %39 = sbr.rel (0) target = $region45
  $region44: #{_lambda_.6} parent=0 // pred_region
    _
  $region45: #{_lambda_.6} parent=0 // pred_fallthru
    _
  // Predicated region
  $region46: #{_lambda_.6} parent=0 // pred_check
    _
  $region47: #{_lambda_.6} parent=0 // pred_check_branch
    %41 = sbr.rel (0) target = $region49
  $region48: #{_lambda_.6} parent=0 // pred_region
    _
  $region49: #{_lambda_.6} parent=0 // pred_fallthru
    _
  // Predicated region
  $region50: #{_lambda_.6} parent=0 // pred_check
    _
  $region51: #{_lambda_.6} parent=0 // pred_check_branch
    %43 = sbr.rel (0) target = $region53
  $region52: #{_lambda_.6} parent=0 // pred_region
    _
  $region53: #{_lambda_.6} parent=0 // pred_fallthru
    _
  %v45 = vld [vmem:[%s0] sm:$0xff]
  %v46 = vld [vmem:[%s0 + $0x8] sm:$0xff]
  %vm47 = vcmp.ge.f32.partialorder %v45, 0.0
  %vm48 = vcmp.ge.f32.partialorder %v46, 0.0
  %v49 = vmul.f32 %v45, 0.1
  %v50 = vmul.f32 %v46, 0.1
  %v51 = vsel %vm47, %v45, %v49
  %v52 = vsel %vm48, %v46, %v50
  %vm53 = vcmask 7168
  %54 = vst.msk [vmem:[#allocation2] sm:$0xff] %vm53, 0
  %vm55 = vcmask 146568
  %56 = vst.msk [vmem:[#allocation2] sm:$0xff] %vm55, 0
  %v57 = vpack.c.bf16 %v52, %v51
  %59 = vrot.lane.b32.xlu0 %v57, 1
  %v60 = vpop.permute.xlu0 %59
  %vm62 = vcmask 138248
  %63 = vst.msk [vmem:[#allocation2] sm:$0xff] %vm62, %v60
  %s64 = scalar_lea.vmem %s0, 16
  %v65 = vld [vmem:[%s64] sm:$0xff]
  %v66 = vld [vmem:[%s64 + $0x8] sm:$0xff]
  %vm67 = vcmp.ge.f32.partialorder %v65, 0.0
  %vm68 = vcmp.ge.f32.partialorder %v66, 0.0
  %v69 = vmul.f32 %v65, 0.1
  %v70 = vmul.f32 %v66, 0.1
  %v71 = vsel %vm67, %v65, %v69
  %v72 = vsel %vm68, %v66, %v70
  %s73 = scalar_lea.vmem [#allocation2], 8
  %74 = vst.msk [vmem:[%s73] sm:$0xff] %vm53, 0
  %75 = vst.msk [vmem:[%s73] sm:$0xff] %vm55, 0
  %v76 = vpack.c.bf16 %v72, %v71
  %78 = vrot.lane.b32.xlu0 %v76, 1
  %v79 = vpop.permute.xlu0 %78
  %81 = vst.msk [vmem:[%s73] sm:$0xff] %vm62, %v79
  %v82 = vld [vmem:[#allocation2] sm:$0xff]
  %84 = vrot.lane.b32.xlu0 %v82, 126
  %v85 = vpop.permute.xlu0 %84
  %vm87 = vcmask 130048
  %88 = vst.msk [vmem:[#allocation3] sm:$0xff] %vm87, %v85
  %v89 = vld [vmem:[#allocation2] sm:$0xff]
  %91 = vrot.lane.b32.xlu0 %v89, 127
  %v92 = vpop.permute.xlu0 %91
  %94 = vst.msk [vmem:[#allocation3 + $0x8] sm:$0xff] %vm87, %v92
  %v95 = vld [vmem:[#allocation2] sm:$0xff]
  %96 = vst.msk [vmem:[#allocation3 + $0x10] sm:$0xff] %vm87, %v95
  %v97 = vld [vmem:[%s73] sm:$0xff]
  %99 = vrot.lane.b32.xlu0 %v97, 14
  %v100 = vpop.permute.xlu0 %99
  %vm102 = vcmask 261248
  %103 = vst.msk [vmem:[#allocation3] sm:$0xff] %vm102, %v100
  %v104 = vld [vmem:[%s73] sm:$0xff]
  %106 = vrot.lane.b32.xlu0 %v104, 15
  %v107 = vpop.permute.xlu0 %106
  %109 = vst.msk [vmem:[#allocation3 + $0x8] sm:$0xff] %vm102, %v107
  %v110 = vld [vmem:[%s73] sm:$0xff]
  %112 = vrot.lane.b32.xlu0 %v110, 16
  %v113 = vpop.permute.xlu0 %112
  %115 = vst.msk [vmem:[#allocation3 + $0x10] sm:$0xff] %vm102, %v113
  %v116 = vld [vmem:[%s1] sm:$0xf]
  %v117 = vld [vmem:[%s1 + $0x4] sm:$0xf]
  %v118 = vld [vmem:[#allocation3] sm:$0xff]
  %v119 = vld [vmem:[#allocation3 + $0x8] sm:$0xff]
  %v120 = vld [vmem:[#allocation3 + $0x10] sm:$0xff]
  %v123 = vunpack.c.l.b16 %v116
  %v124 = vunpack.c.l.b16 %v117
  %v125 = vpack.c.b16 %v124, %v123
  %vm126 = vcmask 392192
  %v128 = vsel %vm126, %v125, 0
  %130 = vmatprep.subr.bf16.mxu0 0
  %131 = vmatpush1.bf16.msra.mxu0 %v118
  %132 = vmatprep.subr.bf16.mxu0 0
  %133 = vmatpush1.bf16.msra.mxu0 %v119
  %134 = vmatprep.subr.bf16.mxu0 0
  %135 = vmatpush1.bf16.msra.mxu0 %v120
  %136 = vmatprep.subr.bf16.mxu0 0
  %137 = vmatpush1.bf16.msra.mxu0 0
  %138 = vmatprep.subr.bf16.mxu0 0
  %139 = vmatpush1.bf16.msra.mxu0 0
  %140 = vmatprep.subr.bf16.mxu0 0
  %141 = vmatpush1.bf16.msra.mxu0 0
  %142 = vmatprep.subr.bf16.mxu0 0
  %143 = vmatpush1.bf16.msra.mxu0 0
  %144 = vmatprep.subr.bf16.mxu0 0
  %145 = vmatpush1.bf16.msra.mxu0 0
  %146 = vmatprep.subr.bf16.mxu0 0
  %147 = vmatpush1.bf16.msra.mxu0 0
  %148 = vmatprep.subr.bf16.mxu0 0
  %149 = vmatpush1.bf16.msra.mxu0 0
  %150 = vmatprep.subr.bf16.mxu0 0
  %151 = vmatpush1.bf16.msra.mxu0 0
  %152 = vmatprep.subr.bf16.mxu0 0
  %153 = vmatpush1.bf16.msra.mxu0 0
  %154 = vmatprep.subr.bf16.mxu0 0
  %155 = vmatpush1.bf16.msra.mxu0 0
  %156 = vmatprep.subr.bf16.mxu0 0
  %157 = vmatpush1.bf16.msra.mxu0 0
  %158 = vmatprep.subr.bf16.mxu0 0
  %159 = vmatpush1.bf16.msra.mxu0 0
  %160 = vmatprep.subr.bf16.mxu0 0
  %161 = vmatpush1.bf16.msra.mxu0 0
  %162 = vmatprep.mubr.bf16.mxu0 0
  %163 = vmatmul.mubr.bf16.gmra.mrb[0].mxu0 %v128
  %v164 = vpop.f32.mrb[0].mxu0
  %v165 = vadd.f32 0.0, %v164
  %v166 = vpop.f32.mrb[0].mxu0
  %v167 = vpop.f32.mrb[0].mxu0
  %v168 = vadd.f32 0.0, %v167
  %v169 = vpop.f32.mrb[0].mxu0
  %170 = vdwg.mxu0
  %v171 = vld [vmem:[%s3] sm:$0xff]
  %v172 = vld [vmem:[%s3 + $0x8] sm:$0xff]
  %v173 = vld [vmem:[%s3 + $0x10] sm:$0xff]
  %v174 = vld [vmem:[%s3 + $0x18] sm:$0xff]
  %v175 = vld [vmem:[%s4] sm:$0xff]
  %v176 = vld [vmem:[%s4 + $0x8] sm:$0xff]
  %v177 = vld [vmem:[%s4 + $0x10] sm:$0xff]
  %v178 = vld [vmem:[%s4 + $0x18] sm:$0xff]
  %vm179 = vcmask 261120
  %v181 = vsel %vm179, %v168, 0
  %183 = vmatprep.subr.mxu0 0.0
  %184 = vmatpush1.msra.mxu0 %v175
  %185 = vmatprep.subr.mxu0 0.0
  %186 = vmatpush1.msra.mxu0 %v176
  %187 = vmatprep.subr.mxu0 0.0
  %188 = vmatpush1.msra.mxu0 %v177
  %189 = vmatprep.subr.mxu0 0.0
  %190 = vmatpush1.msra.mxu0 %v178
  %191 = vmatprep.subr.mxu0 0.0
  %192 = vmatpush1.msra.mxu0 0.0
  %193 = vmatprep.subr.mxu0 0.0
  %194 = vmatpush1.msra.mxu0 0.0
  %195 = vmatprep.subr.mxu0 0.0
  %196 = vmatpush1.msra.mxu0 0.0
  %197 = vmatprep.subr.mxu0 0.0
  %198 = vmatpush1.msra.mxu0 0.0
  %199 = vmatprep.subr.mxu0 0.0
  %200 = vmatpush1.msra.mxu0 0.0
  %201 = vmatprep.subr.mxu0 0.0
  %202 = vmatpush1.msra.mxu0 0.0
  %203 = vmatprep.subr.mxu0 0.0
  %204 = vmatpush1.msra.mxu0 0.0
  %205 = vmatprep.subr.mxu0 0.0
  %206 = vmatpush1.msra.mxu0 0.0
  %207 = vmatprep.subr.mxu0 0.0
  %208 = vmatpush1.msra.mxu0 0.0
  %209 = vmatprep.subr.mxu0 0.0
  %210 = vmatpush1.msra.mxu0 0.0
  %211 = vmatprep.subr.mxu0 0.0
  %212 = vmatpush1.msra.mxu0 0.0
  %213 = vmatprep.subr.mxu0 0.0
  %214 = vmatpush1.msra.mxu0 0.0
  %215 = vmatprep.subr.mxu0 0.0
  %216 = vmatpush1.msra.mxu0 0.0
  %217 = vmatprep.subr.mxu0 0.0
  %218 = vmatpush1.msra.mxu0 0.0
  %219 = vmatprep.subr.mxu0 0.0
  %220 = vmatpush1.msra.mxu0 0.0
  %221 = vmatprep.subr.mxu0 0.0
  %222 = vmatpush1.msra.mxu0 0.0
  %223 = vmatprep.subr.mxu0 0.0
  %224 = vmatpush1.msra.mxu0 0.0
  %225 = vmatprep.subr.mxu0 0.0
  %226 = vmatpush1.msra.mxu0 0.0
  %227 = vmatprep.subr.mxu0 0.0
  %228 = vmatpush1.msra.mxu0 0.0
  %229 = vmatprep.subr.mxu0 0.0
  %230 = vmatpush1.msra.mxu0 0.0
  %231 = vmatprep.subr.mxu0 0.0
  %232 = vmatpush1.msra.mxu0 0.0
  %233 = vmatprep.subr.mxu0 0.0
  %234 = vmatpush1.msra.mxu0 0.0
  %235 = vmatprep.subr.mxu0 0.0
  %236 = vmatpush1.msra.mxu0 0.0
  %237 = vmatprep.subr.mxu0 0.0
  %238 = vmatpush1.msra.mxu0 0.0
  %239 = vmatprep.subr.mxu0 0.0
  %240 = vmatpush1.msra.mxu0 0.0
  %241 = vmatprep.subr.mxu0 0.0
  %242 = vmatpush1.msra.mxu0 0.0
  %243 = vmatprep.subr.mxu0 0.0
  %244 = vmatpush1.msra.mxu0 0.0
  %245 = vmatprep.subr.mxu0 0.0
  %246 = vmatpush1.msra.mxu0 0.0
  %247 = vmatprep.mubr.f32.mxu0 0.0
  %248 = vmatmul.mubr.f32.gmra.mrb[0].mxu0 %v181
  %v249 = vpop.f32.mrb[0].mxu0
  %v250 = vadd.f32 0.0, %v249
  %v251 = vpop.f32.mrb[0].mxu0
  %252 = vdwg.mxu0
  %v254 = vsel %vm179, %v165, 0
  %256 = vmatprep.subr.mxu0 0.0
  %257 = vmatpush1.msra.mxu0 %v171
  %258 = vmatprep.subr.mxu0 0.0
  %259 = vmatpush1.msra.mxu0 %v172
  %260 = vmatprep.subr.mxu0 0.0
  %261 = vmatpush1.msra.mxu0 %v173
  %262 = vmatprep.subr.mxu0 0.0
  %263 = vmatpush1.msra.mxu0 %v174
  %264 = vmatprep.subr.mxu0 0.0
  %265 = vmatpush1.msra.mxu0 0.0
  %266 = vmatprep.subr.mxu0 0.0
  %267 = vmatpush1.msra.mxu0 0.0
  %268 = vmatprep.subr.mxu0 0.0
  %269 = vmatpush1.msra.mxu0 0.0
  %270 = vmatprep.subr.mxu0 0.0
  %271 = vmatpush1.msra.mxu0 0.0
  %272 = vmatprep.subr.mxu0 0.0
  %273 = vmatpush1.msra.mxu0 0.0
  %274 = vmatprep.subr.mxu0 0.0
  %275 = vmatpush1.msra.mxu0 0.0
  %276 = vmatprep.subr.mxu0 0.0
  %277 = vmatpush1.msra.mxu0 0.0
  %278 = vmatprep.subr.mxu0 0.0
  %279 = vmatpush1.msra.mxu0 0.0
  %280 = vmatprep.subr.mxu0 0.0
  %281 = vmatpush1.msra.mxu0 0.0
  %282 = vmatprep.subr.mxu0 0.0
  %283 = vmatpush1.msra.mxu0 0.0
  %284 = vmatprep.subr.mxu0 0.0
  %285 = vmatpush1.msra.mxu0 0.0
  %286 = vmatprep.subr.mxu0 0.0
  %287 = vmatpush1.msra.mxu0 0.0
  %288 = vmatprep.subr.mxu0 0.0
  %289 = vmatpush1.msra.mxu0 0.0
  %290 = vmatprep.subr.mxu0 0.0
  %291 = vmatpush1.msra.mxu0 0.0
  %292 = vmatprep.subr.mxu0 0.0
  %293 = vmatpush1.msra.mxu0 0.0
  %294 = vmatprep.subr.mxu0 0.0
  %295 = vmatpush1.msra.mxu0 0.0
  %296 = vmatprep.subr.mxu0 0.0
  %297 = vmatpush1.msra.mxu0 0.0
  %298 = vmatprep.subr.mxu0 0.0
  %299 = vmatpush1.msra.mxu0 0.0
  %300 = vmatprep.subr.mxu0 0.0
  %301 = vmatpush1.msra.mxu0 0.0
  %302 = vmatprep.subr.mxu0 0.0
  %303 = vmatpush1.msra.mxu0 0.0
  %304 = vmatprep.subr.mxu0 0.0
  %305 = vmatpush1.msra.mxu0 0.0
  %306 = vmatprep.subr.mxu0 0.0
  %307 = vmatpush1.msra.mxu0 0.0
  %308 = vmatprep.subr.mxu0 0.0
  %309 = vmatpush1.msra.mxu0 0.0
  %310 = vmatprep.subr.mxu0 0.0
  %311 = vmatpush1.msra.mxu0 0.0
  %312 = vmatprep.subr.mxu0 0.0
  %313 = vmatpush1.msra.mxu0 0.0
  %314 = vmatprep.subr.mxu0 0.0
  %315 = vmatpush1.msra.mxu0 0.0
  %316 = vmatprep.subr.mxu0 0.0
  %317 = vmatpush1.msra.mxu0 0.0
  %318 = vmatprep.subr.mxu0 0.0
  %319 = vmatpush1.msra.mxu0 0.0
  %320 = vmatprep.mubr.f32.mxu0 0.0
  %321 = vmatmul.mubr.f32.gmra.mrb[0].mxu0 %v254
  %v322 = vpop.f32.mrb[0].mxu0
  %v323 = vadd.f32 %v250, %v322
  %v324 = vpop.f32.mrb[0].mxu0
  %325 = vdwg.mxu0
  %v326 = vld [vmem:[%s2] sm:$0xff]
  %328 = vset.pattern.permute.xlu0 0
  %329 = vperm.xlu0 %328, %v326
  %v330 = vpop.permute.xlu0 %329
  %v332 = vadd.f32 %v323, %v330
  %vm333 = vcmp.ge.f32.partialorder %v332, 0.0
  %v334 = vmul.f32 %v332, 0.1
  %v335 = vsel %vm333, %v332, %v334
  %vm336 = vcmask 3072
  %337 = vst.msk [vmem:[#allocation4] sm:$0xf] %vm336, 0
  %vm338 = vcmask 273672
  %339 = vst.msk [vmem:[#allocation4] sm:$0xf] %vm338, 0
  %v340 = vpack.c.bf16 %v335, %v335
  %v342 = vunpack.c.l.b16 %v340
  %v343 = vpack.c.b16 %v342, %v342
  %344 = vrot.lane.b32.xlu0 %v343, 1
  %v345 = vpop.permute.xlu0 %344
  %vm347 = vcmask 265224
  %348 = vst.msk [vmem:[#allocation4] sm:$0xf] %vm347, %v345
  %s349 = scalar_lea.vmem [#allocation4], 4
  %350 = vst.msk [vmem:[%s349] sm:$0xf] %vm336, 0
  %351 = vst.msk [vmem:[%s349] sm:$0xf] %vm338, 0
  %352 = vrot.lane.b32.xlu0 %v343, 97
  %v353 = vpop.permute.xlu0 %352
  %355 = vst.msk [vmem:[%s349] sm:$0xf] %vm347, %v353
  %v356 = vld [vmem:[#allocation4] sm:$0xf]
  %vm357 = vcmask 257024
  %358 = vst.msk [vmem:[#allocation5] sm:$0xf] %vm357, %v356
  %v359 = vld [vmem:[#allocation4] sm:$0xf]
  %361 = vrot.lane.b32.xlu0 %v359, 127
  %v362 = vpop.permute.xlu0 %361
  %364 = vst.msk [vmem:[#allocation5 + $0x4] sm:$0xf] %vm357, %v362
  %v365 = vld [vmem:[#allocation4] sm:$0xf]
  %367 = vrot.lane.b32.xlu0 %v365, 126
  %v368 = vpop.permute.xlu0 %367
  %370 = vst.msk [vmem:[#allocation5 + $0x8] sm:$0xf] %vm357, %v368
  %v371 = vld [vmem:[%s349] sm:$0xf]
  %373 = vrot.lane.b32.xlu0 %v371, 32
  %v374 = vpop.permute.xlu0 %373
  %vm376 = vcmask 519424
  %377 = vst.msk [vmem:[#allocation5] sm:$0xf] %vm376, %v374
  %v378 = vld [vmem:[%s349] sm:$0xf]
  %380 = vrot.lane.b32.xlu0 %v378, 31
  %v381 = vpop.permute.xlu0 %380
  %383 = vst.msk [vmem:[#allocation5 + $0x4] sm:$0xf] %vm376, %v381
  %v384 = vld [vmem:[%s349] sm:$0xf]
  %386 = vrot.lane.b32.xlu0 %v384, 30
  %v387 = vpop.permute.xlu0 %386
  %389 = vst.msk [vmem:[#allocation5 + $0x8] sm:$0xf] %vm376, %v387
  %v390 = vld [vmem:[%s5] sm:$0xf]
  %v391 = vld [vmem:[#allocation5] sm:$0xf]
  %v392 = vld [vmem:[#allocation5 + $0x4] sm:$0xf]
  %v393 = vld [vmem:[#allocation5 + $0x8] sm:$0xf]
  %v394 = vld [vmem:[%s6] sm:$0xff]
  %396 = vset.pattern.permute.xlu0 0
  %397 = vperm.xlu0 %396, %v394
  %v398 = vpop.permute.xlu0 %397
  %v403 = vunpack.c.l.b16 %v391
  %v404 = vunpack.c.l.b16 %v392
  %v405 = vunpack.c.l.b16 %v393
  %v406 = vpack.c.b16 %v404, %v403
  %v407 = vpack.c.b16 %v405, %v405
  %vm409 = vcmask 195584
  %v411 = vsel %vm409, %v390, 0
  %vm413 = vcmask 1043456
  %v415 = vsel %vm413, %v407, 0
  %417 = vmatprep.subr.bf16.mxu0 0
  %418 = vmatpush1.bf16.msra.mxu0 %v406
  %419 = vmatprep.subr.bf16.mxu0 0
  %420 = vmatpush1.bf16.msra.mxu0 %v415
  %421 = vmatprep.subr.bf16.mxu0 0
  %422 = vmatpush1.bf16.msra.mxu0 0
  %423 = vmatprep.subr.bf16.mxu0 0
  %424 = vmatpush1.bf16.msra.mxu0 0
  %425 = vmatprep.subr.bf16.mxu0 0
  %426 = vmatpush1.bf16.msra.mxu0 0
  %427 = vmatprep.subr.bf16.mxu0 0
  %428 = vmatpush1.bf16.msra.mxu0 0
  %429 = vmatprep.subr.bf16.mxu0 0
  %430 = vmatpush1.bf16.msra.mxu0 0
  %431 = vmatprep.subr.bf16.mxu0 0
  %432 = vmatpush1.bf16.msra.mxu0 0
  %433 = vmatprep.subr.bf16.mxu0 0
  %434 = vmatpush1.bf16.msra.mxu0 0
  %435 = vmatprep.subr.bf16.mxu0 0
  %436 = vmatpush1.bf16.msra.mxu0 0
  %437 = vmatprep.subr.bf16.mxu0 0
  %438 = vmatpush1.bf16.msra.mxu0 0
  %439 = vmatprep.subr.bf16.mxu0 0
  %440 = vmatpush1.bf16.msra.mxu0 0
  %441 = vmatprep.subr.bf16.mxu0 0
  %442 = vmatpush1.bf16.msra.mxu0 0
  %443 = vmatprep.subr.bf16.mxu0 0
  %444 = vmatpush1.bf16.msra.mxu0 0
  %445 = vmatprep.subr.bf16.mxu0 0
  %446 = vmatpush1.bf16.msra.mxu0 0
  %447 = vmatprep.subr.bf16.mxu0 0
  %448 = vmatpush1.bf16.msra.mxu0 0
  %449 = vmatprep.mubr.bf16.mxu0 0
  %450 = vmatmul.mubr.bf16.gmra.mrb[0].mxu0 %v411
  %v451 = vpop.f32.mrb[0].mxu0
  %v452 = vadd.f32 %v398, %v451
  %v453 = vpop.f32.mrb[0].mxu0
  %v454 = vpop.f32.mrb[0].mxu0
  %v455 = vpop.f32.mrb[0].mxu0
  %456 = vdwg.mxu0
  %v457 = vadd.f32 %v452, %v332
  %vm458 = vcmp.ge.f32.partialorder %v457, 0.0
  %v459 = vmul.f32 %v457, 0.1
  %v460 = vsel %vm458, %v457, %v459
  %vm461 = vcmask 19456
  %462 = vst.msk [vmem:[#allocation4] sm:$0xf] %vm461, 0
  %vm463 = vcmask 306456
  %464 = vst.msk [vmem:[#allocation4] sm:$0xf] %vm463, 0
  %v465 = vpack.c.bf16 %v460, %v460
  %v467 = vunpack.c.l.b16 %v465
  %v468 = vpack.c.b16 %v467, %v467
  %469 = vrot.lane.b32.xlu0 %v468, 3
  %v470 = vpop.permute.xlu0 %469
  %vm472 = vcmask 281624
  %473 = vst.msk [vmem:[#allocation4] sm:$0xf] %vm472, %v470
  %474 = vst.msk [vmem:[%s349] sm:$0xf] %vm461, 0
  %475 = vst.msk [vmem:[%s349] sm:$0xf] %vm463, 0
  %476 = vrot.lane.b32.xlu0 %v468, 99
  %v477 = vpop.permute.xlu0 %476
  %479 = vst.msk [vmem:[%s349] sm:$0xf] %vm472, %v477
  %v480 = vld [vmem:[#allocation4] sm:$0xf]
  %481 = vst.msk [vmem:[#allocation5] sm:$0xf] %vm357, %v480
  %v482 = vld [vmem:[#allocation4] sm:$0xf]
  %484 = vrot.lane.b32.xlu0 %v482, 125
  %v485 = vpop.permute.xlu0 %484
  %487 = vst.msk [vmem:[#allocation5 + $0x4] sm:$0xf] %vm357, %v485
  %v488 = vld [vmem:[#allocation4] sm:$0xf]
  %490 = vrot.lane.b32.xlu0 %v488, 122
  %v491 = vpop.permute.xlu0 %490
  %493 = vst.msk [vmem:[#allocation5 + $0x8] sm:$0xf] %vm357, %v491
  %v494 = vld [vmem:[%s349] sm:$0xf]
  %496 = vrot.lane.b32.xlu0 %v494, 32
  %v497 = vpop.permute.xlu0 %496
  %499 = vst.msk [vmem:[#allocation5] sm:$0xf] %vm376, %v497
  %v500 = vld [vmem:[%s349] sm:$0xf]
  %502 = vrot.lane.b32.xlu0 %v500, 29
  %v503 = vpop.permute.xlu0 %502
  %505 = vst.msk [vmem:[#allocation5 + $0x4] sm:$0xf] %vm376, %v503
  %v506 = vld [vmem:[%s349] sm:$0xf]
  %508 = vrot.lane.b32.xlu0 %v506, 26
  %v509 = vpop.permute.xlu0 %508
  %511 = vst.msk [vmem:[#allocation5 + $0x8] sm:$0xf] %vm376, %v509
  %v512 = vld [vmem:[%s7] sm:$0xf]
  %v513 = vld [vmem:[#allocation5] sm:$0xf]
  %v514 = vld [vmem:[#allocation5 + $0x4] sm:$0xf]
  %v515 = vld [vmem:[#allocation5 + $0x8] sm:$0xf]
  %v516 = vld [vmem:[%s8] sm:$0xff]
  %518 = vset.pattern.permute.xlu0 0
  %519 = vperm.xlu0 %518, %v516
  %v520 = vpop.permute.xlu0 %519
  %v525 = vunpack.c.l.b16 %v513
  %v526 = vunpack.c.l.b16 %v514
  %v527 = vunpack.c.l.b16 %v515
  %v528 = vpack.c.b16 %v526, %v525
  %v529 = vpack.c.b16 %v527, %v527
  %v532 = vsel %vm409, %v512, 0
  %v535 = vsel %vm413, %v529, 0
  %537 = vmatprep.subr.bf16.mxu0 0
  %538 = vmatpush1.bf16.msra.mxu0 %v528
  %539 = vmatprep.subr.bf16.mxu0 0
  %540 = vmatpush1.bf16.msra.mxu0 %v535
  %541 = vmatprep.subr.bf16.mxu0 0
  %542 = vmatpush1.bf16.msra.mxu0 0
  %543 = vmatprep.subr.bf16.mxu0 0
  %544 = vmatpush1.bf16.msra.mxu0 0
  %545 = vmatprep.subr.bf16.mxu0 0
  %546 = vmatpush1.bf16.msra.mxu0 0
  %547 = vmatprep.subr.bf16.mxu0 0
  %548 = vmatpush1.bf16.msra.mxu0 0
  %549 = vmatprep.subr.bf16.mxu0 0
  %550 = vmatpush1.bf16.msra.mxu0 0
  %551 = vmatprep.subr.bf16.mxu0 0
  %552 = vmatpush1.bf16.msra.mxu0 0
  %553 = vmatprep.subr.bf16.mxu0 0
  %554 = vmatpush1.bf16.msra.mxu0 0
  %555 = vmatprep.subr.bf16.mxu0 0
  %556 = vmatpush1.bf16.msra.mxu0 0
  %557 = vmatprep.subr.bf16.mxu0 0
  %558 = vmatpush1.bf16.msra.mxu0 0
  %559 = vmatprep.subr.bf16.mxu0 0
  %560 = vmatpush1.bf16.msra.mxu0 0
  %561 = vmatprep.subr.bf16.mxu0 0
  %562 = vmatpush1.bf16.msra.mxu0 0
  %563 = vmatprep.subr.bf16.mxu0 0
  %564 = vmatpush1.bf16.msra.mxu0 0
  %565 = vmatprep.subr.bf16.mxu0 0
  %566 = vmatpush1.bf16.msra.mxu0 0
  %567 = vmatprep.subr.bf16.mxu0 0
  %568 = vmatpush1.bf16.msra.mxu0 0
  %569 = vmatprep.mubr.bf16.mxu0 0
  %570 = vmatmul.mubr.bf16.gmra.mrb[0].mxu0 %v532
  %v571 = vpop.f32.mrb[0].mxu0
  %v572 = vadd.f32 %v520, %v571
  %v573 = vpop.f32.mrb[0].mxu0
  %v574 = vpop.f32.mrb[0].mxu0
  %v575 = vpop.f32.mrb[0].mxu0
  %576 = vdwg.mxu0
  %v577 = vadd.f32 %v572, %v457
  %v578 = vadd.f32 %v577, 0.0
  %vm579 = vcmask 11264
  %580 = vst.msk [vmem:[#allocation4] sm:$0xf] %vm579, 0
  %vm581 = vcmask 290064
  %582 = vst.msk [vmem:[#allocation4] sm:$0xf] %vm581, 0
  %583 = vrot.lane.b32.xlu0 %v343, 2
  %v584 = vpop.permute.xlu0 %583
  %vm586 = vcmask 273424
  %587 = vst.msk [vmem:[#allocation4] sm:$0xf] %vm586, %v584
  %588 = vst.msk [vmem:[%s349] sm:$0xf] %vm579, 0
  %589 = vst.msk [vmem:[%s349] sm:$0xf] %vm581, 0
  %590 = vrot.lane.b32.xlu0 %v343, 98
  %v591 = vpop.permute.xlu0 %590
  %593 = vst.msk [vmem:[%s349] sm:$0xf] %vm586, %v591
  %v594 = vld [vmem:[#allocation4] sm:$0xf]
  %595 = vst.msk [vmem:[#allocation5] sm:$0xf] %vm357, %v594
  %v596 = vld [vmem:[#allocation4] sm:$0xf]
  %598 = vrot.lane.b32.xlu0 %v596, 127
  %v599 = vpop.permute.xlu0 %598
  %601 = vst.msk [vmem:[#allocation5 + $0x4] sm:$0xf] %vm357, %v599
  %v602 = vld [vmem:[#allocation4] sm:$0xf]
  %604 = vrot.lane.b32.xlu0 %v602, 126
  %v605 = vpop.permute.xlu0 %604
  %607 = vst.msk [vmem:[#allocation5 + $0x8] sm:$0xf] %vm357, %v605
  %v608 = vld [vmem:[#allocation4] sm:$0xf]
  %610 = vrot.lane.b32.xlu0 %v608, 125
  %v611 = vpop.permute.xlu0 %610
  %613 = vst.msk [vmem:[#allocation5 + $0xc] sm:$0xf] %vm357, %v611
  %v614 = vld [vmem:[#allocation4] sm:$0xf]
  %616 = vrot.lane.b32.xlu0 %v614, 124
  %v617 = vpop.permute.xlu0 %616
  %619 = vst.msk [vmem:[#allocation5 + $0x10] sm:$0xf] %vm357, %v617
  %v620 = vld [vmem:[%s349] sm:$0xf]
  %622 = vrot.lane.b32.xlu0 %v620, 32
  %v623 = vpop.permute.xlu0 %622
  %625 = vst.msk [vmem:[#allocation5] sm:$0xf] %vm376, %v623
  %v626 = vld [vmem:[%s349] sm:$0xf]
  %628 = vrot.lane.b32.xlu0 %v626, 31
  %v629 = vpop.permute.xlu0 %628
  %631 = vst.msk [vmem:[#allocation5 + $0x4] sm:$0xf] %vm376, %v629
  %v632 = vld [vmem:[%s349] sm:$0xf]
  %634 = vrot.lane.b32.xlu0 %v632, 30
  %v635 = vpop.permute.xlu0 %634
  %637 = vst.msk [vmem:[#allocation5 + $0x8] sm:$0xf] %vm376, %v635
  %v638 = vld [vmem:[%s349] sm:$0xf]
  %640 = vrot.lane.b32.xlu0 %v638, 29
  %v641 = vpop.permute.xlu0 %640
  %643 = vst.msk [vmem:[#allocation5 + $0xc] sm:$0xf] %vm376, %v641
  %v644 = vld [vmem:[%s349] sm:$0xf]
  %646 = vrot.lane.b32.xlu0 %v644, 28
  %v647 = vpop.permute.xlu0 %646
  %649 = vst.msk [vmem:[#allocation5 + $0x10] sm:$0xf] %vm376, %v647
  %v650 = vld [vmem:[%s9] sm:$0xf]
  %v651 = vld [vmem:[#allocation5] sm:$0xf]
  %v652 = vld [vmem:[#allocation5 + $0x4] sm:$0xf]
  %v653 = vld [vmem:[#allocation5 + $0x8] sm:$0xf]
  %v654 = vld [vmem:[#allocation5 + $0xc] sm:$0xf]
  %v655 = vld [vmem:[#allocation5 + $0x10] sm:$0xf]
  %v656 = vld [vmem:[%s10] sm:$0xff]
  %658 = vset.pattern.permute.xlu0 0
  %659 = vperm.xlu0 %658, %v656
  %v660 = vpop.permute.xlu0 %659
  %v667 = vunpack.c.l.b16 %v651
  %v668 = vunpack.c.l.b16 %v652
  %v669 = vunpack.c.l.b16 %v653
  %v670 = vunpack.c.l.b16 %v654
  %v671 = vunpack.c.l.b16 %v655
  %v672 = vpack.c.b16 %v668, %v667
  %v673 = vpack.c.b16 %v670, %v669
  %v674 = vpack.c.b16 %v671, %v671
  %vm677 = vcmask 326656
  %v679 = vsel %vm677, %v650, 0
  %v682 = vsel %vm413, %v674, 0
  %684 = vmatprep.subr.bf16.mxu0 0
  %685 = vmatpush1.bf16.msra.mxu0 %v672
  %686 = vmatprep.subr.bf16.mxu0 0
  %687 = vmatpush1.bf16.msra.mxu0 %v673
  %688 = vmatprep.subr.bf16.mxu0 0
  %689 = vmatpush1.bf16.msra.mxu0 %v682
  %690 = vmatprep.subr.bf16.mxu0 0
  %691 = vmatpush1.bf16.msra.mxu0 0
  %692 = vmatprep.subr.bf16.mxu0 0
  %693 = vmatpush1.bf16.msra.mxu0 0
  %694 = vmatprep.subr.bf16.mxu0 0
  %695 = vmatpush1.bf16.msra.mxu0 0
  %696 = vmatprep.subr.bf16.mxu0 0
  %697 = vmatpush1.bf16.msra.mxu0 0
  %698 = vmatprep.subr.bf16.mxu0 0
  %699 = vmatpush1.bf16.msra.mxu0 0
  %700 = vmatprep.subr.bf16.mxu0 0
  %701 = vmatpush1.bf16.msra.mxu0 0
  %702 = vmatprep.subr.bf16.mxu0 0
  %703 = vmatpush1.bf16.msra.mxu0 0
  %704 = vmatprep.subr.bf16.mxu0 0
  %705 = vmatpush1.bf16.msra.mxu0 0
  %706 = vmatprep.subr.bf16.mxu0 0
  %707 = vmatpush1.bf16.msra.mxu0 0
  %708 = vmatprep.subr.bf16.mxu0 0
  %709 = vmatpush1.bf16.msra.mxu0 0
  %710 = vmatprep.subr.bf16.mxu0 0
  %711 = vmatpush1.bf16.msra.mxu0 0
  %712 = vmatprep.subr.bf16.mxu0 0
  %713 = vmatpush1.bf16.msra.mxu0 0
  %714 = vmatprep.subr.bf16.mxu0 0
  %715 = vmatpush1.bf16.msra.mxu0 0
  %716 = vmatprep.mubr.bf16.mxu0 0
  %717 = vmatmul.mubr.bf16.gmra.mrb[0].mxu0 %v679
  %v718 = vpop.f32.mrb[0].mxu0
  %v719 = vadd.f32 %v660, %v718
  %v720 = vpop.f32.mrb[0].mxu0
  %v721 = vpop.f32.mrb[0].mxu0
  %v722 = vpop.f32.mrb[0].mxu0
  %723 = vdwg.mxu0
  %v724 = vadd.f32 %v719, %v332
  %vm725 = vcmp.ge.f32.partialorder %v724, 0.0
  %v726 = vmul.f32 %v724, 0.1
  %v727 = vsel %vm725, %v724, %v726
  %vm728 = vcmask 44032
  %729 = vst.msk [vmem:[#allocation4] sm:$0xf] %vm728, 0
  %vm730 = vcmask 355632
  %731 = vst.msk [vmem:[#allocation4] sm:$0xf] %vm730, 0
  %v732 = vpack.c.bf16 %v727, %v727
  %v734 = vunpack.c.l.b16 %v732
  %v735 = vpack.c.b16 %v734, %v734
  %736 = vrot.lane.b32.xlu0 %v735, 6
  %v737 = vpop.permute.xlu0 %736
  %vm739 = vcmask 306224
  %740 = vst.msk [vmem:[#allocation4] sm:$0xf] %vm739, %v737
  %741 = vst.msk [vmem:[%s349] sm:$0xf] %vm728, 0
  %742 = vst.msk [vmem:[%s349] sm:$0xf] %vm730, 0
  %743 = vrot.lane.b32.xlu0 %v735, 102
  %v744 = vpop.permute.xlu0 %743
  %746 = vst.msk [vmem:[%s349] sm:$0xf] %vm739, %v744
  %v747 = vld [vmem:[#allocation4] sm:$0xf]
  %748 = vst.msk [vmem:[#allocation5] sm:$0xf] %vm357, %v747
  %v749 = vld [vmem:[#allocation4] sm:$0xf]
  %751 = vrot.lane.b32.xlu0 %v749, 125
  %v752 = vpop.permute.xlu0 %751
  %754 = vst.msk [vmem:[#allocation5 + $0x4] sm:$0xf] %vm357, %v752
  %v755 = vld [vmem:[#allocation4] sm:$0xf]
  %757 = vrot.lane.b32.xlu0 %v755, 122
  %v758 = vpop.permute.xlu0 %757
  %760 = vst.msk [vmem:[#allocation5 + $0x8] sm:$0xf] %vm357, %v758
  %v761 = vld [vmem:[#allocation4] sm:$0xf]
  %763 = vrot.lane.b32.xlu0 %v761, 119
  %v764 = vpop.permute.xlu0 %763
  %766 = vst.msk [vmem:[#allocation5 + $0xc] sm:$0xf] %vm357, %v764
  %v767 = vld [vmem:[#allocation4] sm:$0xf]
  %769 = vrot.lane.b32.xlu0 %v767, 116
  %v770 = vpop.permute.xlu0 %769
  %772 = vst.msk [vmem:[#allocation5 + $0x10] sm:$0xf] %vm357, %v770
  %v773 = vld [vmem:[%s349] sm:$0xf]
  %775 = vrot.lane.b32.xlu0 %v773, 32
  %v776 = vpop.permute.xlu0 %775
  %778 = vst.msk [vmem:[#allocation5] sm:$0xf] %vm376, %v776
  %v779 = vld [vmem:[%s349] sm:$0xf]
  %781 = vrot.lane.b32.xlu0 %v779, 29
  %v782 = vpop.permute.xlu0 %781
  %784 = vst.msk [vmem:[#allocation5 + $0x4] sm:$0xf] %vm376, %v782
  %v785 = vld [vmem:[%s349] sm:$0xf]
  %787 = vrot.lane.b32.xlu0 %v785, 26
  %v788 = vpop.permute.xlu0 %787
  %790 = vst.msk [vmem:[#allocation5 + $0x8] sm:$0xf] %vm376, %v788
  %v791 = vld [vmem:[%s349] sm:$0xf]
  %793 = vrot.lane.b32.xlu0 %v791, 23
  %v794 = vpop.permute.xlu0 %793
  %796 = vst.msk [vmem:[#allocation5 + $0xc] sm:$0xf] %vm376, %v794
  %v797 = vld [vmem:[%s349] sm:$0xf]
  %799 = vrot.lane.b32.xlu0 %v797, 20
  %v800 = vpop.permute.xlu0 %799
  %802 = vst.msk [vmem:[#allocation5 + $0x10] sm:$0xf] %vm376, %v800
  %v803 = vld [vmem:[%s11] sm:$0xf]
  %v804 = vld [vmem:[#allocation5] sm:$0xf]
  %v805 = vld [vmem:[#allocation5 + $0x4] sm:$0xf]
  %v806 = vld [vmem:[#allocation5 + $0x8] sm:$0xf]
  %v807 = vld [vmem:[#allocation5 + $0xc] sm:$0xf]
  %v808 = vld [vmem:[#allocation5 + $0x10] sm:$0xf]
  %v809 = vld [vmem:[%s12] sm:$0xff]
  %811 = vset.pattern.permute.xlu0 0
  %812 = vperm.xlu0 %811, %v809
  %v813 = vpop.permute.xlu0 %812
  %v820 = vunpack.c.l.b16 %v804
  %v821 = vunpack.c.l.b16 %v805
  %v822 = vunpack.c.l.b16 %v806
  %v823 = vunpack.c.l.b16 %v807
  %v824 = vunpack.c.l.b16 %v808
  %v825 = vpack.c.b16 %v821, %v820
  %v826 = vpack.c.b16 %v823, %v822
  %v827 = vpack.c.b16 %v824, %v824
  %v831 = vsel %vm677, %v803, 0
  %v834 = vsel %vm413, %v827, 0
  %836 = vmatprep.subr.bf16.mxu0 0
  %837 = vmatpush1.bf16.msra.mxu0 %v825
  %838 = vmatprep.subr.bf16.mxu0 0
  %839 = vmatpush1.bf16.msra.mxu0 %v826
  %840 = vmatprep.subr.bf16.mxu0 0
  %841 = vmatpush1.bf16.msra.mxu0 %v834
  %842 = vmatprep.subr.bf16.mxu0 0
  %843 = vmatpush1.bf16.msra.mxu0 0
  %844 = vmatprep.subr.bf16.mxu0 0
  %845 = vmatpush1.bf16.msra.mxu0 0
  %846 = vmatprep.subr.bf16.mxu0 0
  %847 = vmatpush1.bf16.msra.mxu0 0
  %848 = vmatprep.subr.bf16.mxu0 0
  %849 = vmatpush1.bf16.msra.mxu0 0
  %850 = vmatprep.subr.bf16.mxu0 0
  %851 = vmatpush1.bf16.msra.mxu0 0
  %852 = vmatprep.subr.bf16.mxu0 0
  %853 = vmatpush1.bf16.msra.mxu0 0
  %854 = vmatprep.subr.bf16.mxu0 0
  %855 = vmatpush1.bf16.msra.mxu0 0
  %856 = vmatprep.subr.bf16.mxu0 0
  %857 = vmatpush1.bf16.msra.mxu0 0
  %858 = vmatprep.subr.bf16.mxu0 0
  %859 = vmatpush1.bf16.msra.mxu0 0
  %860 = vmatprep.subr.bf16.mxu0 0
  %861 = vmatpush1.bf16.msra.mxu0 0
  %862 = vmatprep.subr.bf16.mxu0 0
  %863 = vmatpush1.bf16.msra.mxu0 0
  %864 = vmatprep.subr.bf16.mxu0 0
  %865 = vmatpush1.bf16.msra.mxu0 0
  %866 = vmatprep.subr.bf16.mxu0 0
  %867 = vmatpush1.bf16.msra.mxu0 0
  %868 = vmatprep.mubr.bf16.mxu0 0
  %869 = vmatmul.mubr.bf16.gmra.mrb[0].mxu0 %v831
  %v870 = vpop.f32.mrb[0].mxu0
  %v871 = vadd.f32 %v813, %v870
  %v872 = vpop.f32.mrb[0].mxu0
  %v873 = vpop.f32.mrb[0].mxu0
  %v874 = vpop.f32.mrb[0].mxu0
  %875 = vdwg.mxu0
  %v876 = vadd.f32 %v871, %v724
  %v877 = vadd.f32 %v578, %v876
  %v878 = vmul.f32 %v877, 0.5
  %879 = vst.msk [vmem:[%s13] sm:$0xff] %vm179, %v878
  %881 = vrot.lane.b32.xlu0 %v878, 96
  %v882 = vpop.permute.xlu0 %881
  %s884 = scalar_lea.vmem %s13, 8
  %885 = vst.msk [vmem:[%s884] sm:$0xff] %vm179, %v882
  // Predicated region
  $region54: #{_lambda_.6} parent=0 // pred_check
    _
  $region55: #{_lambda_.6} parent=0 // pred_check_branch
    %887 = sbr.rel (0) target = $region57
  $region56: #{_lambda_.6} parent=0 // pred_region
    _
  $region57: #{_lambda_.6} parent=0 // pred_fallthru
    _
  // Predicated region
  $region58: #{_lambda_.6} parent=0 // pred_check
    _
  $region59: #{_lambda_.6} parent=0 // pred_check_branch
    %889 = sbr.rel (0) target = $region61
  $region60: #{_lambda_.6} parent=0 // pred_region
    _
  $region61: #{_lambda_.6} parent=0 // pred_fallthru
    _

// kernel: _lambda_.5
$region0: #{_lambda_.5}
  #allocation0 [shape = 'u32[]', space=smem, size = 0x4, offset = 0x4, fixed_abs, tag = 'smem constant byte address 0x4 - core index']
  #allocation1 [shape = 'u32[144,128]{1,0:T(1,128)}', space=vmem, size = 0x12000, scoped, tag = 'internal scratch']
  #allocation2 [shape = 'bf16[2,32,10]{2,1,0:T(16,128)(2,1)}', space=vmem, size = 0x4000, scoped, tag = 'scratch operand']
  #allocation3 [shape = 'bf16[96,16]{1,0:T(16,128)(2,1)}', space=vmem, size = 0x6000, scoped, tag = 'scratch operand']
  #allocation4 [shape = 'bf16[2,16,28]{2,1,0:T(16,128)(2,1)}', space=vmem, size = 0x2000, scoped, tag = 'scratch operand']
  #allocation5 [shape = 'bf16[80,32]{1,0:T(16,128)(2,1)}', space=vmem, size = 0x5000, scoped, tag = 'scratch operand']
  %s0 = inlined_call_operand.vmem [shape: f32[2,32,8], index: 0, kind: input, shape index: {}]
  %s1 = inlined_call_operand.vmem [shape: bf16[32,96], index: 1, kind: input, shape index: {}]
  %s2 = inlined_call_operand.vmem [shape: f32[16,1], index: 2, kind: input, shape index: {}]
  %s3 = inlined_call_operand.vmem [shape: f32[16,32], index: 3, kind: input, shape index: {}]
  %s4 = inlined_call_operand.vmem [shape: f32[16,32], index: 4, kind: input, shape index: {}]
  %s5 = inlined_call_operand.vmem [shape: bf16[16,48], index: 5, kind: input, shape index: {}]
  %s6 = inlined_call_operand.vmem [shape: f32[16,1], index: 6, kind: input, shape index: {}]
  %s7 = inlined_call_operand.vmem [shape: bf16[16,48], index: 7, kind: input, shape index: {}]
  %s8 = inlined_call_operand.vmem [shape: f32[16,1], index: 8, kind: input, shape index: {}]
  %s9 = inlined_call_operand.vmem [shape: bf16[16,80], index: 9, kind: input, shape index: {}]
  %s10 = inlined_call_operand.vmem [shape: f32[16,1], index: 10, kind: input, shape index: {}]
  %s11 = inlined_call_operand.vmem [shape: bf16[16,80], index: 11, kind: input, shape index: {}]
  %s12 = inlined_call_operand.vmem [shape: f32[16,1], index: 12, kind: input, shape index: {}]
  %s13 = inlined_call_operand.vmem [shape: f32[2,16,16], index: 13, kind: output, shape index: {}]
  %s14 = sld [smem:[#allocation0]]
  $region62: #{_lambda_.5} parent=0
    _
  %s16 = ssub.s32 1, %s14
  %s17 = scalar_select 0, %s16, %s14
  // Predicated region
  $region2: #{_lambda_.5} parent=0 // pred_check
    _
  $region3: #{_lambda_.5} parent=0 // pred_check_branch
    %19 = sbr.rel (0) target = $region5
  $region4: #{_lambda_.5} parent=0 // pred_region
    _
  $region5: #{_lambda_.5} parent=0 // pred_fallthru
    _
  // Predicated region
  $region6: #{_lambda_.5} parent=0 // pred_check
    _
  $region7: #{_lambda_.5} parent=0 // pred_check_branch
    %21 = sbr.rel (0) target = $region9
  $region8: #{_lambda_.5} parent=0 // pred_region
    _
  $region9: #{_lambda_.5} parent=0 // pred_fallthru
    _
  // Predicated region
  $region10: #{_lambda_.5} parent=0 // pred_check
    _
  $region11: #{_lambda_.5} parent=0 // pred_check_branch
    %23 = sbr.rel (0) target = $region13
  $region12: #{_lambda_.5} parent=0 // pred_region
    _
  $region13: #{_lambda_.5} parent=0 // pred_fallthru
    _
  // Predicated region
  $region14: #{_lambda_.5} parent=0 // pred_check
    _
  $region15: #{_lambda_.5} parent=0 // pred_check_branch
    %25 = sbr.rel (0) target = $region17
  $region16: #{_lambda_.5} parent=0 // pred_region
    _
  $region17: #{_lambda_.5} parent=0 // pred_fallthru
    _
  // Predicated region
  $region18: #{_lambda_.5} parent=0 // pred_check
    _
  $region19: #{_lambda_.5} parent=0 // pred_check_branch
    %27 = sbr.rel (0) target = $region21
  $region20: #{_lambda_.5} parent=0 // pred_region
    _
  $region21: #{_lambda_.5} parent=0 // pred_fallthru
    _
  // Predicated region
  $region22: #{_lambda_.5} parent=0 // pred_check
    _
  $region23: #{_lambda_.5} parent=0 // pred_check_branch
    %29 = sbr.rel (0) target = $region25
  $region24: #{_lambda_.5} parent=0 // pred_region
    _
  $region25: #{_lambda_.5} parent=0 // pred_fallthru
    _
  // Predicated region
  $region26: #{_lambda_.5} parent=0 // pred_check
    _
  $region27: #{_lambda_.5} parent=0 // pred_check_branch
    %31 = sbr.rel (0) target = $region29
  $region28: #{_lambda_.5} parent=0 // pred_region
    _
  $region29: #{_lambda_.5} parent=0 // pred_fallthru
    _
  // Predicated region
  $region30: #{_lambda_.5} parent=0 // pred_check
    _
  $region31: #{_lambda_.5} parent=0 // pred_check_branch
    %33 = sbr.rel (0) target = $region33
  $region32: #{_lambda_.5} parent=0 // pred_region
    _
  $region33: #{_lambda_.5} parent=0 // pred_fallthru
    _
  // Predicated region
  $region34: #{_lambda_.5} parent=0 // pred_check
    _
  $region35: #{_lambda_.5} parent=0 // pred_check_branch
    %35 = sbr.rel (0) target = $region37
  $region36: #{_lambda_.5} parent=0 // pred_region
    _
  $region37: #{_lambda_.5} parent=0 // pred_fallthru
    _
  // Predicated region
  $region38: #{_lambda_.5} parent=0 // pred_check
    _
  $region39: #{_lambda_.5} parent=0 // pred_check_branch
    %37 = sbr.rel (0) target = $region41
  $region40: #{_lambda_.5} parent=0 // pred_region
    _
  $region41: #{_lambda_.5} parent=0 // pred_fallthru
    _
  // Predicated region
  $region42: #{_lambda_.5} parent=0 // pred_check
    _
  $region43: #{_lambda_.5} parent=0 // pred_check_branch
    %39 = sbr.rel (0) target = $region45
  $region44: #{_lambda_.5} parent=0 // pred_region
    _
  $region45: #{_lambda_.5} parent=0 // pred_fallthru
    _
  // Predicated region
  $region46: #{_lambda_.5} parent=0 // pred_check
    _
  $region47: #{_lambda_.5} parent=0 // pred_check_branch
    %41 = sbr.rel (0) target = $region49
  $region48: #{_lambda_.5} parent=0 // pred_region
    _
  $region49: #{_lambda_.5} parent=0 // pred_fallthru
    _
  // Predicated region
  $region50: #{_lambda_.5} parent=0 // pred_check
    _
  $region51: #{_lambda_.5} parent=0 // pred_check_branch
    %43 = sbr.rel (0) target = $region53
  $region52: #{_lambda_.5} parent=0 // pred_region
    _
  $region53: #{_lambda_.5} parent=0 // pred_fallthru
    _
  %v45 = vld [vmem:[%s0] sm:$0xff]
  %v46 = vld [vmem:[%s0 + $0x8] sm:$0xff]
  %v47 = vld [vmem:[%s0 + $0x10] sm:$0xff]
  %v48 = vld [vmem:[%s0 + $0x18] sm:$0xff]
  %vm49 = vcmp.ge.f32.partialorder %v45, 0.0
  %vm50 = vcmp.ge.f32.partialorder %v46, 0.0
  %vm51 = vcmp.ge.f32.partialorder %v47, 0.0
  %vm52 = vcmp.ge.f32.partialorder %v48, 0.0
  %v53 = vmul.f32 %v45, 0.1
  %v54 = vmul.f32 %v46, 0.1
  %v55 = vmul.f32 %v47, 0.1
  %v56 = vmul.f32 %v48, 0.1
  %v57 = vsel %vm49, %v45, %v53
  %v58 = vsel %vm50, %v46, %v54
  %v59 = vsel %vm51, %v47, %v55
  %v60 = vsel %vm52, %v48, %v56
  %vm61 = vcmask 7168
  %62 = vst.msk [vmem:[#allocation2] sm:$0xff] %vm61, 0
  %63 = vst.msk [vmem:[#allocation2 + $0x8] sm:$0xff] %vm61, 0
  %vm64 = vcmask 80968
  %65 = vst.msk [vmem:[#allocation2] sm:$0xff] %vm64, 0
  %66 = vst.msk [vmem:[#allocation2 + $0x8] sm:$0xff] %vm64, 0
  %v67 = vpack.c.bf16 %v58, %v57
  %v68 = vpack.c.bf16 %v60, %v59
  %71 = vrot.lane.b32.xlu0 %v67, 1
  %v72 = vpop.permute.xlu0 %71
  %73 = vrot.lane.b32.xlu0 %v68, 1
  %v74 = vpop.permute.xlu0 %73
  %vm77 = vcmask 72712
  %78 = vst.msk [vmem:[#allocation2] sm:$0xff] %vm77, %v72
  %79 = vst.msk [vmem:[#allocation2 + $0x8] sm:$0xff] %vm77, %v74
  %s80 = scalar_lea.vmem %s0, 32
  %v81 = vld [vmem:[%s80] sm:$0xff]
  %v82 = vld [vmem:[%s80 + $0x8] sm:$0xff]
  %v83 = vld [vmem:[%s80 + $0x10] sm:$0xff]
  %v84 = vld [vmem:[%s80 + $0x18] sm:$0xff]
  %vm85 = vcmp.ge.f32.partialorder %v81, 0.0
  %vm86 = vcmp.ge.f32.partialorder %v82, 0.0
  %vm87 = vcmp.ge.f32.partialorder %v83, 0.0
  %vm88 = vcmp.ge.f32.partialorder %v84, 0.0
  %v89 = vmul.f32 %v81, 0.1
  %v90 = vmul.f32 %v82, 0.1
  %v91 = vmul.f32 %v83, 0.1
  %v92 = vmul.f32 %v84, 0.1
  %v93 = vsel %vm85, %v81, %v89
  %v94 = vsel %vm86, %v82, %v90
  %v95 = vsel %vm87, %v83, %v91
  %v96 = vsel %vm88, %v84, %v92
  %s97 = scalar_lea.vmem [#allocation2], 16
  %98 = vst.msk [vmem:[%s97] sm:$0xff] %vm61, 0
  %99 = vst.msk [vmem:[%s97 + $0x8] sm:$0xff] %vm61, 0
  %100 = vst.msk [vmem:[%s97] sm:$0xff] %vm64, 0
  %101 = vst.msk [vmem:[%s97 + $0x8] sm:$0xff] %vm64, 0
  %v102 = vpack.c.bf16 %v94, %v93
  %v103 = vpack.c.bf16 %v96, %v95
  %106 = vrot.lane.b32.xlu0 %v102, 1
  %v107 = vpop.permute.xlu0 %106
  %108 = vrot.lane.b32.xlu0 %v103, 1
  %v109 = vpop.permute.xlu0 %108
  %112 = vst.msk [vmem:[%s97] sm:$0xff] %vm77, %v107
  %113 = vst.msk [vmem:[%s97 + $0x8] sm:$0xff] %vm77, %v109
  %v114 = vld [vmem:[#allocation2] sm:$0xff]
  %v115 = vld [vmem:[#allocation2 + $0x8] sm:$0xff]
  %118 = vrot.lane.b32.xlu0 %v114, 126
  %v119 = vpop.permute.xlu0 %118
  %120 = vrot.lane.b32.xlu0 %v115, 126
  %v121 = vpop.permute.xlu0 %120
  %vm124 = vcmask 64512
  %125 = vst.msk [vmem:[#allocation3] sm:$0xff] %vm124, %v119
  %126 = vst.msk [vmem:[#allocation3 + $0x8] sm:$0xff] %vm124, %v121
  %v127 = vld [vmem:[#allocation2] sm:$0xff]
  %v128 = vld [vmem:[#allocation2 + $0x8] sm:$0xff]
  %131 = vrot.lane.b32.xlu0 %v127, 127
  %v132 = vpop.permute.xlu0 %131
  %133 = vrot.lane.b32.xlu0 %v128, 127
  %v134 = vpop.permute.xlu0 %133
  %137 = vst.msk [vmem:[#allocation3 + $0x10] sm:$0xff] %vm124, %v132
  %138 = vst.msk [vmem:[#allocation3 + $0x18] sm:$0xff] %vm124, %v134
  %v139 = vld [vmem:[#allocation2] sm:$0xff]
  %v140 = vld [vmem:[#allocation2 + $0x8] sm:$0xff]
  %141 = vst.msk [vmem:[#allocation3 + $0x20] sm:$0xff] %vm124, %v139
  %142 = vst.msk [vmem:[#allocation3 + $0x28] sm:$0xff] %vm124, %v140
  %v143 = vld [vmem:[%s97] sm:$0xff]
  %v144 = vld [vmem:[%s97 + $0x8] sm:$0xff]
  %147 = vrot.lane.b32.xlu0 %v143, 6
  %v148 = vpop.permute.xlu0 %147
  %149 = vrot.lane.b32.xlu0 %v144, 6
  %v150 = vpop.permute.xlu0 %149
  %vm153 = vcmask 130112
  %154 = vst.msk [vmem:[#allocation3] sm:$0xff] %vm153, %v148
  %155 = vst.msk [vmem:[#allocation3 + $0x8] sm:$0xff] %vm153, %v150
  %v156 = vld [vmem:[%s97] sm:$0xff]
  %v157 = vld [vmem:[%s97 + $0x8] sm:$0xff]
  %160 = vrot.lane.b32.xlu0 %v156, 7
  %v161 = vpop.permute.xlu0 %160
  %162 = vrot.lane.b32.xlu0 %v157, 7
  %v163 = vpop.permute.xlu0 %162
  %166 = vst.msk [vmem:[#allocation3 + $0x10] sm:$0xff] %vm153, %v161
  %167 = vst.msk [vmem:[#allocation3 + $0x18] sm:$0xff] %vm153, %v163
  %v168 = vld [vmem:[%s97] sm:$0xff]
  %v169 = vld [vmem:[%s97 + $0x8] sm:$0xff]
  %172 = vrot.lane.b32.xlu0 %v168, 8
  %v173 = vpop.permute.xlu0 %172
  %174 = vrot.lane.b32.xlu0 %v169, 8
  %v175 = vpop.permute.xlu0 %174
  %178 = vst.msk [vmem:[#allocation3 + $0x20] sm:$0xff] %vm153, %v173
  %179 = vst.msk [vmem:[#allocation3 + $0x28] sm:$0xff] %vm153, %v175
  %v180 = vld [vmem:[%s1] sm:$0xf]
  %v181 = vld [vmem:[%s1 + $0x4] sm:$0xf]
  %v182 = vld [vmem:[%s1 + $0x8] sm:$0xf]
  %v183 = vld [vmem:[%s1 + $0xc] sm:$0xf]
  %v184 = vld [vmem:[#allocation3] sm:$0xff]
  %v185 = vld [vmem:[#allocation3 + $0x8] sm:$0xff]
  %v186 = vld [vmem:[#allocation3 + $0x10] sm:$0xff]
  %v187 = vld [vmem:[#allocation3 + $0x18] sm:$0xff]
  %v188 = vld [vmem:[#allocation3 + $0x20] sm:$0xff]
  %v189 = vld [vmem:[#allocation3 + $0x28] sm:$0xff]
  %v194 = vunpack.c.l.b16 %v180
  %v195 = vunpack.c.l.b16 %v181
  %v196 = vunpack.c.l.b16 %v182
  %v197 = vunpack.c.l.b16 %v183
  %v198 = vpack.c.b16 %v195, %v194
  %v199 = vpack.c.b16 %v197, %v196
  %vm200 = vcmask 785408
  %v202 = vsel %vm200, %v198, 0
  %v205 = vsel %vm200, %v199, 0
  %207 = vmatprep.subr.bf16.mxu0 0
  %208 = vmatpush1.bf16.msra.mxu0 %v184
  %209 = vmatprep.subr.bf16.mxu0 0
  %210 = vmatpush1.bf16.msra.mxu0 %v185
  %211 = vmatprep.subr.bf16.mxu0 0
  %212 = vmatpush1.bf16.msra.mxu0 %v186
  %213 = vmatprep.subr.bf16.mxu0 0
  %214 = vmatpush1.bf16.msra.mxu0 %v187
  %215 = vmatprep.subr.bf16.mxu0 0
  %216 = vmatpush1.bf16.msra.mxu0 %v188
  %217 = vmatprep.subr.bf16.mxu0 0
  %218 = vmatpush1.bf16.msra.mxu0 %v189
  %219 = vmatprep.subr.bf16.mxu0 0
  %220 = vmatpush1.bf16.msra.mxu0 0
  %221 = vmatprep.subr.bf16.mxu0 0
  %222 = vmatpush1.bf16.msra.mxu0 0
  %223 = vmatprep.subr.bf16.mxu0 0
  %224 = vmatpush1.bf16.msra.mxu0 0
  %225 = vmatprep.subr.bf16.mxu0 0
  %226 = vmatpush1.bf16.msra.mxu0 0
  %227 = vmatprep.subr.bf16.mxu0 0
  %228 = vmatpush1.bf16.msra.mxu0 0
  %229 = vmatprep.subr.bf16.mxu0 0
  %230 = vmatpush1.bf16.msra.mxu0 0
  %231 = vmatprep.subr.bf16.mxu0 0
  %232 = vmatpush1.bf16.msra.mxu0 0
  %233 = vmatprep.subr.bf16.mxu0 0
  %234 = vmatpush1.bf16.msra.mxu0 0
  %235 = vmatprep.subr.bf16.mxu0 0
  %236 = vmatpush1.bf16.msra.mxu0 0
  %237 = vmatprep.subr.bf16.mxu0 0
  %238 = vmatpush1.bf16.msra.mxu0 0
  %239 = vmatprep.mubr.bf16.mxu0 0
  %240 = vmatmul.mubr.bf16.gmra.mrb[0].mxu0 %v202
  %v241 = vpop.f32.mrb[0].mxu0
  %v242 = vadd.f32 0.0, %v241
  %v243 = vpop.f32.mrb[0].mxu0
  %v244 = vpop.f32.mrb[0].mxu0
  %v245 = vadd.f32 0.0, %v244
  %v246 = vpop.f32.mrb[0].mxu0
  %247 = vmatprep.mubr.bf16.mxu0 0
  %248 = vmatmul.mubr.bf16.gmra.mrb[0].mxu0 %v205
  %v249 = vpop.f32.mrb[0].mxu0
  %v250 = vadd.f32 0.0, %v249
  %v251 = vpop.f32.mrb[0].mxu0
  %v252 = vpop.f32.mrb[0].mxu0
  %v253 = vadd.f32 0.0, %v252
  %v254 = vpop.f32.mrb[0].mxu0
  %255 = vdwg.mxu0
  %v256 = vld [vmem:[%s3] sm:$0xff]
  %v257 = vld [vmem:[%s3 + $0x8] sm:$0xff]
  %v258 = vld [vmem:[%s4] sm:$0xff]
  %v259 = vld [vmem:[%s4 + $0x8] sm:$0xff]
  %vm260 = vcmask 130048
  %v262 = vsel %vm260, %v250, 0
  %v265 = vsel %vm260, %v253, 0
  %267 = vmatprep.subr.mxu0 0.0
  %268 = vmatpush1.msra.mxu0 %v258
  %269 = vmatprep.subr.mxu0 0.0
  %270 = vmatpush1.msra.mxu0 %v259
  %271 = vmatprep.subr.mxu0 0.0
  %272 = vmatpush1.msra.mxu0 0.0
  %273 = vmatprep.subr.mxu0 0.0
  %274 = vmatpush1.msra.mxu0 0.0
  %275 = vmatprep.subr.mxu0 0.0
  %276 = vmatpush1.msra.mxu0 0.0
  %277 = vmatprep.subr.mxu0 0.0
  %278 = vmatpush1.msra.mxu0 0.0
  %279 = vmatprep.subr.mxu0 0.0
  %280 = vmatpush1.msra.mxu0 0.0
  %281 = vmatprep.subr.mxu0 0.0
  %282 = vmatpush1.msra.mxu0 0.0
  %283 = vmatprep.subr.mxu0 0.0
  %284 = vmatpush1.msra.mxu0 0.0
  %285 = vmatprep.subr.mxu0 0.0
  %286 = vmatpush1.msra.mxu0 0.0
  %287 = vmatprep.subr.mxu0 0.0
  %288 = vmatpush1.msra.mxu0 0.0
  %289 = vmatprep.subr.mxu0 0.0
  %290 = vmatpush1.msra.mxu0 0.0
  %291 = vmatprep.subr.mxu0 0.0
  %292 = vmatpush1.msra.mxu0 0.0
  %293 = vmatprep.subr.mxu0 0.0
  %294 = vmatpush1.msra.mxu0 0.0
  %295 = vmatprep.subr.mxu0 0.0
  %296 = vmatpush1.msra.mxu0 0.0
  %297 = vmatprep.subr.mxu0 0.0
  %298 = vmatpush1.msra.mxu0 0.0
  %299 = vmatprep.subr.mxu0 0.0
  %300 = vmatpush1.msra.mxu0 0.0
  %301 = vmatprep.subr.mxu0 0.0
  %302 = vmatpush1.msra.mxu0 0.0
  %303 = vmatprep.subr.mxu0 0.0
  %304 = vmatpush1.msra.mxu0 0.0
  %305 = vmatprep.subr.mxu0 0.0
  %306 = vmatpush1.msra.mxu0 0.0
  %307 = vmatprep.subr.mxu0 0.0
  %308 = vmatpush1.msra.mxu0 0.0
  %309 = vmatprep.subr.mxu0 0.0
  %310 = vmatpush1.msra.mxu0 0.0
  %311 = vmatprep.subr.mxu0 0.0
  %312 = vmatpush1.msra.mxu0 0.0
  %313 = vmatprep.subr.mxu0 0.0
  %314 = vmatpush1.msra.mxu0 0.0
  %315 = vmatprep.subr.mxu0 0.0
  %316 = vmatpush1.msra.mxu0 0.0
  %317 = vmatprep.subr.mxu0 0.0
  %318 = vmatpush1.msra.mxu0 0.0
  %319 = vmatprep.subr.mxu0 0.0
  %320 = vmatpush1.msra.mxu0 0.0
  %321 = vmatprep.subr.mxu0 0.0
  %322 = vmatpush1.msra.mxu0 0.0
  %323 = vmatprep.subr.mxu0 0.0
  %324 = vmatpush1.msra.mxu0 0.0
  %325 = vmatprep.subr.mxu0 0.0
  %326 = vmatpush1.msra.mxu0 0.0
  %327 = vmatprep.subr.mxu0 0.0
  %328 = vmatpush1.msra.mxu0 0.0
  %329 = vmatprep.subr.mxu0 0.0
  %330 = vmatpush1.msra.mxu0 0.0
  %331 = vmatprep.mubr.f32.mxu0 0.0
  %332 = vmatmul.mubr.f32.gmra.mrb[0].mxu0 %v262
  %v333 = vpop.f32.mrb[0].mxu0
  %v334 = vadd.f32 0.0, %v333
  %v335 = vpop.f32.mrb[0].mxu0
  %336 = vmatprep.mubr.f32.mxu0 0.0
  %337 = vmatmul.mubr.f32.gmra.mrb[0].mxu0 %v265
  %v338 = vpop.f32.mrb[0].mxu0
  %v339 = vadd.f32 0.0, %v338
  %v340 = vpop.f32.mrb[0].mxu0
  %341 = vdwg.mxu0
  %v343 = vsel %vm260, %v242, 0
  %v346 = vsel %vm260, %v245, 0
  %348 = vmatprep.subr.mxu0 0.0
  %349 = vmatpush1.msra.mxu0 %v256
  %350 = vmatprep.subr.mxu0 0.0
  %351 = vmatpush1.msra.mxu0 %v257
  %352 = vmatprep.subr.mxu0 0.0
  %353 = vmatpush1.msra.mxu0 0.0
  %354 = vmatprep.subr.mxu0 0.0
  %355 = vmatpush1.msra.mxu0 0.0
  %356 = vmatprep.subr.mxu0 0.0
  %357 = vmatpush1.msra.mxu0 0.0
  %358 = vmatprep.subr.mxu0 0.0
  %359 = vmatpush1.msra.mxu0 0.0
  %360 = vmatprep.subr.mxu0 0.0
  %361 = vmatpush1.msra.mxu0 0.0
  %362 = vmatprep.subr.mxu0 0.0
  %363 = vmatpush1.msra.mxu0 0.0
  %364 = vmatprep.subr.mxu0 0.0
  %365 = vmatpush1.msra.mxu0 0.0
  %366 = vmatprep.subr.mxu0 0.0
  %367 = vmatpush1.msra.mxu0 0.0
  %368 = vmatprep.subr.mxu0 0.0
  %369 = vmatpush1.msra.mxu0 0.0
  %370 = vmatprep.subr.mxu0 0.0
  %371 = vmatpush1.msra.mxu0 0.0
  %372 = vmatprep.subr.mxu0 0.0
  %373 = vmatpush1.msra.mxu0 0.0
  %374 = vmatprep.subr.mxu0 0.0
  %375 = vmatpush1.msra.mxu0 0.0
  %376 = vmatprep.subr.mxu0 0.0
  %377 = vmatpush1.msra.mxu0 0.0
  %378 = vmatprep.subr.mxu0 0.0
  %379 = vmatpush1.msra.mxu0 0.0
  %380 = vmatprep.subr.mxu0 0.0
  %381 = vmatpush1.msra.mxu0 0.0
  %382 = vmatprep.subr.mxu0 0.0
  %383 = vmatpush1.msra.mxu0 0.0
  %384 = vmatprep.subr.mxu0 0.0
  %385 = vmatpush1.msra.mxu0 0.0
  %386 = vmatprep.subr.mxu0 0.0
  %387 = vmatpush1.msra.mxu0 0.0
  %388 = vmatprep.subr.mxu0 0.0
  %389 = vmatpush1.msra.mxu0 0.0
  %390 = vmatprep.subr.mxu0 0.0
  %391 = vmatpush1.msra.mxu0 0.0
  %392 = vmatprep.subr.mxu0 0.0
  %393 = vmatpush1.msra.mxu0 0.0
  %394 = vmatprep.subr.mxu0 0.0
  %395 = vmatpush1.msra.mxu0 0.0
  %396 = vmatprep.subr.mxu0 0.0
  %397 = vmatpush1.msra.mxu0 0.0
  %398 = vmatprep.subr.mxu0 0.0
  %399 = vmatpush1.msra.mxu0 0.0
  %400 = vmatprep.subr.mxu0 0.0
  %401 = vmatpush1.msra.mxu0 0.0
  %402 = vmatprep.subr.mxu0 0.0
  %403 = vmatpush1.msra.mxu0 0.0
  %404 = vmatprep.subr.mxu0 0.0
  %405 = vmatpush1.msra.mxu0 0.0
  %406 = vmatprep.subr.mxu0 0.0
  %407 = vmatpush1.msra.mxu0 0.0
  %408 = vmatprep.subr.mxu0 0.0
  %409 = vmatpush1.msra.mxu0 0.0
  %410 = vmatprep.subr.mxu0 0.0
  %411 = vmatpush1.msra.mxu0 0.0
  %412 = vmatprep.mubr.f32.mxu0 0.0
  %413 = vmatmul.mubr.f32.gmra.mrb[0].mxu0 %v343
  %v414 = vpop.f32.mrb[0].mxu0
  %v415 = vadd.f32 %v334, %v414
  %v416 = vpop.f32.mrb[0].mxu0
  %417 = vmatprep.mubr.f32.mxu0 0.0
  %418 = vmatmul.mubr.f32.gmra.mrb[0].mxu0 %v346
  %v419 = vpop.f32.mrb[0].mxu0
  %v420 = vadd.f32 %v339, %v419
  %v421 = vpop.f32.mrb[0].mxu0
  %422 = vdwg.mxu0
  %v423 = vld [vmem:[%s2] sm:$0xff]
  %v424 = vld [vmem:[%s2 + $0x8] sm:$0xff]
  %426 = vset.pattern.permute.xlu0 0
  %427 = vperm.xlu0 %426, %v423
  %v428 = vpop.permute.xlu0 %427
  %431 = vset.pattern.permute.xlu0 0
  %432 = vperm.xlu0 %431, %v424
  %v433 = vpop.permute.xlu0 %432
  %v435 = vadd.f32 %v415, %v428
  %v436 = vadd.f32 %v420, %v433
  %vm437 = vcmp.ge.f32.partialorder %v435, 0.0
  %vm438 = vcmp.ge.f32.partialorder %v436, 0.0
  %v439 = vmul.f32 %v435, 0.1
  %v440 = vmul.f32 %v436, 0.1
  %v441 = vsel %vm437, %v435, %v439
  %v442 = vsel %vm438, %v436, %v440
  %443 = vst.msk [vmem:[#allocation4] sm:$0xff] %vm61, 0
  %vm444 = vcmask 146568
  %445 = vst.msk [vmem:[#allocation4] sm:$0xff] %vm444, 0
  %v446 = vpack.c.bf16 %v442, %v441
  %448 = vrot.lane.b32.xlu0 %v446, 1
  %v449 = vpop.permute.xlu0 %448
  %vm451 = vcmask 138248
  %452 = vst.msk [vmem:[#allocation4] sm:$0xff] %vm451, %v449
  %s453 = scalar_lea.vmem [#allocation4], 8
  %454 = vst.msk [vmem:[%s453] sm:$0xff] %vm61, 0
  %455 = vst.msk [vmem:[%s453] sm:$0xff] %vm444, 0
  %456 = vrot.lane.b32.xlu0 %v446, 113
  %v457 = vpop.permute.xlu0 %456
  %459 = vst.msk [vmem:[%s453] sm:$0xff] %vm451, %v457
  %v460 = vld [vmem:[#allocation4] sm:$0xff]
  %461 = vst.msk [vmem:[#allocation5] sm:$0xff] %vm260, %v460
  %v462 = vld [vmem:[#allocation4] sm:$0xff]
  %464 = vrot.lane.b32.xlu0 %v462, 127
  %v465 = vpop.permute.xlu0 %464
  %467 = vst.msk [vmem:[#allocation5 + $0x8] sm:$0xff] %vm260, %v465
  %v468 = vld [vmem:[#allocation4] sm:$0xff]
  %470 = vrot.lane.b32.xlu0 %v468, 126
  %v471 = vpop.permute.xlu0 %470
  %473 = vst.msk [vmem:[#allocation5 + $0x10] sm:$0xff] %vm260, %v471
  %v474 = vld [vmem:[%s453] sm:$0xff]
  %476 = vrot.lane.b32.xlu0 %v474, 16
  %v477 = vpop.permute.xlu0 %476
  %vm479 = vcmask 261248
  %480 = vst.msk [vmem:[#allocation5] sm:$0xff] %vm479, %v477
  %v481 = vld [vmem:[%s453] sm:$0xff]
  %483 = vrot.lane.b32.xlu0 %v481, 15
  %v484 = vpop.permute.xlu0 %483
  %486 = vst.msk [vmem:[#allocation5 + $0x8] sm:$0xff] %vm479, %v484
  %v487 = vld [vmem:[%s453] sm:$0xff]
  %489 = vrot.lane.b32.xlu0 %v487, 14
  %v490 = vpop.permute.xlu0 %489
  %492 = vst.msk [vmem:[#allocation5 + $0x10] sm:$0xff] %vm479, %v490
  %v493 = vld [vmem:[%s5] sm:$0xf]
  %v494 = vld [vmem:[%s5 + $0x4] sm:$0xf]
  %v495 = vld [vmem:[#allocation5] sm:$0xff]
  %v496 = vld [vmem:[#allocation5 + $0x8] sm:$0xff]
  %v497 = vld [vmem:[#allocation5 + $0x10] sm:$0xff]
  %v498 = vld [vmem:[%s6] sm:$0xff]
  %v499 = vld [vmem:[%s6 + $0x8] sm:$0xff]
  %501 = vset.pattern.permute.xlu0 0
  %502 = vperm.xlu0 %501, %v498
  %v503 = vpop.permute.xlu0 %502
  %506 = vset.pattern.permute.xlu0 0
  %507 = vperm.xlu0 %506, %v499
  %v508 = vpop.permute.xlu0 %507
  %v512 = vunpack.c.l.b16 %v493
  %v513 = vunpack.c.l.b16 %v494
  %v514 = vpack.c.b16 %v513, %v512
  %vm515 = vcmask 392192
  %v517 = vsel %vm515, %v514, 0
  %519 = vmatprep.subr.bf16.mxu0 0
  %520 = vmatpush1.bf16.msra.mxu0 %v495
  %521 = vmatprep.subr.bf16.mxu0 0
  %522 = vmatpush1.bf16.msra.mxu0 %v496
  %523 = vmatprep.subr.bf16.mxu0 0
  %524 = vmatpush1.bf16.msra.mxu0 %v497
  %525 = vmatprep.subr.bf16.mxu0 0
  %526 = vmatpush1.bf16.msra.mxu0 0
  %527 = vmatprep.subr.bf16.mxu0 0
  %528 = vmatpush1.bf16.msra.mxu0 0
  %529 = vmatprep.subr.bf16.mxu0 0
  %530 = vmatpush1.bf16.msra.mxu0 0
  %531 = vmatprep.subr.bf16.mxu0 0
  %532 = vmatpush1.bf16.msra.mxu0 0
  %533 = vmatprep.subr.bf16.mxu0 0
  %534 = vmatpush1.bf16.msra.mxu0 0
  %535 = vmatprep.subr.bf16.mxu0 0
  %536 = vmatpush1.bf16.msra.mxu0 0
  %537 = vmatprep.subr.bf16.mxu0 0
  %538 = vmatpush1.bf16.msra.mxu0 0
  %539 = vmatprep.subr.bf16.mxu0 0
  %540 = vmatpush1.bf16.msra.mxu0 0
  %541 = vmatprep.subr.bf16.mxu0 0
  %542 = vmatpush1.bf16.msra.mxu0 0
  %543 = vmatprep.subr.bf16.mxu0 0
  %544 = vmatpush1.bf16.msra.mxu0 0
  %545 = vmatprep.subr.bf16.mxu0 0
  %546 = vmatpush1.bf16.msra.mxu0 0
  %547 = vmatprep.subr.bf16.mxu0 0
  %548 = vmatpush1.bf16.msra.mxu0 0
  %549 = vmatprep.subr.bf16.mxu0 0
  %550 = vmatpush1.bf16.msra.mxu0 0
  %551 = vmatprep.mubr.bf16.mxu0 0
  %552 = vmatmul.mubr.bf16.gmra.mrb[0].mxu0 %v517
  %v553 = vpop.f32.mrb[0].mxu0
  %v554 = vadd.f32 %v503, %v553
  %v555 = vpop.f32.mrb[0].mxu0
  %v556 = vpop.f32.mrb[0].mxu0
  %v557 = vadd.f32 %v508, %v556
  %v558 = vpop.f32.mrb[0].mxu0
  %559 = vdwg.mxu0
  %v560 = vadd.f32 %v554, %v435
  %v561 = vadd.f32 %v557, %v436
  %vm562 = vcmp.ge.f32.partialorder %v560, 0.0
  %vm563 = vcmp.ge.f32.partialorder %v561, 0.0
  %v564 = vmul.f32 %v560, 0.1
  %v565 = vmul.f32 %v561, 0.1
  %v566 = vsel %vm562, %v560, %v564
  %v567 = vsel %vm563, %v561, %v565
  %vm568 = vcmask 23552
  %569 = vst.msk [vmem:[#allocation4] sm:$0xff] %vm568, 0
  %vm570 = vcmask 179352
  %571 = vst.msk [vmem:[#allocation4] sm:$0xff] %vm570, 0
  %v572 = vpack.c.bf16 %v567, %v566
  %574 = vrot.lane.b32.xlu0 %v572, 3
  %v575 = vpop.permute.xlu0 %574
  %vm577 = vcmask 154648
  %578 = vst.msk [vmem:[#allocation4] sm:$0xff] %vm577, %v575
  %579 = vst.msk [vmem:[%s453] sm:$0xff] %vm568, 0
  %580 = vst.msk [vmem:[%s453] sm:$0xff] %vm570, 0
  %581 = vrot.lane.b32.xlu0 %v572, 115
  %v582 = vpop.permute.xlu0 %581
  %584 = vst.msk [vmem:[%s453] sm:$0xff] %vm577, %v582
  %v585 = vld [vmem:[#allocation4] sm:$0xff]
  %586 = vst.msk [vmem:[#allocation5] sm:$0xff] %vm260, %v585
  %v587 = vld [vmem:[#allocation4] sm:$0xff]
  %589 = vrot.lane.b32.xlu0 %v587, 125
  %v590 = vpop.permute.xlu0 %589
  %592 = vst.msk [vmem:[#allocation5 + $0x8] sm:$0xff] %vm260, %v590
  %v593 = vld [vmem:[#allocation4] sm:$0xff]
  %595 = vrot.lane.b32.xlu0 %v593, 122
  %v596 = vpop.permute.xlu0 %595
  %598 = vst.msk [vmem:[#allocation5 + $0x10] sm:$0xff] %vm260, %v596
  %v599 = vld [vmem:[%s453] sm:$0xff]
  %601 = vrot.lane.b32.xlu0 %v599, 16
  %v602 = vpop.permute.xlu0 %601
  %604 = vst.msk [vmem:[#allocation5] sm:$0xff] %vm479, %v602
  %v605 = vld [vmem:[%s453] sm:$0xff]
  %607 = vrot.lane.b32.xlu0 %v605, 13
  %v608 = vpop.permute.xlu0 %607
  %610 = vst.msk [vmem:[#allocation5 + $0x8] sm:$0xff] %vm479, %v608
  %v611 = vld [vmem:[%s453] sm:$0xff]
  %613 = vrot.lane.b32.xlu0 %v611, 10
  %v614 = vpop.permute.xlu0 %613
  %616 = vst.msk [vmem:[#allocation5 + $0x10] sm:$0xff] %vm479, %v614
  %v617 = vld [vmem:[%s7] sm:$0xf]
  %v618 = vld [vmem:[%s7 + $0x4] sm:$0xf]
  %v619 = vld [vmem:[#allocation5] sm:$0xff]
  %v620 = vld [vmem:[#allocation5 + $0x8] sm:$0xff]
  %v621 = vld [vmem:[#allocation5 + $0x10] sm:$0xff]
  %v622 = vld [vmem:[%s8] sm:$0xff]
  %v623 = vld [vmem:[%s8 + $0x8] sm:$0xff]
  %625 = vset.pattern.permute.xlu0 0
  %626 = vperm.xlu0 %625, %v622
  %v627 = vpop.permute.xlu0 %626
  %630 = vset.pattern.permute.xlu0 0
  %631 = vperm.xlu0 %630, %v623
  %v632 = vpop.permute.xlu0 %631
  %v636 = vunpack.c.l.b16 %v617
  %v637 = vunpack.c.l.b16 %v618
  %v638 = vpack.c.b16 %v637, %v636
  %v640 = vsel %vm515, %v638, 0
  %642 = vmatprep.subr.bf16.mxu0 0
  %643 = vmatpush1.bf16.msra.mxu0 %v619
  %644 = vmatprep.subr.bf16.mxu0 0
  %645 = vmatpush1.bf16.msra.mxu0 %v620
  %646 = vmatprep.subr.bf16.mxu0 0
  %647 = vmatpush1.bf16.msra.mxu0 %v621
  %648 = vmatprep.subr.bf16.mxu0 0
  %649 = vmatpush1.bf16.msra.mxu0 0
  %650 = vmatprep.subr.bf16.mxu0 0
  %651 = vmatpush1.bf16.msra.mxu0 0
  %652 = vmatprep.subr.bf16.mxu0 0
  %653 = vmatpush1.bf16.msra.mxu0 0
  %654 = vmatprep.subr.bf16.mxu0 0
  %655 = vmatpush1.bf16.msra.mxu0 0
  %656 = vmatprep.subr.bf16.mxu0 0
  %657 = vmatpush1.bf16.msra.mxu0 0
  %658 = vmatprep.subr.bf16.mxu0 0
  %659 = vmatpush1.bf16.msra.mxu0 0
  %660 = vmatprep.subr.bf16.mxu0 0
  %661 = vmatpush1.bf16.msra.mxu0 0
  %662 = vmatprep.subr.bf16.mxu0 0
  %663 = vmatpush1.bf16.msra.mxu0 0
  %664 = vmatprep.subr.bf16.mxu0 0
  %665 = vmatpush1.bf16.msra.mxu0 0
  %666 = vmatprep.subr.bf16.mxu0 0
  %667 = vmatpush1.bf16.msra.mxu0 0
  %668 = vmatprep.subr.bf16.mxu0 0
  %669 = vmatpush1.bf16.msra.mxu0 0
  %670 = vmatprep.subr.bf16.mxu0 0
  %671 = vmatpush1.bf16.msra.mxu0 0
  %672 = vmatprep.subr.bf16.mxu0 0
  %673 = vmatpush1.bf16.msra.mxu0 0
  %674 = vmatprep.mubr.bf16.mxu0 0
  %675 = vmatmul.mubr.bf16.gmra.mrb[0].mxu0 %v640
  %v676 = vpop.f32.mrb[0].mxu0
  %v677 = vadd.f32 %v627, %v676
  %v678 = vpop.f32.mrb[0].mxu0
  %v679 = vpop.f32.mrb[0].mxu0
  %v680 = vadd.f32 %v632, %v679
  %v681 = vpop.f32.mrb[0].mxu0
  %682 = vdwg.mxu0
  %v683 = vadd.f32 %v677, %v560
  %v684 = vadd.f32 %v680, %v561
  %v685 = vadd.f32 %v683, 0.0
  %v686 = vadd.f32 %v684, 0.0
  %vm687 = vcmask 15360
  %688 = vst.msk [vmem:[#allocation4] sm:$0xff] %vm687, 0
  %vm689 = vcmask 162960
  %690 = vst.msk [vmem:[#allocation4] sm:$0xff] %vm689, 0
  %691 = vrot.lane.b32.xlu0 %v446, 2
  %v692 = vpop.permute.xlu0 %691
  %vm694 = vcmask 146448
  %695 = vst.msk [vmem:[#allocation4] sm:$0xff] %vm694, %v692
  %696 = vst.msk [vmem:[%s453] sm:$0xff] %vm687, 0
  %697 = vst.msk [vmem:[%s453] sm:$0xff] %vm689, 0
  %698 = vrot.lane.b32.xlu0 %v446, 114
  %v699 = vpop.permute.xlu0 %698
  %701 = vst.msk [vmem:[%s453] sm:$0xff] %vm694, %v699
  %v702 = vld [vmem:[#allocation4] sm:$0xff]
  %703 = vst.msk [vmem:[#allocation5] sm:$0xff] %vm260, %v702
  %v704 = vld [vmem:[#allocation4] sm:$0xff]
  %706 = vrot.lane.b32.xlu0 %v704, 127
  %v707 = vpop.permute.xlu0 %706
  %709 = vst.msk [vmem:[#allocation5 + $0x8] sm:$0xff] %vm260, %v707
  %v710 = vld [vmem:[#allocation4] sm:$0xff]
  %712 = vrot.lane.b32.xlu0 %v710, 126
  %v713 = vpop.permute.xlu0 %712
  %715 = vst.msk [vmem:[#allocation5 + $0x10] sm:$0xff] %vm260, %v713
  %v716 = vld [vmem:[#allocation4] sm:$0xff]
  %718 = vrot.lane.b32.xlu0 %v716, 125
  %v719 = vpop.permute.xlu0 %718
  %721 = vst.msk [vmem:[#allocation5 + $0x18] sm:$0xff] %vm260, %v719
  %v722 = vld [vmem:[#allocation4] sm:$0xff]
  %724 = vrot.lane.b32.xlu0 %v722, 124
  %v725 = vpop.permute.xlu0 %724
  %727 = vst.msk [vmem:[#allocation5 + $0x20] sm:$0xff] %vm260, %v725
  %v728 = vld [vmem:[%s453] sm:$0xff]
  %730 = vrot.lane.b32.xlu0 %v728, 16
  %v731 = vpop.permute.xlu0 %730
  %733 = vst.msk [vmem:[#allocation5] sm:$0xff] %vm479, %v731
  %v734 = vld [vmem:[%s453] sm:$0xff]
  %736 = vrot.lane.b32.xlu0 %v734, 15
  %v737 = vpop.permute.xlu0 %736
  %739 = vst.msk [vmem:[#allocation5 + $0x8] sm:$0xff] %vm479, %v737
  %v740 = vld [vmem:[%s453] sm:$0xff]
  %742 = vrot.lane.b32.xlu0 %v740, 14
  %v743 = vpop.permute.xlu0 %742
  %745 = vst.msk [vmem:[#allocation5 + $0x10] sm:$0xff] %vm479, %v743
  %v746 = vld [vmem:[%s453] sm:$0xff]
  %748 = vrot.lane.b32.xlu0 %v746, 13
  %v749 = vpop.permute.xlu0 %748
  %751 = vst.msk [vmem:[#allocation5 + $0x18] sm:$0xff] %vm479, %v749
  %v752 = vld [vmem:[%s453] sm:$0xff]
  %754 = vrot.lane.b32.xlu0 %v752, 12
  %v755 = vpop.permute.xlu0 %754
  %757 = vst.msk [vmem:[#allocation5 + $0x20] sm:$0xff] %vm479, %v755
  %v758 = vld [vmem:[%s9] sm:$0xf]
  %v759 = vld [vmem:[%s9 + $0x4] sm:$0xf]
  %v760 = vld [vmem:[#allocation5] sm:$0xff]
  %v761 = vld [vmem:[#allocation5 + $0x8] sm:$0xff]
  %v762 = vld [vmem:[#allocation5 + $0x10] sm:$0xff]
  %v763 = vld [vmem:[#allocation5 + $0x18] sm:$0xff]
  %v764 = vld [vmem:[#allocation5 + $0x20] sm:$0xff]
  %v765 = vld [vmem:[%s10] sm:$0xff]
  %v766 = vld [vmem:[%s10 + $0x8] sm:$0xff]
  %768 = vset.pattern.permute.xlu0 0
  %769 = vperm.xlu0 %768, %v765
  %v770 = vpop.permute.xlu0 %769
  %773 = vset.pattern.permute.xlu0 0
  %774 = vperm.xlu0 %773, %v766
  %v775 = vpop.permute.xlu0 %774
  %v779 = vunpack.c.l.b16 %v758
  %v780 = vunpack.c.l.b16 %v759
  %v781 = vpack.c.b16 %v780, %v779
  %vm782 = vcmask 654336
  %v784 = vsel %vm782, %v781, 0
  %786 = vmatprep.subr.bf16.mxu0 0
  %787 = vmatpush1.bf16.msra.mxu0 %v760
  %788 = vmatprep.subr.bf16.mxu0 0
  %789 = vmatpush1.bf16.msra.mxu0 %v761
  %790 = vmatprep.subr.bf16.mxu0 0
  %791 = vmatpush1.bf16.msra.mxu0 %v762
  %792 = vmatprep.subr.bf16.mxu0 0
  %793 = vmatpush1.bf16.msra.mxu0 %v763
  %794 = vmatprep.subr.bf16.mxu0 0
  %795 = vmatpush1.bf16.msra.mxu0 %v764
  %796 = vmatprep.subr.bf16.mxu0 0
  %797 = vmatpush1.bf16.msra.mxu0 0
  %798 = vmatprep.subr.bf16.mxu0 0
  %799 = vmatpush1.bf16.msra.mxu0 0
  %800 = vmatprep.subr.bf16.mxu0 0
  %801 = vmatpush1.bf16.msra.mxu0 0
  %802 = vmatprep.subr.bf16.mxu0 0
  %803 = vmatpush1.bf16.msra.mxu0 0
  %804 = vmatprep.subr.bf16.mxu0 0
  %805 = vmatpush1.bf16.msra.mxu0 0
  %806 = vmatprep.subr.bf16.mxu0 0
  %807 = vmatpush1.bf16.msra.mxu0 0
  %808 = vmatprep.subr.bf16.mxu0 0
  %809 = vmatpush1.bf16.msra.mxu0 0
  %810 = vmatprep.subr.bf16.mxu0 0
  %811 = vmatpush1.bf16.msra.mxu0 0
  %812 = vmatprep.subr.bf16.mxu0 0
  %813 = vmatpush1.bf16.msra.mxu0 0
  %814 = vmatprep.subr.bf16.mxu0 0
  %815 = vmatpush1.bf16.msra.mxu0 0
  %816 = vmatprep.subr.bf16.mxu0 0
  %817 = vmatpush1.bf16.msra.mxu0 0
  %818 = vmatprep.mubr.bf16.mxu0 0
  %819 = vmatmul.mubr.bf16.gmra.mrb[0].mxu0 %v784
  %v820 = vpop.f32.mrb[0].mxu0
  %v821 = vadd.f32 %v770, %v820
  %v822 = vpop.f32.mrb[0].mxu0
  %v823 = vpop.f32.mrb[0].mxu0
  %v824 = vadd.f32 %v775, %v823
  %v825 = vpop.f32.mrb[0].mxu0
  %826 = vdwg.mxu0
  %v827 = vadd.f32 %v821, %v435
  %v828 = vadd.f32 %v824, %v436
  %vm829 = vcmp.ge.f32.partialorder %v827, 0.0
  %vm830 = vcmp.ge.f32.partialorder %v828, 0.0
  %v831 = vmul.f32 %v827, 0.1
  %v832 = vmul.f32 %v828, 0.1
  %v833 = vsel %vm829, %v827, %v831
  %v834 = vsel %vm830, %v828, %v832
  %vm835 = vcmask 48128
  %836 = vst.msk [vmem:[#allocation4] sm:$0xff] %vm835, 0
  %vm837 = vcmask 228528
  %838 = vst.msk [vmem:[#allocation4] sm:$0xff] %vm837, 0
  %v839 = vpack.c.bf16 %v834, %v833
  %841 = vrot.lane.b32.xlu0 %v839, 6
  %v842 = vpop.permute.xlu0 %841
  %vm844 = vcmask 179248
  %845 = vst.msk [vmem:[#allocation4] sm:$0xff] %vm844, %v842
  %846 = vst.msk [vmem:[%s453] sm:$0xff] %vm835, 0
  %847 = vst.msk [vmem:[%s453] sm:$0xff] %vm837, 0
  %848 = vrot.lane.b32.xlu0 %v839, 118
  %v849 = vpop.permute.xlu0 %848
  %851 = vst.msk [vmem:[%s453] sm:$0xff] %vm844, %v849
  %v852 = vld [vmem:[#allocation4] sm:$0xff]
  %853 = vst.msk [vmem:[#allocation5] sm:$0xff] %vm260, %v852
  %v854 = vld [vmem:[#allocation4] sm:$0xff]
  %856 = vrot.lane.b32.xlu0 %v854, 125
  %v857 = vpop.permute.xlu0 %856
  %859 = vst.msk [vmem:[#allocation5 + $0x8] sm:$0xff] %vm260, %v857
  %v860 = vld [vmem:[#allocation4] sm:$0xff]
  %862 = vrot.lane.b32.xlu0 %v860, 122
  %v863 = vpop.permute.xlu0 %862
  %865 = vst.msk [vmem:[#allocation5 + $0x10] sm:$0xff] %vm260, %v863
  %v866 = vld [vmem:[#allocation4] sm:$0xff]
  %868 = vrot.lane.b32.xlu0 %v866, 119
  %v869 = vpop.permute.xlu0 %868
  %871 = vst.msk [vmem:[#allocation5 + $0x18] sm:$0xff] %vm260, %v869
  %v872 = vld [vmem:[#allocation4] sm:$0xff]
  %874 = vrot.lane.b32.xlu0 %v872, 116
  %v875 = vpop.permute.xlu0 %874
  %877 = vst.msk [vmem:[#allocation5 + $0x20] sm:$0xff] %vm260, %v875
  %v878 = vld [vmem:[%s453] sm:$0xff]
  %880 = vrot.lane.b32.xlu0 %v878, 16
  %v881 = vpop.permute.xlu0 %880
  %883 = vst.msk [vmem:[#allocation5] sm:$0xff] %vm479, %v881
  %v884 = vld [vmem:[%s453] sm:$0xff]
  %886 = vrot.lane.b32.xlu0 %v884, 13
  %v887 = vpop.permute.xlu0 %886
  %889 = vst.msk [vmem:[#allocation5 + $0x8] sm:$0xff] %vm479, %v887
  %v890 = vld [vmem:[%s453] sm:$0xff]
  %892 = vrot.lane.b32.xlu0 %v890, 10
  %v893 = vpop.permute.xlu0 %892
  %895 = vst.msk [vmem:[#allocation5 + $0x10] sm:$0xff] %vm479, %v893
  %v896 = vld [vmem:[%s453] sm:$0xff]
  %898 = vrot.lane.b32.xlu0 %v896, 7
  %v899 = vpop.permute.xlu0 %898
  %901 = vst.msk [vmem:[#allocation5 + $0x18] sm:$0xff] %vm479, %v899
  %v902 = vld [vmem:[%s453] sm:$0xff]
  %904 = vrot.lane.b32.xlu0 %v902, 4
  %v905 = vpop.permute.xlu0 %904
  %907 = vst.msk [vmem:[#allocation5 + $0x20] sm:$0xff] %vm479, %v905
  %v908 = vld [vmem:[%s11] sm:$0xf]
  %v909 = vld [vmem:[%s11 + $0x4] sm:$0xf]
  %v910 = vld [vmem:[#allocation5] sm:$0xff]
  %v911 = vld [vmem:[#allocation5 + $0x8] sm:$0xff]
  %v912 = vld [vmem:[#allocation5 + $0x10] sm:$0xff]
  %v913 = vld [vmem:[#allocation5 + $0x18] sm:$0xff]
  %v914 = vld [vmem:[#allocation5 + $0x20] sm:$0xff]
  %v915 = vld [vmem:[%s12] sm:$0xff]
  %v916 = vld [vmem:[%s12 + $0x8] sm:$0xff]
  %918 = vset.pattern.permute.xlu0 0
  %919 = vperm.xlu0 %918, %v915
  %v920 = vpop.permute.xlu0 %919
  %923 = vset.pattern.permute.xlu0 0
  %924 = vperm.xlu0 %923, %v916
  %v925 = vpop.permute.xlu0 %924
  %v929 = vunpack.c.l.b16 %v908
  %v930 = vunpack.c.l.b16 %v909
  %v931 = vpack.c.b16 %v930, %v929
  %v933 = vsel %vm782, %v931, 0
  %935 = vmatprep.subr.bf16.mxu0 0
  %936 = vmatpush1.bf16.msra.mxu0 %v910
  %937 = vmatprep.subr.bf16.mxu0 0
  %938 = vmatpush1.bf16.msra.mxu0 %v911
  %939 = vmatprep.subr.bf16.mxu0 0
  %940 = vmatpush1.bf16.msra.mxu0 %v912
  %941 = vmatprep.subr.bf16.mxu0 0
  %942 = vmatpush1.bf16.msra.mxu0 %v913
  %943 = vmatprep.subr.bf16.mxu0 0
  %944 = vmatpush1.bf16.msra.mxu0 %v914
  %945 = vmatprep.subr.bf16.mxu0 0
  %946 = vmatpush1.bf16.msra.mxu0 0
  %947 = vmatprep.subr.bf16.mxu0 0
  %948 = vmatpush1.bf16.msra.mxu0 0
  %949 = vmatprep.subr.bf16.mxu0 0
  %950 = vmatpush1.bf16.msra.mxu0 0
  %951 = vmatprep.subr.bf16.mxu0 0
  %952 = vmatpush1.bf16.msra.mxu0 0
  %953 = vmatprep.subr.bf16.mxu0 0
  %954 = vmatpush1.bf16.msra.mxu0 0
  %955 = vmatprep.subr.bf16.mxu0 0
  %956 = vmatpush1.bf16.msra.mxu0 0
  %957 = vmatprep.subr.bf16.mxu0 0
  %958 = vmatpush1.bf16.msra.mxu0 0
  %959 = vmatprep.subr.bf16.mxu0 0
  %960 = vmatpush1.bf16.msra.mxu0 0
  %961 = vmatprep.subr.bf16.mxu0 0
  %962 = vmatpush1.bf16.msra.mxu0 0
  %963 = vmatprep.subr.bf16.mxu0 0
  %964 = vmatpush1.bf16.msra.mxu0 0
  %965 = vmatprep.subr.bf16.mxu0 0
  %966 = vmatpush1.bf16.msra.mxu0 0
  %967 = vmatprep.mubr.bf16.mxu0 0
  %968 = vmatmul.mubr.bf16.gmra.mrb[0].mxu0 %v933
  %v969 = vpop.f32.mrb[0].mxu0
  %v970 = vadd.f32 %v920, %v969
  %v971 = vpop.f32.mrb[0].mxu0
  %v972 = vpop.f32.mrb[0].mxu0
  %v973 = vadd.f32 %v925, %v972
  %v974 = vpop.f32.mrb[0].mxu0
  %975 = vdwg.mxu0
  %v976 = vadd.f32 %v970, %v827
  %v977 = vadd.f32 %v973, %v828
  %v978 = vadd.f32 %v685, %v976
  %v979 = vadd.f32 %v686, %v977
  %v980 = vmul.f32 %v978, 0.5
  %v981 = vmul.f32 %v979, 0.5
  %982 = vst.msk [vmem:[%s13] sm:$0xff] %vm260, %v980
  %983 = vst.msk [vmem:[%s13 + $0x8] sm:$0xff] %vm260, %v981
  %986 = vrot.lane.b32.xlu0 %v980, 112
  %v987 = vpop.permute.xlu0 %986
  %988 = vrot.lane.b32.xlu0 %v981, 112
  %v989 = vpop.permute.xlu0 %988
  %s992 = scalar_lea.vmem %s13, 16
  %993 = vst.msk [vmem:[%s992] sm:$0xff] %vm260, %v987
  %994 = vst.msk [vmem:[%s992 + $0x8] sm:$0xff] %vm260, %v989
  // Predicated region
  $region54: #{_lambda_.5} parent=0 // pred_check
    _
  $region55: #{_lambda_.5} parent=0 // pred_check_branch
    %996 = sbr.rel (0) target = $region57
  $region56: #{_lambda_.5} parent=0 // pred_region
    _
  $region57: #{_lambda_.5} parent=0 // pred_fallthru
    _
  // Predicated region
  $region58: #{_lambda_.5} parent=0 // pred_check
    _
  $region59: #{_lambda_.5} parent=0 // pred_check_branch
    %998 = sbr.rel (0) target = $region61
  $region60: #{_lambda_.5} parent=0 // pred_region
    _
  $region61: #{_lambda_.5} parent=0 // pred_fallthru
    _

</llo_original>
